<compile_context>
chip_gen: v5e
topology: v5e:2x2
jax: 0.10.0
libtpu: 0.0.40
codegen_flags: <defaults>
</compile_context>

<pallas_src>
import functools
import math

import jax
import jax.numpy as jnp
from jax.experimental import pallas as pl
from jax.experimental.pallas import tpu as pltpu

MAX = 10000.0   # kept for parity with the PyTorch module (unused by its getPE)


# ----------------------------------------------------------------------------
# In-kernel helpers (traced inside the Pallas kernel body)
# ----------------------------------------------------------------------------
def _linear(x, w, b=None):
    """y = x @ w.T (+ b), matching torch.nn.Linear weight layout (out, in)."""
    y = jax.lax.dot_general(x, w, (((1,), (1,)), ((), ())),
                            preferred_element_type=jnp.float32)
    return y if b is None else y + b


def _layernorm(v, w, b, eps=1e-5):
    # two-pass variance (matches torch numerics more closely than E[x^2]-mu^2)
    mu = jnp.mean(v, axis=-1, keepdims=True)
    c = v - mu
    var = jnp.mean(c * c, axis=-1, keepdims=True)
    return c * jax.lax.rsqrt(var + eps) * w + b


def _softmax_last(s):
    s = s - jnp.max(s, axis=-1, keepdims=True)
    e = jnp.exp(s)
    return e / jnp.sum(e, axis=-1, keepdims=True)


def _attention(q, k, v, scale):
    """Single-head attention on the VPU.

    q: (bb, Tq, d); k, v: (bb, Tk, d).  Per-batch 8x20x8 MXU matmuls re-push
    RHS weights and pay full fill/drain at <1% array occupancy, so scores and
    AV are done with broadcast-multiply + axis reductions instead.  The
    (bb, Tq, Tk, d) temporary is tiny at these shapes (block_b is capped).
    """
    s = jnp.sum(q[:, :, None, :] * k[:, None, :, :], axis=-1) * scale   # (bb,Tq,Tk)
    p = _softmax_last(s)
    return jnp.sum(p[:, :, :, None] * v[:, None, :, :], axis=2)          # (bb,Tq,d)


# ----------------------------------------------------------------------------
# Pallas kernel: one block of block_b batch elements per grid step.
# ----------------------------------------------------------------------------
def maskgen_kernel(n_layers,
                   src_ref, times_ref, mem_ref, unif_ref, inv_ts_ref,
                   wsa_ref, bsa_ref, wsao_ref, bsao_ref,
                   wca_ref, bca_ref, wcao_ref, bcao_ref,
                   wf1_ref, bf1_ref, wf2_ref, bf2_ref,
                   lnw_ref, lnb_ref,
                   wpa1tp_ref, bpa1tp_ref, wpa2_ref, bpa2_ref, prelu_ref,
                   mask_ref, rep_ref, agg_ref):
    bb, t_len, d_inp = src_ref.shape
    tm = mem_ref.shape[1]
    d_z = mem_ref.shape[2]
    dpa = wpa2_ref.shape[0]
    rows = bb * t_len
    scale = 1.0 / math.sqrt(d_z)

    # --- PositionalEncodingTF + tgt = cat([src, pe(times)]) (fused in-kernel) ---
    scaled = times_ref[...] * inv_ts_ref[...]           # (bb,t,1)*(1,nts) -> (bb,t,nts)
    x = jnp.concatenate([src_ref[...], jnp.sin(scaled), jnp.cos(scaled)],
                        axis=-1).reshape(rows, d_z)     # token rows: (bb*t, d_z)
    mem = mem_ref[...].reshape(bb * tm, d_z)

    # --- TransformerDecoder (post-LN TransformerDecoderLayer, nhead=1, eval) ----
    # TODO(synk): tgt_key_padding_mask branch (times < -1e5) not implemented;
    # the example inputs always take the `tgt_mask is None` path.
    for l in range(n_layers):
        lnw = lnw_ref[l]                                # (3, d_z)
        lnb = lnb_ref[l]

        # self-attention: fused QKV projection (1 matmul on bb*t rows)
        qkv = _linear(x, wsa_ref[l], bsa_ref[l])        # (rows, 3*d_z)
        q = qkv[:, :d_z].reshape(bb, t_len, d_z)
        k = qkv[:, d_z:2 * d_z].reshape(bb, t_len, d_z)
        v = qkv[:, 2 * d_z:].reshape(bb, t_len, d_z)
        o = _attention(q, k, v, scale)
        sa = _linear(o.reshape(rows, d_z), wsao_ref[l], bsao_ref[l])
        x = _layernorm(x + sa, lnw[0:1], lnb[0:1])

        # cross-attention on memory: Q separate, fused K/V projection
        wca = wca_ref[l]                                # (3*d_z, d_z)
        bca = bca_ref[l]                                # (1, 3*d_z)
        q = _linear(x, wca[:d_z], bca[:, :d_z]).reshape(bb, t_len, d_z)
        kv = _linear(mem, wca[d_z:], bca[:, d_z:])      # (bb*tm, 2*d_z)
        k = kv[:, :d_z].reshape(bb, tm, d_z)
        v = kv[:, d_z:].reshape(bb, tm, d_z)
        o = _attention(q, k, v, scale)
        ca = _linear(o.reshape(rows, d_z), wcao_ref[l], bcao_ref[l])
        x = _layernorm(x + ca, lnw[1:2], lnb[1:2])

        # feed-forward (ReLU)
        h = jnp.maximum(_linear(x, wf1_ref[l], bf1_ref[l]), 0.0)
        x = _layernorm(x + _linear(h, wf2_ref[l], bf2_ref[l]), lnw[2:3], lnb[2:3])

    # --- fused head: [pre_agg layer 1 | time_prob_net] in one (rows, dpa+d_inp) matmul
    pr = prelu_ref[...]                                 # (1, 2)
    y = _linear(x, wpa1tp_ref[...], bpa1tp_ref[...])    # (rows, dpa + d_inp)
    h = y[:, :dpa]                                      # pre_agg layer-1 output
    z = y[:, dpa:]                                      # time_prob logits

    # pre_agg_net: PReLU -> Linear -> PReLU, then max over T
    h = jnp.where(h >= 0.0, h, pr[:, 0:1] * h)
    h = _linear(h, wpa2_ref[...], bpa2_ref[...])
    h = jnp.where(h >= 0.0, h, pr[:, 1:2] * h)
    agg_ref[...] = jnp.max(h.reshape(bb, t_len, dpa), axis=1, keepdims=True)

    # time_prob_net (d_inp > 1 branch): Sigmoid
    p = jax.nn.sigmoid(z)                               # (rows, d_inp)
    mask_ref[...] = p.reshape(bb, t_len, d_inp)

    # reparameterize: hard gumbel_softmax over [1-p, p], take class 1.
    # log(p)-log(1-p)==z and g1-g0 ~ Logistic(0,1), so the hard straight-through
    # forward value is (z + g1 - g0 > 0)  ==d==  (sigmoid(z) > u), u ~ U(0,1).
    u = unif_ref[...].reshape(rows, d_inp)
    rep_ref[...] = (p > u).astype(jnp.float32).reshape(bb, t_len, d_inp)


# ----------------------------------------------------------------------------
# Wrapper (layout plumbing + BlockSpecs; PE lives inside the kernel)
# ----------------------------------------------------------------------------
def _default_block_b(batch):
    # v5e/v6e: 1 TensorCore/chip -> a batch split is pure per-step grid overhead,
    # run the whole batch in one grid step.  v7x: 2 TCs -> keep 2 grid blocks so
    # the "parallel" batch axis feeds both cores.
    try:
        kind = jax.devices()[0].device_kind.lower()
    except Exception:
        kind = ""
    n_cores = 2 if "v7" in kind else 1
    blk = pl.cdiv(batch, n_cores) if batch >= n_cores else batch
    # cap block_b so the (blk, T, T, d_z) VPU attention temporaries stay small
    return max(1, min(blk, 256))


def maskgen_forward(params, z_seq, src, times, key, *, d_pe, max_len,
                    tau=1.0, n_layers=2, block_b=None):
    """z_seq: (Tm, B, d_z), src: (T, B, d_inp), times: (T, B) -- seq-first.

    `tau` is accepted for API parity; the hard (straight-through) forward value
    is invariant to tau > 0 so it does not enter the kernel.
    """
    del tau
    T, B, d_inp = src.shape
    dpa = params["w_pa2"].shape[0]
    num_ts = d_pe // 2

    # batch-first views (only transposes left in the wrapper)
    srcb = jnp.transpose(src.astype(jnp.float32), (1, 0, 2))              # (B,T,d_inp)
    timesb = jnp.transpose(times.astype(jnp.float32), (1, 0))[..., None]  # (B,T,1)
    memb = jnp.transpose(z_seq.astype(jnp.float32), (1, 0, 2))            # (B,Tm,d_z)

    if block_b is None:
        block_b = _default_block_b(B)
    block_b = max(1, min(block_b, B))
    n_blocks = pl.cdiv(B, block_b)
    b_pad = n_blocks * block_b
    if b_pad != B:
        pad = ((0, b_pad - B), (0, 0), (0, 0))
        srcb, timesb, memb = (jnp.pad(a, pad) for a in (srcb, timesb, memb))

    # PositionalEncodingTF reciprocal timescales: 1 / max_len ** linspace(0,1,nts)
    inv_ts = (1.0 / (jnp.asarray(max_len, jnp.float32)
                     ** jnp.linspace(0.0, 1.0, num_ts)))[None, :]          # (1,nts)

    # uniform noise for the hard-Gumbel reparameterization (generated host-side;
    # the in-kernel hardware PRNG has no CPU/interpret lowering)
    unif = jax.random.uniform(key, (b_pad, T, d_inp), jnp.float32)

    # fuse time_prob_net projection with the first pre_agg linear (one matmul)
    w_pa1tp = jnp.concatenate([params["w_pa1"], params["w_tp"]], axis=0)   # (dpa+d_inp, d_z)
    b_pa1tp = jnp.concatenate([params["b_pa1"], params["b_tp"]], axis=1)   # (1, dpa+d_inp)

    weights = (params["w_sa_qkv"], params["b_sa_qkv"], params["w_sa_o"], params["b_sa_o"],
               params["w_ca_qkv"], params["b_ca_qkv"], params["w_ca_o"], params["b_ca_o"],
               params["w_ff1"], params["b_ff1"], params["w_ff2"], params["b_ff2"],
               params["ln_w"], params["ln_b"],
               w_pa1tp, b_pa1tp, params["w_pa2"], params["b_pa2"], params["prelu"])

    def blocked(arr):   # batch-blocked input: block (block_b, *trailing)
        nd = arr.ndim
        return pl.BlockSpec((block_b,) + arr.shape[1:],
                            lambda b, _nd=nd: (b,) + (0,) * (_nd - 1))

    def full(arr):      # whole array resident (constant index map -> fetched once)
        nd = arr.ndim
        return pl.BlockSpec(arr.shape, lambda b, _nd=nd: (0,) * _nd)

    in_specs = ([blocked(srcb), blocked(timesb), blocked(memb), blocked(unif),
                 full(inv_ts)] + [full(w) for w in weights])

    out_shape = (
        jax.ShapeDtypeStruct((b_pad, T, d_inp), jnp.float32),  # total_mask
        jax.ShapeDtypeStruct((b_pad, T, d_inp), jnp.float32),  # reparameterized mask
        jax.ShapeDtypeStruct((b_pad, 1, dpa), jnp.float32),    # agg_z
    )
    out_specs = (
        pl.BlockSpec((block_b, T, d_inp), lambda b: (b, 0, 0)),
        pl.BlockSpec((block_b, T, d_inp), lambda b: (b, 0, 0)),
        pl.BlockSpec((block_b, 1, dpa), lambda b: (b, 0, 0)),
    )

    mask, rep, agg = pl.pallas_call(
        functools.partial(maskgen_kernel, n_layers),
        grid=(n_blocks,),
        in_specs=in_specs,
        out_specs=out_specs,
        out_shape=out_shape,
        compiler_params=pltpu.CompilerParams(dimension_semantics=("parallel",)),
    )(srcb, timesb, memb, unif, inv_ts, *weights)

    return mask[:B], rep[:B], agg[:B, 0, :]


# ----------------------------------------------------------------------------
# Deterministic synthetic parameter init (shapes per MaskGenerator.__init__)
# ----------------------------------------------------------------------------
def init_params(key, d_z, d_inp, dff=32, dpa=32, n_layers=2):
    keys = jax.random.split(key, 16)

    def xavier(k, shape):
        fan_out, fan_in = shape[-2], shape[-1]
        limit = math.sqrt(6.0 / (fan_in + fan_out))
        return jax.random.uniform(k, shape, jnp.float32, -limit, limit)

    p = {}
    p["w_sa_qkv"] = xavier(keys[0], (n_layers, 3 * d_z, d_z))
    p["b_sa_qkv"] = jnp.zeros((n_layers, 1, 3 * d_z), jnp.float32)
    p["w_sa_o"] = xavier(keys[1], (n_layers, d_z, d_z))
    p["b_sa_o"] = jnp.zeros((n_layers, 1, d_z), jnp.float32)
    p["w_ca_qkv"] = xavier(keys[2], (n_layers, 3 * d_z, d_z))
    p["b_ca_qkv"] = jnp.zeros((n_layers, 1, 3 * d_z), jnp.float32)
    p["w_ca_o"] = xavier(keys[3], (n_layers, d_z, d_z))
    p["b_ca_o"] = jnp.zeros((n_layers, 1, d_z), jnp.float32)
    p["w_ff1"] = xavier(keys[4], (n_layers, dff, d_z))
    p["b_ff1"] = jnp.zeros((n_layers, 1, dff), jnp.float32)
    p["w_ff2"] = xavier(keys[5], (n_layers, d_z, dff))
    p["b_ff2"] = jnp.zeros((n_layers, 1, d_z), jnp.float32)
    p["ln_w"] = jnp.ones((n_layers, 3, d_z), jnp.float32)
    p["ln_b"] = jnp.zeros((n_layers, 3, d_z), jnp.float32)
    # pre_agg_net: Linear(d_z,32) PReLU Linear(32,32) PReLU  (bias = 0.01)
    p["w_pa1"] = xavier(keys[6], (dpa, d_z))
    p["b_pa1"] = jnp.full((1, dpa), 0.01, jnp.float32)
    p["w_pa2"] = xavier(keys[7], (dpa, dpa))
    p["b_pa2"] = jnp.full((1, dpa), 0.01, jnp.float32)
    p["prelu"] = jnp.full((1, 2), 0.25, jnp.float32)   # default nn.PReLU() a=0.25
    # time_prob_net (d_inp > 1): Linear(d_z, d_inp) + Sigmoid  (bias = 0.01)
    p["w_tp"] = xavier(keys[8], (d_inp, d_z))
    p["b_tp"] = jnp.full((1, d_inp), 0.01, jnp.float32)
    return p


if __name__ == "__main__":
    key = jax.random.PRNGKey(0)
    d_inp, d_pe = 4, 16
    d_z = d_inp + d_pe            # d_z = d_inp + d_pe, so self.d_inp = d_z - d_pe = 4
    T, Tm, B = 8, 8, 2
    max_len = T
    dpa = 32

    kp, kz, ks, kg = jax.random.split(key, 4)
    params = init_params(kp, d_z, d_inp, dff=32, dpa=dpa, n_layers=2)

    z_seq = jax.random.normal(kz, (Tm, B, d_z), jnp.float32)    # memory
    src = jax.random.normal(ks, (T, B, d_inp), jnp.float32)
    times = jnp.tile(jnp.arange(T, dtype=jnp.float32)[:, None], (1, B))

    total_mask, mask_rep, agg_z = maskgen_forward(
        params, z_seq, src, times, kg, d_pe=d_pe, max_len=max_len, tau=1.0)
    jax.block_until_ready((total_mask, mask_rep, agg_z))

    assert total_mask.shape == (B, T, d_inp)
    assert mask_rep.shape == (B, T, d_inp)
    assert agg_z.shape == (B, dpa)
    assert bool(jnp.all((total_mask >= 0.0) & (total_mask <= 1.0)))
    assert bool(jnp.all((mask_rep == 0.0) | (mask_rep == 1.0)))
    print("KERNEL_OK")
</pallas_src>

<mosaic_0001>
module attributes {stable_mosaic.version = 11 : i64} {
  func.func @maskgen_kernel(%arg0: i32, %arg1: memref<2x8x4xf32, #tpu.memory_space<vmem>>, %arg2: memref<2x8x1xf32, #tpu.memory_space<vmem>>, %arg3: memref<2x8x20xf32, #tpu.memory_space<vmem>>, %arg4: memref<2x8x4xf32, #tpu.memory_space<vmem>>, %arg5: memref<1x8xf32, #tpu.memory_space<vmem>>, %arg6: memref<2x60x20xf32, #tpu.memory_space<vmem>>, %arg7: memref<2x1x60xf32, #tpu.memory_space<vmem>>, %arg8: memref<2x20x20xf32, #tpu.memory_space<vmem>>, %arg9: memref<2x1x20xf32, #tpu.memory_space<vmem>>, %arg10: memref<2x60x20xf32, #tpu.memory_space<vmem>>, %arg11: memref<2x1x60xf32, #tpu.memory_space<vmem>>, %arg12: memref<2x20x20xf32, #tpu.memory_space<vmem>>, %arg13: memref<2x1x20xf32, #tpu.memory_space<vmem>>, %arg14: memref<2x32x20xf32, #tpu.memory_space<vmem>>, %arg15: memref<2x1x32xf32, #tpu.memory_space<vmem>>, %arg16: memref<2x20x32xf32, #tpu.memory_space<vmem>>, %arg17: memref<2x1x20xf32, #tpu.memory_space<vmem>>, %arg18: memref<2x3x20xf32, #tpu.memory_space<vmem>>, %arg19: memref<2x3x20xf32, #tpu.memory_space<vmem>>, %arg20: memref<36x20xf32, #tpu.memory_space<vmem>>, %arg21: memref<1x36xf32, #tpu.memory_space<vmem>>, %arg22: memref<32x32xf32, #tpu.memory_space<vmem>>, %arg23: memref<1x32xf32, #tpu.memory_space<vmem>>, %arg24: memref<1x2xf32, #tpu.memory_space<vmem>>, %arg25: memref<2x8x4xf32, #tpu.memory_space<vmem>>, %arg26: memref<2x8x4xf32, #tpu.memory_space<vmem>>, %arg27: memref<2x1x32xf32, #tpu.memory_space<vmem>>) attributes {dimension_semantics = [#tpu.dimension_semantics<parallel>], iteration_bounds = array<i64: 1>, scalar_prefetch = 0 : i64, scratch_operands = 0 : i64, tpu.core_type = #tpu.core_type<tc>, window_params = [{transform_indices = @transform_0, window_bounds = array<i64: 2, 8, 4>}, {transform_indices = @transform_1, window_bounds = array<i64: 2, 8, 1>}, {transform_indices = @transform_2, window_bounds = array<i64: 2, 8, 20>}, {transform_indices = @transform_3, window_bounds = array<i64: 2, 8, 4>}, {pipeline_mode = #tpu.pipeline_mode<synchronous>, transform_indices = @transform_4, window_bounds = array<i64: 1, 8>}, {pipeline_mode = #tpu.pipeline_mode<synchronous>, transform_indices = @transform_5, window_bounds = array<i64: 2, 60, 20>}, {pipeline_mode = #tpu.pipeline_mode<synchronous>, transform_indices = @transform_6, window_bounds = array<i64: 2, 1, 60>}, {pipeline_mode = #tpu.pipeline_mode<synchronous>, transform_indices = @transform_7, window_bounds = array<i64: 2, 20, 20>}, {pipeline_mode = #tpu.pipeline_mode<synchronous>, transform_indices = @transform_8, window_bounds = array<i64: 2, 1, 20>}, {pipeline_mode = #tpu.pipeline_mode<synchronous>, transform_indices = @transform_9, window_bounds = array<i64: 2, 60, 20>}, {pipeline_mode = #tpu.pipeline_mode<synchronous>, transform_indices = @transform_10, window_bounds = array<i64: 2, 1, 60>}, {pipeline_mode = #tpu.pipeline_mode<synchronous>, transform_indices = @transform_11, window_bounds = array<i64: 2, 20, 20>}, {pipeline_mode = #tpu.pipeline_mode<synchronous>, transform_indices = @transform_12, window_bounds = array<i64: 2, 1, 20>}, {pipeline_mode = #tpu.pipeline_mode<synchronous>, transform_indices = @transform_13, window_bounds = array<i64: 2, 32, 20>}, {pipeline_mode = #tpu.pipeline_mode<synchronous>, transform_indices = @transform_14, window_bounds = array<i64: 2, 1, 32>}, {pipeline_mode = #tpu.pipeline_mode<synchronous>, transform_indices = @transform_15, window_bounds = array<i64: 2, 20, 32>}, {pipeline_mode = #tpu.pipeline_mode<synchronous>, transform_indices = @transform_16, window_bounds = array<i64: 2, 1, 20>}, {pipeline_mode = #tpu.pipeline_mode<synchronous>, transform_indices = @transform_17, window_bounds = array<i64: 2, 3, 20>}, {pipeline_mode = #tpu.pipeline_mode<synchronous>, transform_indices = @transform_18, window_bounds = array<i64: 2, 3, 20>}, {pipeline_mode = #tpu.pipeline_mode<synchronous>, transform_indices = @transform_19, window_bounds = array<i64: 36, 20>}, {pipeline_mode = #tpu.pipeline_mode<synchronous>, transform_indices = @transform_20, window_bounds = array<i64: 1, 36>}, {pipeline_mode = #tpu.pipeline_mode<synchronous>, transform_indices = @transform_21, window_bounds = array<i64: 32, 32>}, {pipeline_mode = #tpu.pipeline_mode<synchronous>, transform_indices = @transform_22, window_bounds = array<i64: 1, 32>}, {pipeline_mode = #tpu.pipeline_mode<synchronous>, transform_indices = @transform_23, window_bounds = array<i64: 1, 2>}, {transform_indices = @transform_24, window_bounds = array<i64: 2, 8, 4>}, {transform_indices = @transform_25, window_bounds = array<i64: 2, 8, 4>}, {transform_indices = @transform_26, window_bounds = array<i64: 2, 1, 32>}]} {
    %c0 = arith.constant 0 : index
    %c0_0 = arith.constant 0 : index
    %c0_1 = arith.constant 0 : index
    %0 = vector.load %arg2[%c0, %c0_0, %c0_1] : memref<2x8x1xf32, #tpu.memory_space<vmem>>, vector<2x8x1xf32>
    %c0_2 = arith.constant 0 : index
    %c0_3 = arith.constant 0 : index
    %1 = vector.load %arg5[%c0_2, %c0_3] : memref<1x8xf32, #tpu.memory_space<vmem>>, vector<1x8xf32>
    %2 = vector.shape_cast %1 : vector<1x8xf32> to vector<1x1x8xf32>
    %3 = vector.broadcast %0 : vector<2x8x1xf32> to vector<2x8x8xf32>
    %4 = vector.broadcast %2 : vector<1x1x8xf32> to vector<2x8x8xf32>
    %5 = arith.mulf %3, %4 : vector<2x8x8xf32>
    %c0_4 = arith.constant 0 : index
    %c0_5 = arith.constant 0 : index
    %c0_6 = arith.constant 0 : index
    %6 = vector.load %arg1[%c0_4, %c0_5, %c0_6] : memref<2x8x4xf32, #tpu.memory_space<vmem>>, vector<2x8x4xf32>
    %7 = math.sin %5 : vector<2x8x8xf32>
    %8 = math.cos %5 : vector<2x8x8xf32>
    %9 = tpu.concatenate %6, %7, %8 in 2 : vector<2x8x4xf32>, vector<2x8x8xf32>, vector<2x8x8xf32> -> vector<2x8x20xf32>
    %10 = vector.shape_cast %9 : vector<2x8x20xf32> to vector<16x20xf32>
    %c0_7 = arith.constant 0 : index
    %c0_8 = arith.constant 0 : index
    %c0_9 = arith.constant 0 : index
    %11 = vector.load %arg3[%c0_7, %c0_8, %c0_9] : memref<2x8x20xf32, #tpu.memory_space<vmem>>, vector<2x8x20xf32>
    %12 = vector.shape_cast %11 : vector<2x8x20xf32> to vector<16x20xf32>
    %c0_10 = arith.constant 0 : index
    %c0_11 = arith.constant 0 : index
    %c0_12 = arith.constant 0 : index
    %13 = vector.load %arg18[%c0_10, %c0_11, %c0_12] : memref<2x3x20xf32, #tpu.memory_space<vmem>>, vector<1x3x20xf32>
    %14 = vector.shape_cast %13 : vector<1x3x20xf32> to vector<3x20xf32>
    %c0_13 = arith.constant 0 : index
    %c0_14 = arith.constant 0 : index
    %c0_15 = arith.constant 0 : index
    %15 = vector.load %arg19[%c0_13, %c0_14, %c0_15] : memref<2x3x20xf32, #tpu.memory_space<vmem>>, vector<1x3x20xf32>
    %16 = vector.shape_cast %15 : vector<1x3x20xf32> to vector<3x20xf32>
    %c0_16 = arith.constant 0 : index
    %c0_17 = arith.constant 0 : index
    %c0_18 = arith.constant 0 : index
    %17 = vector.load %arg6[%c0_16, %c0_17, %c0_18] : memref<2x60x20xf32, #tpu.memory_space<vmem>>, vector<1x60x20xf32>
    %18 = vector.shape_cast %17 : vector<1x60x20xf32> to vector<60x20xf32>
    %c0_19 = arith.constant 0 : index
    %c0_20 = arith.constant 0 : index
    %c0_21 = arith.constant 0 : index
    %19 = vector.load %arg7[%c0_19, %c0_20, %c0_21] : memref<2x1x60xf32, #tpu.memory_space<vmem>>, vector<1x1x60xf32>
    %20 = vector.shape_cast %19 : vector<1x1x60xf32> to vector<1x60xf32>
    %cst = arith.constant dense<0.000000e+00> : vector<16x60xf32>
    %21 = tpu.matmul %10, %18, %cst {dimension_numbers = #tpu.dot_dimension_numbers<[1], [1], [0], [0], [0, 0, 1, 0], [], []>} : vector<16x20xf32>, vector<60x20xf32>, vector<16x60xf32> -> vector<16x60xf32>
    %22 = vector.broadcast %20 : vector<1x60xf32> to vector<16x60xf32>
    %23 = arith.addf %21, %22 : vector<16x60xf32>
    %24 = vector.extract_strided_slice %23 {offsets = [0, 0], sizes = [16, 20], strides = [1, 1]} : vector<16x60xf32> to vector<16x20xf32>
    %25 = vector.shape_cast %24 : vector<16x20xf32> to vector<2x8x20xf32>
    %26 = vector.extract_strided_slice %23 {offsets = [0, 20], sizes = [16, 20], strides = [1, 1]} : vector<16x60xf32> to vector<16x20xf32>
    %27 = vector.shape_cast %26 : vector<16x20xf32> to vector<2x8x20xf32>
    %28 = vector.extract_strided_slice %23 {offsets = [0, 40], sizes = [16, 20], strides = [1, 1]} : vector<16x60xf32> to vector<16x20xf32>
    %29 = vector.shape_cast %28 : vector<16x20xf32> to vector<2x8x20xf32>
    %30 = vector.shape_cast %25 : vector<2x8x20xf32> to vector<2x8x1x20xf32>
    %31 = vector.shape_cast %27 : vector<2x8x20xf32> to vector<2x1x8x20xf32>
    %32 = vector.broadcast %30 : vector<2x8x1x20xf32> to vector<2x8x8x20xf32>
    %33 = vector.broadcast %31 : vector<2x1x8x20xf32> to vector<2x8x8x20xf32>
    %34 = arith.mulf %32, %33 : vector<2x8x8x20xf32>
    %cst_22 = arith.constant dense<0.000000e+00> : vector<2x8x8xf32>
    %35 = vector.multi_reduction <add>, %34, %cst_22 [3] : vector<2x8x8x20xf32> to vector<2x8x8xf32>
    %cst_23 = arith.constant 0.223606795 : f32
    %36 = vector.broadcast %cst_23 : f32 to vector<2x8x8xf32>
    %37 = arith.mulf %35, %36 : vector<2x8x8xf32>
    %cst_24 = arith.constant dense<0xFF800000> : vector<2x8xf32>
    %38 = vector.multi_reduction <maximumf>, %37, %cst_24 [2] : vector<2x8x8xf32> to vector<2x8xf32>
    %39 = vector.shape_cast %38 : vector<2x8xf32> to vector<2x8x1xf32>
    %40 = vector.broadcast %39 : vector<2x8x1xf32> to vector<2x8x8xf32>
    %41 = arith.subf %37, %40 : vector<2x8x8xf32>
    %42 = math.exp %41 : vector<2x8x8xf32>
    %cst_25 = arith.constant dense<0.000000e+00> : vector<2x8xf32>
    %43 = vector.multi_reduction <add>, %42, %cst_25 [2] : vector<2x8x8xf32> to vector<2x8xf32>
    %44 = vector.shape_cast %43 : vector<2x8xf32> to vector<2x8x1xf32>
    %45 = vector.broadcast %44 : vector<2x8x1xf32> to vector<2x8x8xf32>
    %46 = arith.divf %42, %45 : vector<2x8x8xf32>
    %47 = vector.shape_cast %46 : vector<2x8x8xf32> to vector<2x8x8x1xf32>
    %48 = vector.shape_cast %29 : vector<2x8x20xf32> to vector<2x1x8x20xf32>
    %49 = vector.broadcast %47 : vector<2x8x8x1xf32> to vector<2x8x8x20xf32>
    %50 = vector.broadcast %48 : vector<2x1x8x20xf32> to vector<2x8x8x20xf32>
    %51 = arith.mulf %49, %50 : vector<2x8x8x20xf32>
    %cst_26 = arith.constant dense<0.000000e+00> : vector<2x8x20xf32>
    %52 = vector.multi_reduction <add>, %51, %cst_26 [2] : vector<2x8x8x20xf32> to vector<2x8x20xf32>
    %53 = vector.shape_cast %52 : vector<2x8x20xf32> to vector<16x20xf32>
    %c0_27 = arith.constant 0 : index
    %c0_28 = arith.constant 0 : index
    %c0_29 = arith.constant 0 : index
    %54 = vector.load %arg8[%c0_27, %c0_28, %c0_29] : memref<2x20x20xf32, #tpu.memory_space<vmem>>, vector<1x20x20xf32>
    %55 = vector.shape_cast %54 : vector<1x20x20xf32> to vector<20x20xf32>
    %c0_30 = arith.constant 0 : index
    %c0_31 = arith.constant 0 : index
    %c0_32 = arith.constant 0 : index
    %56 = vector.load %arg9[%c0_30, %c0_31, %c0_32] : memref<2x1x20xf32, #tpu.memory_space<vmem>>, vector<1x1x20xf32>
    %57 = vector.shape_cast %56 : vector<1x1x20xf32> to vector<1x20xf32>
    %cst_33 = arith.constant dense<0.000000e+00> : vector<16x20xf32>
    %58 = tpu.matmul %53, %55, %cst_33 {dimension_numbers = #tpu.dot_dimension_numbers<[1], [1], [0], [0], [0, 0, 1, 0], [], []>} : vector<16x20xf32>, vector<20x20xf32>, vector<16x20xf32> -> vector<16x20xf32>
    %59 = vector.broadcast %57 : vector<1x20xf32> to vector<16x20xf32>
    %60 = arith.addf %58, %59 : vector<16x20xf32>
    %61 = arith.addf %10, %60 : vector<16x20xf32>
    %62 = vector.extract_strided_slice %14 {offsets = [0, 0], sizes = [1, 20], strides = [1, 1]} : vector<3x20xf32> to vector<1x20xf32>
    %63 = vector.extract_strided_slice %16 {offsets = [0, 0], sizes = [1, 20], strides = [1, 1]} : vector<3x20xf32> to vector<1x20xf32>
    %cst_34 = arith.constant dense<0.000000e+00> : vector<16xf32>
    %64 = vector.multi_reduction <add>, %61, %cst_34 [1] : vector<16x20xf32> to vector<16xf32>
    %65 = vector.shape_cast %64 : vector<16xf32> to vector<16x1xf32>
    %cst_35 = arith.constant 2.000000e+01 : f32
    %66 = vector.broadcast %cst_35 : f32 to vector<16x1xf32>
    %67 = arith.divf %65, %66 : vector<16x1xf32>
    %68 = vector.broadcast %67 : vector<16x1xf32> to vector<16x20xf32>
    %69 = arith.subf %61, %68 : vector<16x20xf32>
    %70 = arith.mulf %69, %69 : vector<16x20xf32>
    %cst_36 = arith.constant dense<0.000000e+00> : vector<16xf32>
    %71 = vector.multi_reduction <add>, %70, %cst_36 [1] : vector<16x20xf32> to vector<16xf32>
    %72 = vector.shape_cast %71 : vector<16xf32> to vector<16x1xf32>
    %cst_37 = arith.constant 2.000000e+01 : f32
    %73 = vector.broadcast %cst_37 : f32 to vector<16x1xf32>
    %74 = arith.divf %72, %73 : vector<16x1xf32>
    %cst_38 = arith.constant 9.99999974E-6 : f32
    %75 = vector.broadcast %cst_38 : f32 to vector<16x1xf32>
    %76 = arith.addf %74, %75 : vector<16x1xf32>
    %77 = math.rsqrt %76 : vector<16x1xf32>
    %78 = vector.broadcast %77 : vector<16x1xf32> to vector<16x20xf32>
    %79 = arith.mulf %69, %78 : vector<16x20xf32>
    %80 = vector.broadcast %62 : vector<1x20xf32> to vector<16x20xf32>
    %81 = arith.mulf %79, %80 : vector<16x20xf32>
    %82 = vector.broadcast %63 : vector<1x20xf32> to vector<16x20xf32>
    %83 = arith.addf %81, %82 : vector<16x20xf32>
    %c0_39 = arith.constant 0 : index
    %c0_40 = arith.constant 0 : index
    %c0_41 = arith.constant 0 : index
    %84 = vector.load %arg10[%c0_39, %c0_40, %c0_41] : memref<2x60x20xf32, #tpu.memory_space<vmem>>, vector<1x60x20xf32>
    %85 = vector.shape_cast %84 : vector<1x60x20xf32> to vector<60x20xf32>
    %c0_42 = arith.constant 0 : index
    %c0_43 = arith.constant 0 : index
    %c0_44 = arith.constant 0 : index
    %86 = vector.load %arg11[%c0_42, %c0_43, %c0_44] : memref<2x1x60xf32, #tpu.memory_space<vmem>>, vector<1x1x60xf32>
    %87 = vector.shape_cast %86 : vector<1x1x60xf32> to vector<1x60xf32>
    %88 = vector.extract_strided_slice %85 {offsets = [0, 0], sizes = [20, 20], strides = [1, 1]} : vector<60x20xf32> to vector<20x20xf32>
    %89 = vector.extract_strided_slice %87 {offsets = [0, 0], sizes = [1, 20], strides = [1, 1]} : vector<1x60xf32> to vector<1x20xf32>
    %cst_45 = arith.constant dense<0.000000e+00> : vector<16x20xf32>
    %90 = tpu.matmul %83, %88, %cst_45 {dimension_numbers = #tpu.dot_dimension_numbers<[1], [1], [0], [0], [0, 0, 1, 0], [], []>} : vector<16x20xf32>, vector<20x20xf32>, vector<16x20xf32> -> vector<16x20xf32>
    %91 = vector.broadcast %89 : vector<1x20xf32> to vector<16x20xf32>
    %92 = arith.addf %90, %91 : vector<16x20xf32>
    %93 = vector.shape_cast %92 : vector<16x20xf32> to vector<2x8x20xf32>
    %94 = vector.extract_strided_slice %85 {offsets = [20, 0], sizes = [40, 20], strides = [1, 1]} : vector<60x20xf32> to vector<40x20xf32>
    %95 = vector.extract_strided_slice %87 {offsets = [0, 20], sizes = [1, 40], strides = [1, 1]} : vector<1x60xf32> to vector<1x40xf32>
    %cst_46 = arith.constant dense<0.000000e+00> : vector<16x40xf32>
    %96 = tpu.matmul %12, %94, %cst_46 {dimension_numbers = #tpu.dot_dimension_numbers<[1], [1], [0], [0], [0, 0, 1, 0], [], []>} : vector<16x20xf32>, vector<40x20xf32>, vector<16x40xf32> -> vector<16x40xf32>
    %97 = vector.broadcast %95 : vector<1x40xf32> to vector<16x40xf32>
    %98 = arith.addf %96, %97 : vector<16x40xf32>
    %99 = vector.extract_strided_slice %98 {offsets = [0, 0], sizes = [16, 20], strides = [1, 1]} : vector<16x40xf32> to vector<16x20xf32>
    %100 = vector.shape_cast %99 : vector<16x20xf32> to vector<2x8x20xf32>
    %101 = vector.extract_strided_slice %98 {offsets = [0, 20], sizes = [16, 20], strides = [1, 1]} : vector<16x40xf32> to vector<16x20xf32>
    %102 = vector.shape_cast %101 : vector<16x20xf32> to vector<2x8x20xf32>
    %103 = vector.shape_cast %93 : vector<2x8x20xf32> to vector<2x8x1x20xf32>
    %104 = vector.shape_cast %100 : vector<2x8x20xf32> to vector<2x1x8x20xf32>
    %105 = vector.broadcast %103 : vector<2x8x1x20xf32> to vector<2x8x8x20xf32>
    %106 = vector.broadcast %104 : vector<2x1x8x20xf32> to vector<2x8x8x20xf32>
    %107 = arith.mulf %105, %106 : vector<2x8x8x20xf32>
    %cst_47 = arith.constant dense<0.000000e+00> : vector<2x8x8xf32>
    %108 = vector.multi_reduction <add>, %107, %cst_47 [3] : vector<2x8x8x20xf32> to vector<2x8x8xf32>
    %cst_48 = arith.constant 0.223606795 : f32
    %109 = vector.broadcast %cst_48 : f32 to vector<2x8x8xf32>
    %110 = arith.mulf %108, %109 : vector<2x8x8xf32>
    %cst_49 = arith.constant dense<0xFF800000> : vector<2x8xf32>
    %111 = vector.multi_reduction <maximumf>, %110, %cst_49 [2] : vector<2x8x8xf32> to vector<2x8xf32>
    %112 = vector.shape_cast %111 : vector<2x8xf32> to vector<2x8x1xf32>
    %113 = vector.broadcast %112 : vector<2x8x1xf32> to vector<2x8x8xf32>
    %114 = arith.subf %110, %113 : vector<2x8x8xf32>
    %115 = math.exp %114 : vector<2x8x8xf32>
    %cst_50 = arith.constant dense<0.000000e+00> : vector<2x8xf32>
    %116 = vector.multi_reduction <add>, %115, %cst_50 [2] : vector<2x8x8xf32> to vector<2x8xf32>
    %117 = vector.shape_cast %116 : vector<2x8xf32> to vector<2x8x1xf32>
    %118 = vector.broadcast %117 : vector<2x8x1xf32> to vector<2x8x8xf32>
    %119 = arith.divf %115, %118 : vector<2x8x8xf32>
    %120 = vector.shape_cast %119 : vector<2x8x8xf32> to vector<2x8x8x1xf32>
    %121 = vector.shape_cast %102 : vector<2x8x20xf32> to vector<2x1x8x20xf32>
    %122 = vector.broadcast %120 : vector<2x8x8x1xf32> to vector<2x8x8x20xf32>
    %123 = vector.broadcast %121 : vector<2x1x8x20xf32> to vector<2x8x8x20xf32>
    %124 = arith.mulf %122, %123 : vector<2x8x8x20xf32>
    %cst_51 = arith.constant dense<0.000000e+00> : vector<2x8x20xf32>
    %125 = vector.multi_reduction <add>, %124, %cst_51 [2] : vector<2x8x8x20xf32> to vector<2x8x20xf32>
    %126 = vector.shape_cast %125 : vector<2x8x20xf32> to vector<16x20xf32>
    %c0_52 = arith.constant 0 : index
    %c0_53 = arith.constant 0 : index
    %c0_54 = arith.constant 0 : index
    %127 = vector.load %arg12[%c0_52, %c0_53, %c0_54] : memref<2x20x20xf32, #tpu.memory_space<vmem>>, vector<1x20x20xf32>
    %128 = vector.shape_cast %127 : vector<1x20x20xf32> to vector<20x20xf32>
    %c0_55 = arith.constant 0 : index
    %c0_56 = arith.constant 0 : index
    %c0_57 = arith.constant 0 : index
    %129 = vector.load %arg13[%c0_55, %c0_56, %c0_57] : memref<2x1x20xf32, #tpu.memory_space<vmem>>, vector<1x1x20xf32>
    %130 = vector.shape_cast %129 : vector<1x1x20xf32> to vector<1x20xf32>
    %cst_58 = arith.constant dense<0.000000e+00> : vector<16x20xf32>
    %131 = tpu.matmul %126, %128, %cst_58 {dimension_numbers = #tpu.dot_dimension_numbers<[1], [1], [0], [0], [0, 0, 1, 0], [], []>} : vector<16x20xf32>, vector<20x20xf32>, vector<16x20xf32> -> vector<16x20xf32>
    %132 = vector.broadcast %130 : vector<1x20xf32> to vector<16x20xf32>
    %133 = arith.addf %131, %132 : vector<16x20xf32>
    %134 = arith.addf %83, %133 : vector<16x20xf32>
    %135 = vector.extract_strided_slice %14 {offsets = [1, 0], sizes = [1, 20], strides = [1, 1]} : vector<3x20xf32> to vector<1x20xf32>
    %136 = vector.extract_strided_slice %16 {offsets = [1, 0], sizes = [1, 20], strides = [1, 1]} : vector<3x20xf32> to vector<1x20xf32>
    %cst_59 = arith.constant dense<0.000000e+00> : vector<16xf32>
    %137 = vector.multi_reduction <add>, %134, %cst_59 [1] : vector<16x20xf32> to vector<16xf32>
    %138 = vector.shape_cast %137 : vector<16xf32> to vector<16x1xf32>
    %cst_60 = arith.constant 2.000000e+01 : f32
    %139 = vector.broadcast %cst_60 : f32 to vector<16x1xf32>
    %140 = arith.divf %138, %139 : vector<16x1xf32>
    %141 = vector.broadcast %140 : vector<16x1xf32> to vector<16x20xf32>
    %142 = arith.subf %134, %141 : vector<16x20xf32>
    %143 = arith.mulf %142, %142 : vector<16x20xf32>
    %cst_61 = arith.constant dense<0.000000e+00> : vector<16xf32>
    %144 = vector.multi_reduction <add>, %143, %cst_61 [1] : vector<16x20xf32> to vector<16xf32>
    %145 = vector.shape_cast %144 : vector<16xf32> to vector<16x1xf32>
    %cst_62 = arith.constant 2.000000e+01 : f32
    %146 = vector.broadcast %cst_62 : f32 to vector<16x1xf32>
    %147 = arith.divf %145, %146 : vector<16x1xf32>
    %cst_63 = arith.constant 9.99999974E-6 : f32
    %148 = vector.broadcast %cst_63 : f32 to vector<16x1xf32>
    %149 = arith.addf %147, %148 : vector<16x1xf32>
    %150 = math.rsqrt %149 : vector<16x1xf32>
    %151 = vector.broadcast %150 : vector<16x1xf32> to vector<16x20xf32>
    %152 = arith.mulf %142, %151 : vector<16x20xf32>
    %153 = vector.broadcast %135 : vector<1x20xf32> to vector<16x20xf32>
    %154 = arith.mulf %152, %153 : vector<16x20xf32>
    %155 = vector.broadcast %136 : vector<1x20xf32> to vector<16x20xf32>
    %156 = arith.addf %154, %155 : vector<16x20xf32>
    %c0_64 = arith.constant 0 : index
    %c0_65 = arith.constant 0 : index
    %c0_66 = arith.constant 0 : index
    %157 = vector.load %arg14[%c0_64, %c0_65, %c0_66] : memref<2x32x20xf32, #tpu.memory_space<vmem>>, vector<1x32x20xf32>
    %158 = vector.shape_cast %157 : vector<1x32x20xf32> to vector<32x20xf32>
    %c0_67 = arith.constant 0 : index
    %c0_68 = arith.constant 0 : index
    %c0_69 = arith.constant 0 : index
    %159 = vector.load %arg15[%c0_67, %c0_68, %c0_69] : memref<2x1x32xf32, #tpu.memory_space<vmem>>, vector<1x1x32xf32>
    %160 = vector.shape_cast %159 : vector<1x1x32xf32> to vector<1x32xf32>
    %cst_70 = arith.constant dense<0.000000e+00> : vector<16x32xf32>
    %161 = tpu.matmul %156, %158, %cst_70 {dimension_numbers = #tpu.dot_dimension_numbers<[1], [1], [0], [0], [0, 0, 1, 0], [], []>} : vector<16x20xf32>, vector<32x20xf32>, vector<16x32xf32> -> vector<16x32xf32>
    %162 = vector.broadcast %160 : vector<1x32xf32> to vector<16x32xf32>
    %163 = arith.addf %161, %162 : vector<16x32xf32>
    %cst_71 = arith.constant 0.000000e+00 : f32
    %164 = vector.broadcast %cst_71 : f32 to vector<16x32xf32>
    %165 = arith.maximumf %163, %164 : vector<16x32xf32>
    %c0_72 = arith.constant 0 : index
    %c0_73 = arith.constant 0 : index
    %c0_74 = arith.constant 0 : index
    %166 = vector.load %arg16[%c0_72, %c0_73, %c0_74] : memref<2x20x32xf32, #tpu.memory_space<vmem>>, vector<1x20x32xf32>
    %167 = vector.shape_cast %166 : vector<1x20x32xf32> to vector<20x32xf32>
    %c0_75 = arith.constant 0 : index
    %c0_76 = arith.constant 0 : index
    %c0_77 = arith.constant 0 : index
    %168 = vector.load %arg17[%c0_75, %c0_76, %c0_77] : memref<2x1x20xf32, #tpu.memory_space<vmem>>, vector<1x1x20xf32>
    %169 = vector.shape_cast %168 : vector<1x1x20xf32> to vector<1x20xf32>
    %cst_78 = arith.constant dense<0.000000e+00> : vector<16x20xf32>
    %170 = tpu.matmul %165, %167, %cst_78 {dimension_numbers = #tpu.dot_dimension_numbers<[1], [1], [0], [0], [0, 0, 1, 0], [], []>} : vector<16x32xf32>, vector<20x32xf32>, vector<16x20xf32> -> vector<16x20xf32>
    %171 = vector.broadcast %169 : vector<1x20xf32> to vector<16x20xf32>
    %172 = arith.addf %170, %171 : vector<16x20xf32>
    %173 = arith.addf %156, %172 : vector<16x20xf32>
    %174 = vector.extract_strided_slice %14 {offsets = [2, 0], sizes = [1, 20], strides = [1, 1]} : vector<3x20xf32> to vector<1x20xf32>
    %175 = vector.extract_strided_slice %16 {offsets = [2, 0], sizes = [1, 20], strides = [1, 1]} : vector<3x20xf32> to vector<1x20xf32>
    %cst_79 = arith.constant dense<0.000000e+00> : vector<16xf32>
    %176 = vector.multi_reduction <add>, %173, %cst_79 [1] : vector<16x20xf32> to vector<16xf32>
    %177 = vector.shape_cast %176 : vector<16xf32> to vector<16x1xf32>
    %cst_80 = arith.constant 2.000000e+01 : f32
    %178 = vector.broadcast %cst_80 : f32 to vector<16x1xf32>
    %179 = arith.divf %177, %178 : vector<16x1xf32>
    %180 = vector.broadcast %179 : vector<16x1xf32> to vector<16x20xf32>
    %181 = arith.subf %173, %180 : vector<16x20xf32>
    %182 = arith.mulf %181, %181 : vector<16x20xf32>
    %cst_81 = arith.constant dense<0.000000e+00> : vector<16xf32>
    %183 = vector.multi_reduction <add>, %182, %cst_81 [1] : vector<16x20xf32> to vector<16xf32>
    %184 = vector.shape_cast %183 : vector<16xf32> to vector<16x1xf32>
    %cst_82 = arith.constant 2.000000e+01 : f32
    %185 = vector.broadcast %cst_82 : f32 to vector<16x1xf32>
    %186 = arith.divf %184, %185 : vector<16x1xf32>
    %cst_83 = arith.constant 9.99999974E-6 : f32
    %187 = vector.broadcast %cst_83 : f32 to vector<16x1xf32>
    %188 = arith.addf %186, %187 : vector<16x1xf32>
    %189 = math.rsqrt %188 : vector<16x1xf32>
    %190 = vector.broadcast %189 : vector<16x1xf32> to vector<16x20xf32>
    %191 = arith.mulf %181, %190 : vector<16x20xf32>
    %192 = vector.broadcast %174 : vector<1x20xf32> to vector<16x20xf32>
    %193 = arith.mulf %191, %192 : vector<16x20xf32>
    %194 = vector.broadcast %175 : vector<1x20xf32> to vector<16x20xf32>
    %195 = arith.addf %193, %194 : vector<16x20xf32>
    %c1 = arith.constant 1 : index
    %c0_84 = arith.constant 0 : index
    %c0_85 = arith.constant 0 : index
    %196 = vector.load %arg18[%c1, %c0_84, %c0_85] : memref<2x3x20xf32, #tpu.memory_space<vmem>>, vector<1x3x20xf32>
    %197 = vector.shape_cast %196 : vector<1x3x20xf32> to vector<3x20xf32>
    %c1_86 = arith.constant 1 : index
    %c0_87 = arith.constant 0 : index
    %c0_88 = arith.constant 0 : index
    %198 = vector.load %arg19[%c1_86, %c0_87, %c0_88] : memref<2x3x20xf32, #tpu.memory_space<vmem>>, vector<1x3x20xf32>
    %199 = vector.shape_cast %198 : vector<1x3x20xf32> to vector<3x20xf32>
    %c1_89 = arith.constant 1 : index
    %c0_90 = arith.constant 0 : index
    %c0_91 = arith.constant 0 : index
    %200 = vector.load %arg6[%c1_89, %c0_90, %c0_91] : memref<2x60x20xf32, #tpu.memory_space<vmem>>, vector<1x60x20xf32>
    %201 = vector.shape_cast %200 : vector<1x60x20xf32> to vector<60x20xf32>
    %c1_92 = arith.constant 1 : index
    %c0_93 = arith.constant 0 : index
    %c0_94 = arith.constant 0 : index
    %202 = vector.load %arg7[%c1_92, %c0_93, %c0_94] : memref<2x1x60xf32, #tpu.memory_space<vmem>>, vector<1x1x60xf32>
    %203 = vector.shape_cast %202 : vector<1x1x60xf32> to vector<1x60xf32>
    %cst_95 = arith.constant dense<0.000000e+00> : vector<16x60xf32>
    %204 = tpu.matmul %195, %201, %cst_95 {dimension_numbers = #tpu.dot_dimension_numbers<[1], [1], [0], [0], [0, 0, 1, 0], [], []>} : vector<16x20xf32>, vector<60x20xf32>, vector<16x60xf32> -> vector<16x60xf32>
    %205 = vector.broadcast %203 : vector<1x60xf32> to vector<16x60xf32>
    %206 = arith.addf %204, %205 : vector<16x60xf32>
    %207 = vector.extract_strided_slice %206 {offsets = [0, 0], sizes = [16, 20], strides = [1, 1]} : vector<16x60xf32> to vector<16x20xf32>
    %208 = vector.shape_cast %207 : vector<16x20xf32> to vector<2x8x20xf32>
    %209 = vector.extract_strided_slice %206 {offsets = [0, 20], sizes = [16, 20], strides = [1, 1]} : vector<16x60xf32> to vector<16x20xf32>
    %210 = vector.shape_cast %209 : vector<16x20xf32> to vector<2x8x20xf32>
    %211 = vector.extract_strided_slice %206 {offsets = [0, 40], sizes = [16, 20], strides = [1, 1]} : vector<16x60xf32> to vector<16x20xf32>
    %212 = vector.shape_cast %211 : vector<16x20xf32> to vector<2x8x20xf32>
    %213 = vector.shape_cast %208 : vector<2x8x20xf32> to vector<2x8x1x20xf32>
    %214 = vector.shape_cast %210 : vector<2x8x20xf32> to vector<2x1x8x20xf32>
    %215 = vector.broadcast %213 : vector<2x8x1x20xf32> to vector<2x8x8x20xf32>
    %216 = vector.broadcast %214 : vector<2x1x8x20xf32> to vector<2x8x8x20xf32>
    %217 = arith.mulf %215, %216 : vector<2x8x8x20xf32>
    %cst_96 = arith.constant dense<0.000000e+00> : vector<2x8x8xf32>
    %218 = vector.multi_reduction <add>, %217, %cst_96 [3] : vector<2x8x8x20xf32> to vector<2x8x8xf32>
    %cst_97 = arith.constant 0.223606795 : f32
    %219 = vector.broadcast %cst_97 : f32 to vector<2x8x8xf32>
    %220 = arith.mulf %218, %219 : vector<2x8x8xf32>
    %cst_98 = arith.constant dense<0xFF800000> : vector<2x8xf32>
    %221 = vector.multi_reduction <maximumf>, %220, %cst_98 [2] : vector<2x8x8xf32> to vector<2x8xf32>
    %222 = vector.shape_cast %221 : vector<2x8xf32> to vector<2x8x1xf32>
    %223 = vector.broadcast %222 : vector<2x8x1xf32> to vector<2x8x8xf32>
    %224 = arith.subf %220, %223 : vector<2x8x8xf32>
    %225 = math.exp %224 : vector<2x8x8xf32>
    %cst_99 = arith.constant dense<0.000000e+00> : vector<2x8xf32>
    %226 = vector.multi_reduction <add>, %225, %cst_99 [2] : vector<2x8x8xf32> to vector<2x8xf32>
    %227 = vector.shape_cast %226 : vector<2x8xf32> to vector<2x8x1xf32>
    %228 = vector.broadcast %227 : vector<2x8x1xf32> to vector<2x8x8xf32>
    %229 = arith.divf %225, %228 : vector<2x8x8xf32>
    %230 = vector.shape_cast %229 : vector<2x8x8xf32> to vector<2x8x8x1xf32>
    %231 = vector.shape_cast %212 : vector<2x8x20xf32> to vector<2x1x8x20xf32>
    %232 = vector.broadcast %230 : vector<2x8x8x1xf32> to vector<2x8x8x20xf32>
    %233 = vector.broadcast %231 : vector<2x1x8x20xf32> to vector<2x8x8x20xf32>
    %234 = arith.mulf %232, %233 : vector<2x8x8x20xf32>
    %cst_100 = arith.constant dense<0.000000e+00> : vector<2x8x20xf32>
    %235 = vector.multi_reduction <add>, %234, %cst_100 [2] : vector<2x8x8x20xf32> to vector<2x8x20xf32>
    %236 = vector.shape_cast %235 : vector<2x8x20xf32> to vector<16x20xf32>
    %c1_101 = arith.constant 1 : index
    %c0_102 = arith.constant 0 : index
    %c0_103 = arith.constant 0 : index
    %237 = vector.load %arg8[%c1_101, %c0_102, %c0_103] : memref<2x20x20xf32, #tpu.memory_space<vmem>>, vector<1x20x20xf32>
    %238 = vector.shape_cast %237 : vector<1x20x20xf32> to vector<20x20xf32>
    %c1_104 = arith.constant 1 : index
    %c0_105 = arith.constant 0 : index
    %c0_106 = arith.constant 0 : index
    %239 = vector.load %arg9[%c1_104, %c0_105, %c0_106] : memref<2x1x20xf32, #tpu.memory_space<vmem>>, vector<1x1x20xf32>
    %240 = vector.shape_cast %239 : vector<1x1x20xf32> to vector<1x20xf32>
    %cst_107 = arith.constant dense<0.000000e+00> : vector<16x20xf32>
    %241 = tpu.matmul %236, %238, %cst_107 {dimension_numbers = #tpu.dot_dimension_numbers<[1], [1], [0], [0], [0, 0, 1, 0], [], []>} : vector<16x20xf32>, vector<20x20xf32>, vector<16x20xf32> -> vector<16x20xf32>
    %242 = vector.broadcast %240 : vector<1x20xf32> to vector<16x20xf32>
    %243 = arith.addf %241, %242 : vector<16x20xf32>
    %244 = arith.addf %195, %243 : vector<16x20xf32>
    %245 = vector.extract_strided_slice %197 {offsets = [0, 0], sizes = [1, 20], strides = [1, 1]} : vector<3x20xf32> to vector<1x20xf32>
    %246 = vector.extract_strided_slice %199 {offsets = [0, 0], sizes = [1, 20], strides = [1, 1]} : vector<3x20xf32> to vector<1x20xf32>
    %cst_108 = arith.constant dense<0.000000e+00> : vector<16xf32>
    %247 = vector.multi_reduction <add>, %244, %cst_108 [1] : vector<16x20xf32> to vector<16xf32>
    %248 = vector.shape_cast %247 : vector<16xf32> to vector<16x1xf32>
    %cst_109 = arith.constant 2.000000e+01 : f32
    %249 = vector.broadcast %cst_109 : f32 to vector<16x1xf32>
    %250 = arith.divf %248, %249 : vector<16x1xf32>
    %251 = vector.broadcast %250 : vector<16x1xf32> to vector<16x20xf32>
    %252 = arith.subf %244, %251 : vector<16x20xf32>
    %253 = arith.mulf %252, %252 : vector<16x20xf32>
    %cst_110 = arith.constant dense<0.000000e+00> : vector<16xf32>
    %254 = vector.multi_reduction <add>, %253, %cst_110 [1] : vector<16x20xf32> to vector<16xf32>
    %255 = vector.shape_cast %254 : vector<16xf32> to vector<16x1xf32>
    %cst_111 = arith.constant 2.000000e+01 : f32
    %256 = vector.broadcast %cst_111 : f32 to vector<16x1xf32>
    %257 = arith.divf %255, %256 : vector<16x1xf32>
    %cst_112 = arith.constant 9.99999974E-6 : f32
    %258 = vector.broadcast %cst_112 : f32 to vector<16x1xf32>
    %259 = arith.addf %257, %258 : vector<16x1xf32>
    %260 = math.rsqrt %259 : vector<16x1xf32>
    %261 = vector.broadcast %260 : vector<16x1xf32> to vector<16x20xf32>
    %262 = arith.mulf %252, %261 : vector<16x20xf32>
    %263 = vector.broadcast %245 : vector<1x20xf32> to vector<16x20xf32>
    %264 = arith.mulf %262, %263 : vector<16x20xf32>
    %265 = vector.broadcast %246 : vector<1x20xf32> to vector<16x20xf32>
    %266 = arith.addf %264, %265 : vector<16x20xf32>
    %c1_113 = arith.constant 1 : index
    %c0_114 = arith.constant 0 : index
    %c0_115 = arith.constant 0 : index
    %267 = vector.load %arg10[%c1_113, %c0_114, %c0_115] : memref<2x60x20xf32, #tpu.memory_space<vmem>>, vector<1x60x20xf32>
    %268 = vector.shape_cast %267 : vector<1x60x20xf32> to vector<60x20xf32>
    %c1_116 = arith.constant 1 : index
    %c0_117 = arith.constant 0 : index
    %c0_118 = arith.constant 0 : index
    %269 = vector.load %arg11[%c1_116, %c0_117, %c0_118] : memref<2x1x60xf32, #tpu.memory_space<vmem>>, vector<1x1x60xf32>
    %270 = vector.shape_cast %269 : vector<1x1x60xf32> to vector<1x60xf32>
    %271 = vector.extract_strided_slice %268 {offsets = [0, 0], sizes = [20, 20], strides = [1, 1]} : vector<60x20xf32> to vector<20x20xf32>
    %272 = vector.extract_strided_slice %270 {offsets = [0, 0], sizes = [1, 20], strides = [1, 1]} : vector<1x60xf32> to vector<1x20xf32>
    %cst_119 = arith.constant dense<0.000000e+00> : vector<16x20xf32>
    %273 = tpu.matmul %266, %271, %cst_119 {dimension_numbers = #tpu.dot_dimension_numbers<[1], [1], [0], [0], [0, 0, 1, 0], [], []>} : vector<16x20xf32>, vector<20x20xf32>, vector<16x20xf32> -> vector<16x20xf32>
    %274 = vector.broadcast %272 : vector<1x20xf32> to vector<16x20xf32>
    %275 = arith.addf %273, %274 : vector<16x20xf32>
    %276 = vector.shape_cast %275 : vector<16x20xf32> to vector<2x8x20xf32>
    %277 = vector.extract_strided_slice %268 {offsets = [20, 0], sizes = [40, 20], strides = [1, 1]} : vector<60x20xf32> to vector<40x20xf32>
    %278 = vector.extract_strided_slice %270 {offsets = [0, 20], sizes = [1, 40], strides = [1, 1]} : vector<1x60xf32> to vector<1x40xf32>
    %cst_120 = arith.constant dense<0.000000e+00> : vector<16x40xf32>
    %279 = tpu.matmul %12, %277, %cst_120 {dimension_numbers = #tpu.dot_dimension_numbers<[1], [1], [0], [0], [0, 0, 1, 0], [], []>} : vector<16x20xf32>, vector<40x20xf32>, vector<16x40xf32> -> vector<16x40xf32>
    %280 = vector.broadcast %278 : vector<1x40xf32> to vector<16x40xf32>
    %281 = arith.addf %279, %280 : vector<16x40xf32>
    %282 = vector.extract_strided_slice %281 {offsets = [0, 0], sizes = [16, 20], strides = [1, 1]} : vector<16x40xf32> to vector<16x20xf32>
    %283 = vector.shape_cast %282 : vector<16x20xf32> to vector<2x8x20xf32>
    %284 = vector.extract_strided_slice %281 {offsets = [0, 20], sizes = [16, 20], strides = [1, 1]} : vector<16x40xf32> to vector<16x20xf32>
    %285 = vector.shape_cast %284 : vector<16x20xf32> to vector<2x8x20xf32>
    %286 = vector.shape_cast %276 : vector<2x8x20xf32> to vector<2x8x1x20xf32>
    %287 = vector.shape_cast %283 : vector<2x8x20xf32> to vector<2x1x8x20xf32>
    %288 = vector.broadcast %286 : vector<2x8x1x20xf32> to vector<2x8x8x20xf32>
    %289 = vector.broadcast %287 : vector<2x1x8x20xf32> to vector<2x8x8x20xf32>
    %290 = arith.mulf %288, %289 : vector<2x8x8x20xf32>
    %cst_121 = arith.constant dense<0.000000e+00> : vector<2x8x8xf32>
    %291 = vector.multi_reduction <add>, %290, %cst_121 [3] : vector<2x8x8x20xf32> to vector<2x8x8xf32>
    %cst_122 = arith.constant 0.223606795 : f32
    %292 = vector.broadcast %cst_122 : f32 to vector<2x8x8xf32>
    %293 = arith.mulf %291, %292 : vector<2x8x8xf32>
    %cst_123 = arith.constant dense<0xFF800000> : vector<2x8xf32>
    %294 = vector.multi_reduction <maximumf>, %293, %cst_123 [2] : vector<2x8x8xf32> to vector<2x8xf32>
    %295 = vector.shape_cast %294 : vector<2x8xf32> to vector<2x8x1xf32>
    %296 = vector.broadcast %295 : vector<2x8x1xf32> to vector<2x8x8xf32>
    %297 = arith.subf %293, %296 : vector<2x8x8xf32>
    %298 = math.exp %297 : vector<2x8x8xf32>
    %cst_124 = arith.constant dense<0.000000e+00> : vector<2x8xf32>
    %299 = vector.multi_reduction <add>, %298, %cst_124 [2] : vector<2x8x8xf32> to vector<2x8xf32>
    %300 = vector.shape_cast %299 : vector<2x8xf32> to vector<2x8x1xf32>
    %301 = vector.broadcast %300 : vector<2x8x1xf32> to vector<2x8x8xf32>
    %302 = arith.divf %298, %301 : vector<2x8x8xf32>
    %303 = vector.shape_cast %302 : vector<2x8x8xf32> to vector<2x8x8x1xf32>
    %304 = vector.shape_cast %285 : vector<2x8x20xf32> to vector<2x1x8x20xf32>
    %305 = vector.broadcast %303 : vector<2x8x8x1xf32> to vector<2x8x8x20xf32>
    %306 = vector.broadcast %304 : vector<2x1x8x20xf32> to vector<2x8x8x20xf32>
    %307 = arith.mulf %305, %306 : vector<2x8x8x20xf32>
    %cst_125 = arith.constant dense<0.000000e+00> : vector<2x8x20xf32>
    %308 = vector.multi_reduction <add>, %307, %cst_125 [2] : vector<2x8x8x20xf32> to vector<2x8x20xf32>
    %309 = vector.shape_cast %308 : vector<2x8x20xf32> to vector<16x20xf32>
    %c1_126 = arith.constant 1 : index
    %c0_127 = arith.constant 0 : index
    %c0_128 = arith.constant 0 : index
    %310 = vector.load %arg12[%c1_126, %c0_127, %c0_128] : memref<2x20x20xf32, #tpu.memory_space<vmem>>, vector<1x20x20xf32>
    %311 = vector.shape_cast %310 : vector<1x20x20xf32> to vector<20x20xf32>
    %c1_129 = arith.constant 1 : index
    %c0_130 = arith.constant 0 : index
    %c0_131 = arith.constant 0 : index
    %312 = vector.load %arg13[%c1_129, %c0_130, %c0_131] : memref<2x1x20xf32, #tpu.memory_space<vmem>>, vector<1x1x20xf32>
    %313 = vector.shape_cast %312 : vector<1x1x20xf32> to vector<1x20xf32>
    %cst_132 = arith.constant dense<0.000000e+00> : vector<16x20xf32>
    %314 = tpu.matmul %309, %311, %cst_132 {dimension_numbers = #tpu.dot_dimension_numbers<[1], [1], [0], [0], [0, 0, 1, 0], [], []>} : vector<16x20xf32>, vector<20x20xf32>, vector<16x20xf32> -> vector<16x20xf32>
    %315 = vector.broadcast %313 : vector<1x20xf32> to vector<16x20xf32>
    %316 = arith.addf %314, %315 : vector<16x20xf32>
    %317 = arith.addf %266, %316 : vector<16x20xf32>
    %318 = vector.extract_strided_slice %197 {offsets = [1, 0], sizes = [1, 20], strides = [1, 1]} : vector<3x20xf32> to vector<1x20xf32>
    %319 = vector.extract_strided_slice %199 {offsets = [1, 0], sizes = [1, 20], strides = [1, 1]} : vector<3x20xf32> to vector<1x20xf32>
    %cst_133 = arith.constant dense<0.000000e+00> : vector<16xf32>
    %320 = vector.multi_reduction <add>, %317, %cst_133 [1] : vector<16x20xf32> to vector<16xf32>
    %321 = vector.shape_cast %320 : vector<16xf32> to vector<16x1xf32>
    %cst_134 = arith.constant 2.000000e+01 : f32
    %322 = vector.broadcast %cst_134 : f32 to vector<16x1xf32>
    %323 = arith.divf %321, %322 : vector<16x1xf32>
    %324 = vector.broadcast %323 : vector<16x1xf32> to vector<16x20xf32>
    %325 = arith.subf %317, %324 : vector<16x20xf32>
    %326 = arith.mulf %325, %325 : vector<16x20xf32>
    %cst_135 = arith.constant dense<0.000000e+00> : vector<16xf32>
    %327 = vector.multi_reduction <add>, %326, %cst_135 [1] : vector<16x20xf32> to vector<16xf32>
    %328 = vector.shape_cast %327 : vector<16xf32> to vector<16x1xf32>
    %cst_136 = arith.constant 2.000000e+01 : f32
    %329 = vector.broadcast %cst_136 : f32 to vector<16x1xf32>
    %330 = arith.divf %328, %329 : vector<16x1xf32>
    %cst_137 = arith.constant 9.99999974E-6 : f32
    %331 = vector.broadcast %cst_137 : f32 to vector<16x1xf32>
    %332 = arith.addf %330, %331 : vector<16x1xf32>
    %333 = math.rsqrt %332 : vector<16x1xf32>
    %334 = vector.broadcast %333 : vector<16x1xf32> to vector<16x20xf32>
    %335 = arith.mulf %325, %334 : vector<16x20xf32>
    %336 = vector.broadcast %318 : vector<1x20xf32> to vector<16x20xf32>
    %337 = arith.mulf %335, %336 : vector<16x20xf32>
    %338 = vector.broadcast %319 : vector<1x20xf32> to vector<16x20xf32>
    %339 = arith.addf %337, %338 : vector<16x20xf32>
    %c1_138 = arith.constant 1 : index
    %c0_139 = arith.constant 0 : index
    %c0_140 = arith.constant 0 : index
    %340 = vector.load %arg14[%c1_138, %c0_139, %c0_140] : memref<2x32x20xf32, #tpu.memory_space<vmem>>, vector<1x32x20xf32>
    %341 = vector.shape_cast %340 : vector<1x32x20xf32> to vector<32x20xf32>
    %c1_141 = arith.constant 1 : index
    %c0_142 = arith.constant 0 : index
    %c0_143 = arith.constant 0 : index
    %342 = vector.load %arg15[%c1_141, %c0_142, %c0_143] : memref<2x1x32xf32, #tpu.memory_space<vmem>>, vector<1x1x32xf32>
    %343 = vector.shape_cast %342 : vector<1x1x32xf32> to vector<1x32xf32>
    %cst_144 = arith.constant dense<0.000000e+00> : vector<16x32xf32>
    %344 = tpu.matmul %339, %341, %cst_144 {dimension_numbers = #tpu.dot_dimension_numbers<[1], [1], [0], [0], [0, 0, 1, 0], [], []>} : vector<16x20xf32>, vector<32x20xf32>, vector<16x32xf32> -> vector<16x32xf32>
    %345 = vector.broadcast %343 : vector<1x32xf32> to vector<16x32xf32>
    %346 = arith.addf %344, %345 : vector<16x32xf32>
    %cst_145 = arith.constant 0.000000e+00 : f32
    %347 = vector.broadcast %cst_145 : f32 to vector<16x32xf32>
    %348 = arith.maximumf %346, %347 : vector<16x32xf32>
    %c1_146 = arith.constant 1 : index
    %c0_147 = arith.constant 0 : index
    %c0_148 = arith.constant 0 : index
    %349 = vector.load %arg16[%c1_146, %c0_147, %c0_148] : memref<2x20x32xf32, #tpu.memory_space<vmem>>, vector<1x20x32xf32>
    %350 = vector.shape_cast %349 : vector<1x20x32xf32> to vector<20x32xf32>
    %c1_149 = arith.constant 1 : index
    %c0_150 = arith.constant 0 : index
    %c0_151 = arith.constant 0 : index
    %351 = vector.load %arg17[%c1_149, %c0_150, %c0_151] : memref<2x1x20xf32, #tpu.memory_space<vmem>>, vector<1x1x20xf32>
    %352 = vector.shape_cast %351 : vector<1x1x20xf32> to vector<1x20xf32>
    %cst_152 = arith.constant dense<0.000000e+00> : vector<16x20xf32>
    %353 = tpu.matmul %348, %350, %cst_152 {dimension_numbers = #tpu.dot_dimension_numbers<[1], [1], [0], [0], [0, 0, 1, 0], [], []>} : vector<16x32xf32>, vector<20x32xf32>, vector<16x20xf32> -> vector<16x20xf32>
    %354 = vector.broadcast %352 : vector<1x20xf32> to vector<16x20xf32>
    %355 = arith.addf %353, %354 : vector<16x20xf32>
    %356 = arith.addf %339, %355 : vector<16x20xf32>
    %357 = vector.extract_strided_slice %197 {offsets = [2, 0], sizes = [1, 20], strides = [1, 1]} : vector<3x20xf32> to vector<1x20xf32>
    %358 = vector.extract_strided_slice %199 {offsets = [2, 0], sizes = [1, 20], strides = [1, 1]} : vector<3x20xf32> to vector<1x20xf32>
    %cst_153 = arith.constant dense<0.000000e+00> : vector<16xf32>
    %359 = vector.multi_reduction <add>, %356, %cst_153 [1] : vector<16x20xf32> to vector<16xf32>
    %360 = vector.shape_cast %359 : vector<16xf32> to vector<16x1xf32>
    %cst_154 = arith.constant 2.000000e+01 : f32
    %361 = vector.broadcast %cst_154 : f32 to vector<16x1xf32>
    %362 = arith.divf %360, %361 : vector<16x1xf32>
    %363 = vector.broadcast %362 : vector<16x1xf32> to vector<16x20xf32>
    %364 = arith.subf %356, %363 : vector<16x20xf32>
    %365 = arith.mulf %364, %364 : vector<16x20xf32>
    %cst_155 = arith.constant dense<0.000000e+00> : vector<16xf32>
    %366 = vector.multi_reduction <add>, %365, %cst_155 [1] : vector<16x20xf32> to vector<16xf32>
    %367 = vector.shape_cast %366 : vector<16xf32> to vector<16x1xf32>
    %cst_156 = arith.constant 2.000000e+01 : f32
    %368 = vector.broadcast %cst_156 : f32 to vector<16x1xf32>
    %369 = arith.divf %367, %368 : vector<16x1xf32>
    %cst_157 = arith.constant 9.99999974E-6 : f32
    %370 = vector.broadcast %cst_157 : f32 to vector<16x1xf32>
    %371 = arith.addf %369, %370 : vector<16x1xf32>
    %372 = math.rsqrt %371 : vector<16x1xf32>
    %373 = vector.broadcast %372 : vector<16x1xf32> to vector<16x20xf32>
    %374 = arith.mulf %364, %373 : vector<16x20xf32>
    %375 = vector.broadcast %357 : vector<1x20xf32> to vector<16x20xf32>
    %376 = arith.mulf %374, %375 : vector<16x20xf32>
    %377 = vector.broadcast %358 : vector<1x20xf32> to vector<16x20xf32>
    %378 = arith.addf %376, %377 : vector<16x20xf32>
    %c0_158 = arith.constant 0 : index
    %c0_159 = arith.constant 0 : index
    %379 = vector.load %arg24[%c0_158, %c0_159] : memref<1x2xf32, #tpu.memory_space<vmem>>, vector<1x2xf32>
    %c0_160 = arith.constant 0 : index
    %c0_161 = arith.constant 0 : index
    %380 = vector.load %arg20[%c0_160, %c0_161] : memref<36x20xf32, #tpu.memory_space<vmem>>, vector<36x20xf32>
    %c0_162 = arith.constant 0 : index
    %c0_163 = arith.constant 0 : index
    %381 = vector.load %arg21[%c0_162, %c0_163] : memref<1x36xf32, #tpu.memory_space<vmem>>, vector<1x36xf32>
    %cst_164 = arith.constant dense<0.000000e+00> : vector<16x36xf32>
    %382 = tpu.matmul %378, %380, %cst_164 {dimension_numbers = #tpu.dot_dimension_numbers<[1], [1], [0], [0], [0, 0, 1, 0], [], []>} : vector<16x20xf32>, vector<36x20xf32>, vector<16x36xf32> -> vector<16x36xf32>
    %383 = vector.broadcast %381 : vector<1x36xf32> to vector<16x36xf32>
    %384 = arith.addf %382, %383 : vector<16x36xf32>
    %385 = vector.extract_strided_slice %384 {offsets = [0, 0], sizes = [16, 32], strides = [1, 1]} : vector<16x36xf32> to vector<16x32xf32>
    %386 = vector.extract_strided_slice %384 {offsets = [0, 32], sizes = [16, 4], strides = [1, 1]} : vector<16x36xf32> to vector<16x4xf32>
    %cst_165 = arith.constant 0.000000e+00 : f32
    %387 = vector.broadcast %cst_165 : f32 to vector<16x32xf32>
    %388 = arith.cmpf oge, %385, %387 : vector<16x32xf32>
    %389 = vector.extract_strided_slice %379 {offsets = [0, 0], sizes = [1, 1], strides = [1, 1]} : vector<1x2xf32> to vector<1x1xf32>
    %390 = vector.broadcast %389 : vector<1x1xf32> to vector<16x32xf32>
    %391 = arith.mulf %390, %385 : vector<16x32xf32>
    %392 = arith.select %388, %385, %391 : vector<16x32xi1>, vector<16x32xf32>
    %c0_166 = arith.constant 0 : index
    %c0_167 = arith.constant 0 : index
    %393 = vector.load %arg22[%c0_166, %c0_167] : memref<32x32xf32, #tpu.memory_space<vmem>>, vector<32x32xf32>
    %c0_168 = arith.constant 0 : index
    %c0_169 = arith.constant 0 : index
    %394 = vector.load %arg23[%c0_168, %c0_169] : memref<1x32xf32, #tpu.memory_space<vmem>>, vector<1x32xf32>
    %cst_170 = arith.constant dense<0.000000e+00> : vector<16x32xf32>
    %395 = tpu.matmul %392, %393, %cst_170 {dimension_numbers = #tpu.dot_dimension_numbers<[1], [1], [0], [0], [0, 0, 1, 0], [], []>} : vector<16x32xf32>, vector<32x32xf32>, vector<16x32xf32> -> vector<16x32xf32>
    %396 = vector.broadcast %394 : vector<1x32xf32> to vector<16x32xf32>
    %397 = arith.addf %395, %396 : vector<16x32xf32>
    %cst_171 = arith.constant 0.000000e+00 : f32
    %398 = vector.broadcast %cst_171 : f32 to vector<16x32xf32>
    %399 = arith.cmpf oge, %397, %398 : vector<16x32xf32>
    %400 = vector.extract_strided_slice %379 {offsets = [0, 1], sizes = [1, 1], strides = [1, 1]} : vector<1x2xf32> to vector<1x1xf32>
    %401 = vector.broadcast %400 : vector<1x1xf32> to vector<16x32xf32>
    %402 = arith.mulf %401, %397 : vector<16x32xf32>
    %403 = arith.select %399, %397, %402 : vector<16x32xi1>, vector<16x32xf32>
    %404 = vector.shape_cast %403 : vector<16x32xf32> to vector<2x8x32xf32>
    %cst_172 = arith.constant dense<0xFF800000> : vector<2x32xf32>
    %405 = vector.multi_reduction <maximumf>, %404, %cst_172 [1] : vector<2x8x32xf32> to vector<2x32xf32>
    %406 = vector.shape_cast %405 : vector<2x32xf32> to vector<2x1x32xf32>
    %c0_173 = arith.constant 0 : index
    %c0_174 = arith.constant 0 : index
    %c0_175 = arith.constant 0 : index
    %407 = vector.load %arg27[%c0_173, %c0_174, %c0_175] : memref<2x1x32xf32, #tpu.memory_space<vmem>>, vector<2x1x32xf32>
    tpu.vector_store %arg27[%c0_173, %c0_174, %c0_175], %406 {strides = array<i32>} : memref<2x1x32xf32, #tpu.memory_space<vmem>>, vector<2x1x32xf32>,
    %408 = arith.negf %386 : vector<16x4xf32>
    %409 = math.exp %408 : vector<16x4xf32>
    %cst_176 = arith.constant 1.000000e+00 : f32
    %410 = vector.broadcast %cst_176 : f32 to vector<16x4xf32>
    %411 = arith.addf %410, %409 : vector<16x4xf32>
    %412 = arith.divf %410, %411 : vector<16x4xf32>
    %413 = vector.shape_cast %412 : vector<16x4xf32> to vector<2x8x4xf32>
    %c0_177 = arith.constant 0 : index
    %c0_178 = arith.constant 0 : index
    %c0_179 = arith.constant 0 : index
    %414 = vector.load %arg25[%c0_177, %c0_178, %c0_179] : memref<2x8x4xf32, #tpu.memory_space<vmem>>, vector<2x8x4xf32>
    tpu.vector_store %arg25[%c0_177, %c0_178, %c0_179], %413 {strides = array<i32>} : memref<2x8x4xf32, #tpu.memory_space<vmem>>, vector<2x8x4xf32>,
    %c0_180 = arith.constant 0 : index
    %c0_181 = arith.constant 0 : index
    %c0_182 = arith.constant 0 : index
    %415 = vector.load %arg4[%c0_180, %c0_181, %c0_182] : memref<2x8x4xf32, #tpu.memory_space<vmem>>, vector<2x8x4xf32>
    %416 = vector.shape_cast %415 : vector<2x8x4xf32> to vector<16x4xf32>
    %417 = arith.cmpf ogt, %412, %416 : vector<16x4xf32>
    %418 = arith.extui %417 : vector<16x4xi1> to vector<16x4xi32>
    %419 = arith.sitofp %418 : vector<16x4xi32> to vector<16x4xf32>
    %420 = vector.shape_cast %419 : vector<16x4xf32> to vector<2x8x4xf32>
    %c0_183 = arith.constant 0 : index
    %c0_184 = arith.constant 0 : index
    %c0_185 = arith.constant 0 : index
    %421 = vector.load %arg26[%c0_183, %c0_184, %c0_185] : memref<2x8x4xf32, #tpu.memory_space<vmem>>, vector<2x8x4xf32>
    tpu.vector_store %arg26[%c0_183, %c0_184, %c0_185], %420 {strides = array<i32>} : memref<2x8x4xf32, #tpu.memory_space<vmem>>, vector<2x8x4xf32>,
    return
  }
  func.func @transform_0(%arg0: i32) -> (i32, i32, i32) {
    %c0_i32 = arith.constant 0 : i32
    %c0_i32_0 = arith.constant 0 : i32
    %c0_i32_1 = arith.constant 0 : i32
    return %arg0, %c0_i32, %c0_i32_0 : i32, i32, i32
  }
  func.func @transform_1(%arg0: i32) -> (i32, i32, i32) {
    %c0_i32 = arith.constant 0 : i32
    %c0_i32_0 = arith.constant 0 : i32
    %c0_i32_1 = arith.constant 0 : i32
    return %arg0, %c0_i32, %c0_i32_0 : i32, i32, i32
  }
  func.func @transform_2(%arg0: i32) -> (i32, i32, i32) {
    %c0_i32 = arith.constant 0 : i32
    %c0_i32_0 = arith.constant 0 : i32
    %c0_i32_1 = arith.constant 0 : i32
    return %arg0, %c0_i32, %c0_i32_0 : i32, i32, i32
  }
  func.func @transform_3(%arg0: i32) -> (i32, i32, i32) {
    %c0_i32 = arith.constant 0 : i32
    %c0_i32_0 = arith.constant 0 : i32
    %c0_i32_1 = arith.constant 0 : i32
    return %arg0, %c0_i32, %c0_i32_0 : i32, i32, i32
  }
  func.func @transform_4(%arg0: i32) -> (i32, i32) {
    %c0_i32 = arith.constant 0 : i32
    %c0_i32_0 = arith.constant 0 : i32
    %c0_i32_1 = arith.constant 0 : i32
    return %c0_i32, %c0_i32_0 : i32, i32
  }
  func.func @transform_5(%arg0: i32) -> (i32, i32, i32) {
    %c0_i32 = arith.constant 0 : i32
    %c0_i32_0 = arith.constant 0 : i32
    %c0_i32_1 = arith.constant 0 : i32
    %c0_i32_2 = arith.constant 0 : i32
    return %c0_i32, %c0_i32_0, %c0_i32_1 : i32, i32, i32
  }
  func.func @transform_6(%arg0: i32) -> (i32, i32, i32) {
    %c0_i32 = arith.constant 0 : i32
    %c0_i32_0 = arith.constant 0 : i32
    %c0_i32_1 = arith.constant 0 : i32
    %c0_i32_2 = arith.constant 0 : i32
    return %c0_i32, %c0_i32_0, %c0_i32_1 : i32, i32, i32
  }
  func.func @transform_7(%arg0: i32) -> (i32, i32, i32) {
    %c0_i32 = arith.constant 0 : i32
    %c0_i32_0 = arith.constant 0 : i32
    %c0_i32_1 = arith.constant 0 : i32
    %c0_i32_2 = arith.constant 0 : i32
    return %c0_i32, %c0_i32_0, %c0_i32_1 : i32, i32, i32
  }
  func.func @transform_8(%arg0: i32) -> (i32, i32, i32) {
    %c0_i32 = arith.constant 0 : i32
    %c0_i32_0 = arith.constant 0 : i32
    %c0_i32_1 = arith.constant 0 : i32
    %c0_i32_2 = arith.constant 0 : i32
    return %c0_i32, %c0_i32_0, %c0_i32_1 : i32, i32, i32
  }
  func.func @transform_9(%arg0: i32) -> (i32, i32, i32) {
    %c0_i32 = arith.constant 0 : i32
    %c0_i32_0 = arith.constant 0 : i32
    %c0_i32_1 = arith.constant 0 : i32
    %c0_i32_2 = arith.constant 0 : i32
    return %c0_i32, %c0_i32_0, %c0_i32_1 : i32, i32, i32
  }
  func.func @transform_10(%arg0: i32) -> (i32, i32, i32) {
    %c0_i32 = arith.constant 0 : i32
    %c0_i32_0 = arith.constant 0 : i32
    %c0_i32_1 = arith.constant 0 : i32
    %c0_i32_2 = arith.constant 0 : i32
    return %c0_i32, %c0_i32_0, %c0_i32_1 : i32, i32, i32
  }
  func.func @transform_11(%arg0: i32) -> (i32, i32, i32) {
    %c0_i32 = arith.constant 0 : i32
    %c0_i32_0 = arith.constant 0 : i32
    %c0_i32_1 = arith.constant 0 : i32
    %c0_i32_2 = arith.constant 0 : i32
    return %c0_i32, %c0_i32_0, %c0_i32_1 : i32, i32, i32
  }
  func.func @transform_12(%arg0: i32) -> (i32, i32, i32) {
    %c0_i32 = arith.constant 0 : i32
    %c0_i32_0 = arith.constant 0 : i32
    %c0_i32_1 = arith.constant 0 : i32
    %c0_i32_2 = arith.constant 0 : i32
    return %c0_i32, %c0_i32_0, %c0_i32_1 : i32, i32, i32
  }
  func.func @transform_13(%arg0: i32) -> (i32, i32, i32) {
    %c0_i32 = arith.constant 0 : i32
    %c0_i32_0 = arith.constant 0 : i32
    %c0_i32_1 = arith.constant 0 : i32
    %c0_i32_2 = arith.constant 0 : i32
    return %c0_i32, %c0_i32_0, %c0_i32_1 : i32, i32, i32
  }
  func.func @transform_14(%arg0: i32) -> (i32, i32, i32) {
    %c0_i32 = arith.constant 0 : i32
    %c0_i32_0 = arith.constant 0 : i32
    %c0_i32_1 = arith.constant 0 : i32
    %c0_i32_2 = arith.constant 0 : i32
    return %c0_i32, %c0_i32_0, %c0_i32_1 : i32, i32, i32
  }
  func.func @transform_15(%arg0: i32) -> (i32, i32, i32) {
    %c0_i32 = arith.constant 0 : i32
    %c0_i32_0 = arith.constant 0 : i32
    %c0_i32_1 = arith.constant 0 : i32
    %c0_i32_2 = arith.constant 0 : i32
    return %c0_i32, %c0_i32_0, %c0_i32_1 : i32, i32, i32
  }
  func.func @transform_16(%arg0: i32) -> (i32, i32, i32) {
    %c0_i32 = arith.constant 0 : i32
    %c0_i32_0 = arith.constant 0 : i32
    %c0_i32_1 = arith.constant 0 : i32
    %c0_i32_2 = arith.constant 0 : i32
    return %c0_i32, %c0_i32_0, %c0_i32_1 : i32, i32, i32
  }
  func.func @transform_17(%arg0: i32) -> (i32, i32, i32) {
    %c0_i32 = arith.constant 0 : i32
    %c0_i32_0 = arith.constant 0 : i32
    %c0_i32_1 = arith.constant 0 : i32
    %c0_i32_2 = arith.constant 0 : i32
    return %c0_i32, %c0_i32_0, %c0_i32_1 : i32, i32, i32
  }
  func.func @transform_18(%arg0: i32) -> (i32, i32, i32) {
    %c0_i32 = arith.constant 0 : i32
    %c0_i32_0 = arith.constant 0 : i32
    %c0_i32_1 = arith.constant 0 : i32
    %c0_i32_2 = arith.constant 0 : i32
    return %c0_i32, %c0_i32_0, %c0_i32_1 : i32, i32, i32
  }
  func.func @transform_19(%arg0: i32) -> (i32, i32) {
    %c0_i32 = arith.constant 0 : i32
    %c0_i32_0 = arith.constant 0 : i32
    %c0_i32_1 = arith.constant 0 : i32
    return %c0_i32, %c0_i32_0 : i32, i32
  }
  func.func @transform_20(%arg0: i32) -> (i32, i32) {
    %c0_i32 = arith.constant 0 : i32
    %c0_i32_0 = arith.constant 0 : i32
    %c0_i32_1 = arith.constant 0 : i32
    return %c0_i32, %c0_i32_0 : i32, i32
  }
  func.func @transform_21(%arg0: i32) -> (i32, i32) {
    %c0_i32 = arith.constant 0 : i32
    %c0_i32_0 = arith.constant 0 : i32
    %c0_i32_1 = arith.constant 0 : i32
    return %c0_i32, %c0_i32_0 : i32, i32
  }
  func.func @transform_22(%arg0: i32) -> (i32, i32) {
    %c0_i32 = arith.constant 0 : i32
    %c0_i32_0 = arith.constant 0 : i32
    %c0_i32_1 = arith.constant 0 : i32
    return %c0_i32, %c0_i32_0 : i32, i32
  }
  func.func @transform_23(%arg0: i32) -> (i32, i32) {
    %c0_i32 = arith.constant 0 : i32
    %c0_i32_0 = arith.constant 0 : i32
    %c0_i32_1 = arith.constant 0 : i32
    return %c0_i32, %c0_i32_0 : i32, i32
  }
  func.func @transform_24(%arg0: i32) -> (i32, i32, i32) {
    %c0_i32 = arith.constant 0 : i32
    %c0_i32_0 = arith.constant 0 : i32
    %c0_i32_1 = arith.constant 0 : i32
    return %arg0, %c0_i32, %c0_i32_0 : i32, i32, i32
  }
  func.func @transform_25(%arg0: i32) -> (i32, i32, i32) {
    %c0_i32 = arith.constant 0 : i32
    %c0_i32_0 = arith.constant 0 : i32
    %c0_i32_1 = arith.constant 0 : i32
    return %arg0, %c0_i32, %c0_i32_0 : i32, i32, i32
  }
  func.func @transform_26(%arg0: i32) -> (i32, i32, i32) {
    %c0_i32 = arith.constant 0 : i32
    %c0_i32_0 = arith.constant 0 : i32
    %c0_i32_1 = arith.constant 0 : i32
    return %arg0, %c0_i32, %c0_i32_0 : i32, i32, i32
  }
}

</mosaic_0001>

<llo_original>
// kernel: tpu_custom_call.1
$region0: #{tpu_custom_call.1}
  #allocation0 [shape = 'u32[]', space=smem, size = 0x4, offset = 0x4, fixed_abs, tag = 'smem constant byte address 0x4 - core index']
  #allocation1 [shape = 'u32[72,128]{1,0:T(1,128)}', space=vmem, size = 0x9000, scoped, tag = 'internal scratch']
  %s0 = inlined_call_operand.vmem [shape: f32[2,8,4], index: 0, kind: input, shape index: {}]
  %s1 = inlined_call_operand.vmem [shape: f32[2,8,1], index: 1, kind: input, shape index: {}]
  %s2 = inlined_call_operand.vmem [shape: f32[2,8,20], index: 2, kind: input, shape index: {}]
  %s3 = inlined_call_operand.vmem [shape: f32[2,8,4], index: 3, kind: input, shape index: {}]
  %s4 = inlined_call_operand.vmem [shape: f32[1,8], index: 4, kind: input, shape index: {}]
  %s5 = inlined_call_operand.vmem [shape: f32[2,60,20], index: 5, kind: input, shape index: {}]
  %s6 = inlined_call_operand.vmem [shape: f32[2,1,60], index: 6, kind: input, shape index: {}]
  %s7 = inlined_call_operand.vmem [shape: f32[2,20,20], index: 7, kind: input, shape index: {}]
  %s8 = inlined_call_operand.vmem [shape: f32[2,1,20], index: 8, kind: input, shape index: {}]
  %s9 = inlined_call_operand.vmem [shape: f32[2,60,20], index: 9, kind: input, shape index: {}]
  %s10 = inlined_call_operand.vmem [shape: f32[2,1,60], index: 10, kind: input, shape index: {}]
  %s11 = inlined_call_operand.vmem [shape: f32[2,20,20], index: 11, kind: input, shape index: {}]
  %s12 = inlined_call_operand.vmem [shape: f32[2,1,20], index: 12, kind: input, shape index: {}]
  %s13 = inlined_call_operand.vmem [shape: f32[2,32,20], index: 13, kind: input, shape index: {}]
  %s14 = inlined_call_operand.vmem [shape: f32[2,1,32], index: 14, kind: input, shape index: {}]
  %s15 = inlined_call_operand.vmem [shape: f32[2,20,32], index: 15, kind: input, shape index: {}]
  %s16 = inlined_call_operand.vmem [shape: f32[2,1,20], index: 16, kind: input, shape index: {}]
  %s17 = inlined_call_operand.vmem [shape: f32[2,3,20], index: 17, kind: input, shape index: {}]
  %s18 = inlined_call_operand.vmem [shape: f32[2,3,20], index: 18, kind: input, shape index: {}]
  %s19 = inlined_call_operand.vmem [shape: f32[36,20], index: 19, kind: input, shape index: {}]
  %s20 = inlined_call_operand.vmem [shape: f32[1,36], index: 20, kind: input, shape index: {}]
  %s21 = inlined_call_operand.vmem [shape: f32[32,32], index: 21, kind: input, shape index: {}]
  %s22 = inlined_call_operand.vmem [shape: f32[1,32], index: 22, kind: input, shape index: {}]
  %s23 = inlined_call_operand.vmem [shape: f32[1,2], index: 23, kind: input, shape index: {}]
  %s24 = inlined_call_operand.vmem [shape: f32[2,8,4], index: 24, kind: output, shape index: {0}]
  %s25 = inlined_call_operand.vmem [shape: f32[2,8,4], index: 25, kind: output, shape index: {1}]
  %s26 = inlined_call_operand.hbm [shape: f32[2,1,32], index: 26, kind: output, shape index: {2}]
  %27 = xla_tuple %s24, %s25, %s26
  %s28 = sld [smem:[#allocation0]]
  $region122: #{tpu_custom_call.1} parent=0
    _
  %s30 = ssub.s32 1, %s28
  %s31 = scalar_select 0, %s30, %s28
  $region1: #{tpu_custom_call.1} parent=0
    #allocation2 [shape = 'u8[1024]{0}', space=vmem, size = 0x400, scoped, tag = 'output window, operand 2, single buffered']
    #allocation3 [shape = 's32[1]{0}', space=sflag, size = 0x4, scoped, tag = 'scoped memory for tpu_custom_call.1']
    %32 = vsyncpa [#allocation3], 0
    // Predicated region
    $region2: #{tpu_custom_call.1} parent=1 // pred_check
      _
    $region3: #{tpu_custom_call.1} parent=1 // pred_check_branch
      %34 = sbr.rel (0) target = $region5
    $region4: #{tpu_custom_call.1} parent=1 // pred_region
      _
    $region5: #{tpu_custom_call.1} parent=1 // pred_fallthru
      _
    // Predicated region
    $region6: #{tpu_custom_call.1} parent=1 // pred_check
      _
    $region7: #{tpu_custom_call.1} parent=1 // pred_check_branch
      %36 = sbr.rel (0) target = $region9
    $region8: #{tpu_custom_call.1} parent=1 // pred_region
      _
    $region9: #{tpu_custom_call.1} parent=1 // pred_fallthru
      _
    // Predicated region
    $region10: #{tpu_custom_call.1} parent=1 // pred_check
      _
    $region11: #{tpu_custom_call.1} parent=1 // pred_check_branch
      %38 = sbr.rel (0) target = $region13
    $region12: #{tpu_custom_call.1} parent=1 // pred_region
      _
    $region13: #{tpu_custom_call.1} parent=1 // pred_fallthru
      _
    // Predicated region
    $region14: #{tpu_custom_call.1} parent=1 // pred_check
      _
    $region15: #{tpu_custom_call.1} parent=1 // pred_check_branch
      %40 = sbr.rel (0) target = $region17
    $region16: #{tpu_custom_call.1} parent=1 // pred_region
      _
    $region17: #{tpu_custom_call.1} parent=1 // pred_fallthru
      _
    // Predicated region
    $region18: #{tpu_custom_call.1} parent=1 // pred_check
      _
    $region19: #{tpu_custom_call.1} parent=1 // pred_check_branch
      %42 = sbr.rel (0) target = $region21
    $region20: #{tpu_custom_call.1} parent=1 // pred_region
      _
    $region21: #{tpu_custom_call.1} parent=1 // pred_fallthru
      _
    // Predicated region
    $region22: #{tpu_custom_call.1} parent=1 // pred_check
      _
    $region23: #{tpu_custom_call.1} parent=1 // pred_check_branch
      %44 = sbr.rel (0) target = $region25
    $region24: #{tpu_custom_call.1} parent=1 // pred_region
      _
    $region25: #{tpu_custom_call.1} parent=1 // pred_fallthru
      _
    // Predicated region
    $region26: #{tpu_custom_call.1} parent=1 // pred_check
      _
    $region27: #{tpu_custom_call.1} parent=1 // pred_check_branch
      %46 = sbr.rel (0) target = $region29
    $region28: #{tpu_custom_call.1} parent=1 // pred_region
      _
    $region29: #{tpu_custom_call.1} parent=1 // pred_fallthru
      _
    // Predicated region
    $region30: #{tpu_custom_call.1} parent=1 // pred_check
      _
    $region31: #{tpu_custom_call.1} parent=1 // pred_check_branch
      %48 = sbr.rel (0) target = $region33
    $region32: #{tpu_custom_call.1} parent=1 // pred_region
      _
    $region33: #{tpu_custom_call.1} parent=1 // pred_fallthru
      _
    // Predicated region
    $region34: #{tpu_custom_call.1} parent=1 // pred_check
      _
    $region35: #{tpu_custom_call.1} parent=1 // pred_check_branch
      %50 = sbr.rel (0) target = $region37
    $region36: #{tpu_custom_call.1} parent=1 // pred_region
      _
    $region37: #{tpu_custom_call.1} parent=1 // pred_fallthru
      _
    // Predicated region
    $region38: #{tpu_custom_call.1} parent=1 // pred_check
      _
    $region39: #{tpu_custom_call.1} parent=1 // pred_check_branch
      %52 = sbr.rel (0) target = $region41
    $region40: #{tpu_custom_call.1} parent=1 // pred_region
      _
    $region41: #{tpu_custom_call.1} parent=1 // pred_fallthru
      _
    // Predicated region
    $region42: #{tpu_custom_call.1} parent=1 // pred_check
      _
    $region43: #{tpu_custom_call.1} parent=1 // pred_check_branch
      %54 = sbr.rel (0) target = $region45
    $region44: #{tpu_custom_call.1} parent=1 // pred_region
      _
    $region45: #{tpu_custom_call.1} parent=1 // pred_fallthru
      _
    // Predicated region
    $region46: #{tpu_custom_call.1} parent=1 // pred_check
      _
    $region47: #{tpu_custom_call.1} parent=1 // pred_check_branch
      %56 = sbr.rel (0) target = $region49
    $region48: #{tpu_custom_call.1} parent=1 // pred_region
      _
    $region49: #{tpu_custom_call.1} parent=1 // pred_fallthru
      _
    // Predicated region
    $region50: #{tpu_custom_call.1} parent=1 // pred_check
      _
    $region51: #{tpu_custom_call.1} parent=1 // pred_check_branch
      %58 = sbr.rel (0) target = $region53
    $region52: #{tpu_custom_call.1} parent=1 // pred_region
      _
    $region53: #{tpu_custom_call.1} parent=1 // pred_fallthru
      _
    // Predicated region
    $region54: #{tpu_custom_call.1} parent=1 // pred_check
      _
    $region55: #{tpu_custom_call.1} parent=1 // pred_check_branch
      %60 = sbr.rel (0) target = $region57
    $region56: #{tpu_custom_call.1} parent=1 // pred_region
      _
    $region57: #{tpu_custom_call.1} parent=1 // pred_fallthru
      _
    // Predicated region
    $region58: #{tpu_custom_call.1} parent=1 // pred_check
      _
    $region59: #{tpu_custom_call.1} parent=1 // pred_check_branch
      %62 = sbr.rel (0) target = $region61
    $region60: #{tpu_custom_call.1} parent=1 // pred_region
      _
    $region61: #{tpu_custom_call.1} parent=1 // pred_fallthru
      _
    // Predicated region
    $region62: #{tpu_custom_call.1} parent=1 // pred_check
      _
    $region63: #{tpu_custom_call.1} parent=1 // pred_check_branch
      %64 = sbr.rel (0) target = $region65
    $region64: #{tpu_custom_call.1} parent=1 // pred_region
      _
    $region65: #{tpu_custom_call.1} parent=1 // pred_fallthru
      _
    // Predicated region
    $region66: #{tpu_custom_call.1} parent=1 // pred_check
      _
    $region67: #{tpu_custom_call.1} parent=1 // pred_check_branch
      %66 = sbr.rel (0) target = $region69
    $region68: #{tpu_custom_call.1} parent=1 // pred_region
      _
    $region69: #{tpu_custom_call.1} parent=1 // pred_fallthru
      _
    // Predicated region
    $region70: #{tpu_custom_call.1} parent=1 // pred_check
      _
    $region71: #{tpu_custom_call.1} parent=1 // pred_check_branch
      %68 = sbr.rel (0) target = $region73
    $region72: #{tpu_custom_call.1} parent=1 // pred_region
      _
    $region73: #{tpu_custom_call.1} parent=1 // pred_fallthru
      _
    // Predicated region
    $region74: #{tpu_custom_call.1} parent=1 // pred_check
      _
    $region75: #{tpu_custom_call.1} parent=1 // pred_check_branch
      %70 = sbr.rel (0) target = $region77
    $region76: #{tpu_custom_call.1} parent=1 // pred_region
      _
    $region77: #{tpu_custom_call.1} parent=1 // pred_fallthru
      _
    // Predicated region
    $region78: #{tpu_custom_call.1} parent=1 // pred_check
      _
    $region79: #{tpu_custom_call.1} parent=1 // pred_check_branch
      %72 = sbr.rel (0) target = $region81
    $region80: #{tpu_custom_call.1} parent=1 // pred_region
      _
    $region81: #{tpu_custom_call.1} parent=1 // pred_fallthru
      _
    // Predicated region
    $region82: #{tpu_custom_call.1} parent=1 // pred_check
      _
    $region83: #{tpu_custom_call.1} parent=1 // pred_check_branch
      %74 = sbr.rel (0) target = $region85
    $region84: #{tpu_custom_call.1} parent=1 // pred_region
      _
    $region85: #{tpu_custom_call.1} parent=1 // pred_fallthru
      _
    // Predicated region
    $region86: #{tpu_custom_call.1} parent=1 // pred_check
      _
    $region87: #{tpu_custom_call.1} parent=1 // pred_check_branch
      %76 = sbr.rel (0) target = $region89
    $region88: #{tpu_custom_call.1} parent=1 // pred_region
      _
    $region89: #{tpu_custom_call.1} parent=1 // pred_fallthru
      _
    // Predicated region
    $region90: #{tpu_custom_call.1} parent=1 // pred_check
      _
    $region91: #{tpu_custom_call.1} parent=1 // pred_check_branch
      %78 = sbr.rel (0) target = $region93
    $region92: #{tpu_custom_call.1} parent=1 // pred_region
      _
    $region93: #{tpu_custom_call.1} parent=1 // pred_fallthru
      _
    // Predicated region
    $region94: #{tpu_custom_call.1} parent=1 // pred_check
      _
    $region95: #{tpu_custom_call.1} parent=1 // pred_check_branch
      %80 = sbr.rel (0) target = $region97
    $region96: #{tpu_custom_call.1} parent=1 // pred_region
      _
    $region97: #{tpu_custom_call.1} parent=1 // pred_fallthru
      _
    %v81 = vld [vmem:[%s1] sm:$0xff]
    %v82 = vld [vmem:[%s1 + $0x8] sm:$0xff]
    %v83 = vld [vmem:[%s4] sm:$0x1]
    %85 = vset.pattern.permute.xlu0 0
    %86 = vperm.xlu0 %85, %v81
    %v87 = vpop.permute.xlu0 %86
    %90 = vset.pattern.permute.xlu0 0
    %91 = vperm.xlu0 %90, %v82
    %v92 = vpop.permute.xlu0 %91
    %v95 = vperm.slane %v83, 0
    %v97 = vmul.f32 %v87, %v95
    %v98 = vmul.f32 %v92, %v95
    %v99 = vld [vmem:[%s0] sm:$0xff]
    %v100 = vld [vmem:[%s0 + $0x8] sm:$0xff]
    %v101 = vand.u32 2147483647, %v97
    %vm102 = vcmp.le.f32.partialorder %v101, 0.7853982
    %vm103 = vcmp.lt.s32.totalorder %v97, 0
    %v104 = vand.u32 %v97, 2139095040
    %v105 = vshrl.u32 %v104, 23
    %v106 = vsub.s32 %v105, 127
    %v107 = vand.u32 2147483647, %v97
    %v108 = vand.u32 %v107, 8388607
    %v109 = vor.u32 %v108, 8388608
    %v110 = vsub.s32 0, %v109
    %v111 = vadd.s32 %v106, 1
    %vm112 = vcmp.gt.s32.totalorder %v111, 0
    %v113 = vsel %vm112, %v111, 0
    %v114 = vshrl.u32 %v113, 5
    %v115 = vand.u32 %v113, 31
    %v116 = vsub.s32 32, %v115
    %v117 = vshrl.u32 683565275, %v116
    %v118 = vshll.u32 683565275, %v115
    %v119 = vshrl.u32 2475754826, %v116
    %v120 = vor.u32 %v118, %v119
    %v121 = vshll.u32 2475754826, %v115
    %v122 = vshrl.u32 2131351028, %v116
    %v123 = vor.u32 %v121, %v122
    %v124 = vshll.u32 2131351028, %v115
    %v125 = vshrl.u32 2102212464, %v116
    %v126 = vor.u32 %v124, %v125
    %v127 = vshll.u32 2102212464, %v115
    %v128 = vshrl.u32 920167782, %v116
    %v129 = vor.u32 %v127, %v128
    %v130 = vshll.u32 920167782, %v115
    %v131 = vshrl.u32 1326507024, %v116
    %v132 = vor.u32 %v130, %v131
    %vm133 = vcmp.lt.s32.totalorder %v114, 1
    %vm134 = vcmp.lt.s32.totalorder %v114, 2
    %vm135 = vcmp.lt.s32.totalorder %v114, 3
    %vm136 = vcmp.lt.s32.totalorder %v114, 4
    %v137 = vsel %vm133, %v117, %v120
    %v138 = vsel %vm136, %v126, 2102212464
    %v139 = vsel %vm135, %v123, %v138
    %v140 = vsel %vm134, %v137, %v139
    %v141 = vsel %vm133, %v120, %v123
    %v142 = vsel %vm136, %v129, 920167782
    %v143 = vsel %vm135, %v126, %v142
    %v144 = vsel %vm134, %v141, %v143
    %v145 = vsel %vm133, %v123, %v126
    %v146 = vsel %vm136, %v132, 1326507024
    %v147 = vsel %vm135, %v129, %v146
    %v148 = vsel %vm134, %v145, %v147
    %v149 = vshll.u32 %v109, 8
    %v150 = vand.u32 %v149, 65535
    %v151 = vshrl.u32 %v149, 16
    %v152 = vand.u32 %v148, 65535
    %v153 = vshrl.u32 %v148, 16
    %v154 = vmul.u32 %v150, %v152
    %v155 = vmul.u32 %v150, %v153
    %v156 = vmul.u32 %v151, %v152
    %v157 = vmul.u32 %v151, %v153
    %v158 = vshll.u32 %v155, 16
    %v159 = vshrl.u32 %v155, 16
    %v160 = vshll.u32 %v156, 16
    %v161 = vshrl.u32 %v156, 16
    %vm162 = vc.u32 %v154, %v158
    %v163 = vsel %vm162, 1, 0
    %v164 = vadd.s32 %v154, %v158
    %v165 = vadd.s32 %v157, %v163
    %vm166 = vc.u32 %v164, %v160
    %v167 = vsel %vm166, 1, 0
    %v168 = vadd.s32 %v164, %v160
    %v169 = vadd.s32 %v165, %v167
    %v170 = vadd.s32 %v169, %v159
    %v171 = vadd.s32 %v170, %v161
    %v172 = vand.u32 %v149, 65535
    %v173 = vshrl.u32 %v149, 16
    %v174 = vand.u32 %v144, 65535
    %v175 = vshrl.u32 %v144, 16
    %v176 = vmul.u32 %v172, %v174
    %v177 = vmul.u32 %v172, %v175
    %v178 = vmul.u32 %v173, %v174
    %v179 = vmul.u32 %v173, %v175
    %v180 = vshll.u32 %v177, 16
    %v181 = vshrl.u32 %v177, 16
    %v182 = vshll.u32 %v178, 16
    %v183 = vshrl.u32 %v178, 16
    %vm184 = vc.u32 %v176, %v180
    %v185 = vsel %vm184, 1, 0
    %v186 = vadd.s32 %v176, %v180
    %v187 = vadd.s32 %v179, %v185
    %vm188 = vc.u32 %v186, %v182
    %v189 = vsel %vm188, 1, 0
    %v190 = vadd.s32 %v186, %v182
    %v191 = vadd.s32 %v187, %v189
    %v192 = vadd.s32 %v191, %v181
    %v193 = vadd.s32 %v192, %v183
    %v194 = vmul.u32 %v149, %v140
    %v195 = vadd.s32 %v171, %v190
    %vm196 = vc.u32 %v171, %v190
    %v197 = vadd.s32 %v193, 1
    %v198 = vsel %vm196, %v197, %v193
    %v199 = vadd.s32 %v194, %v198
    %v200 = vadd.s32 %v199, 536870912
    %v201 = vshrl.u32 %v200, 30
    %v202 = vshll.u32 %v201, 30
    %v203 = vsub.s32 %v199, %v202
    %vm204 = vcmp.lt.s32.totalorder %v203, 0
    %v205 = vsub.s32 0, %v203
    %v206 = vsel %vm204, %v205, %v203
    %v207 = vclz %v206
    %v208 = vsub.s32 %v207, 2
    %vm209 = vcmp.gt.s32.totalorder 0, %v208
    %v210 = vsel %vm209, 0, %v208
    %v211 = vsub.s32 32, %v210
    %v212 = vshll.u32 %v203, %v210
    %v213 = vshrl.u32 %v195, %v211
    %v214 = vor.u32 %v212, %v213
    %v215 = vsub.s32 4294967266, %v210
    %v216 = vadd.s32 %v215, 127
    %v217 = vshll.u32 %v216, 23
    %v218 = vor.u32 4788187, %v217
    %v219 = vand.u32 2147483647, %v218
    %v221 = vcvt.s32.f32 %v214
    %v222 = vmul.f32 %v221, %v219
    %v223 = vxor.u32 %v222, 2147483648
    %v224 = vsel %vm103, %v223, %v222
    %v225 = vsub.s32 4, %v201
    %v226 = vsel %vm103, %v225, %v201
    %v227 = vsel %vm102, %v97, %v224
    %v228 = vsel %vm102, 0, %v226
    %v229 = vmul.f32 %v227, %v227
    %v230 = vmul.f32 %v229, -0.001358992
    %v231 = vadd.f32 %v230, 0.041655596
    %v232 = vmul.f32 %v229, %v231
    %v233 = vadd.f32 %v232, -0.4999988
    %v234 = vmul.f32 %v229, %v233
    %v235 = vadd.f32 1.0, %v234
    %v236 = vmul.f32 %v227, %v227
    %v237 = vmul.f32 %v236, -0.00019511016
    %v238 = vadd.f32 %v237, 0.008332121
    %v239 = vmul.f32 %v236, %v238
    %v240 = vadd.f32 %v239, -0.16666654
    %v241 = vmul.f32 %v236, %v240
    %v242 = vadd.f32 %v241, 1.0
    %v243 = vmul.f32 %v242, %v227
    %vm244 = vweird.f32 %v97
    %v245 = vadd.s32 %v228, 3
    %v246 = vand.u32 %v245, 3
    %vm247 = vcmp.lt.s32.totalorder %v246, 2
    %vm248 = vcmp.eq.s32.totalorder %v246, 0
    %v249 = vxor.u32 %v243, 2147483648
    %v250 = vsel %vm248, %v235, %v249
    %vm251 = vcmp.eq.s32.totalorder %v246, 2
    %v252 = vxor.u32 %v235, 2147483648
    %v253 = vsel %vm251, %v252, %v243
    %v254 = vsel %vm247, %v250, %v253
    %v255 = vsel %vm244, nan, %v254
    %v256 = vand.u32 2147483647, %v98
    %vm257 = vcmp.le.f32.partialorder %v256, 0.7853982
    %vm258 = vcmp.lt.s32.totalorder %v98, 0
    %v259 = vand.u32 %v98, 2139095040
    %v260 = vshrl.u32 %v259, 23
    %v261 = vsub.s32 %v260, 127
    %v262 = vand.u32 2147483647, %v98
    %v263 = vand.u32 %v262, 8388607
    %v264 = vor.u32 %v263, 8388608
    %v265 = vsub.s32 0, %v264
    %v266 = vadd.s32 %v261, 1
    %vm267 = vcmp.gt.s32.totalorder %v266, 0
    %v268 = vsel %vm267, %v266, 0
    %v269 = vshrl.u32 %v268, 5
    %v270 = vand.u32 %v268, 31
    %v271 = vsub.s32 32, %v270
    %v272 = vshrl.u32 683565275, %v271
    %v273 = vshll.u32 683565275, %v270
    %v274 = vshrl.u32 2475754826, %v271
    %v275 = vor.u32 %v273, %v274
    %v276 = vshll.u32 2475754826, %v270
    %v277 = vshrl.u32 2131351028, %v271
    %v278 = vor.u32 %v276, %v277
    %v279 = vshll.u32 2131351028, %v270
    %v280 = vshrl.u32 2102212464, %v271
    %v281 = vor.u32 %v279, %v280
    %v282 = vshll.u32 2102212464, %v270
    %v283 = vshrl.u32 920167782, %v271
    %v284 = vor.u32 %v282, %v283
    %v285 = vshll.u32 920167782, %v270
    %v286 = vshrl.u32 1326507024, %v271
    %v287 = vor.u32 %v285, %v286
    %vm288 = vcmp.lt.s32.totalorder %v269, 1
    %vm289 = vcmp.lt.s32.totalorder %v269, 2
    %vm290 = vcmp.lt.s32.totalorder %v269, 3
    %vm291 = vcmp.lt.s32.totalorder %v269, 4
    %v292 = vsel %vm288, %v272, %v275
    %v293 = vsel %vm291, %v281, 2102212464
    %v294 = vsel %vm290, %v278, %v293
    %v295 = vsel %vm289, %v292, %v294
    %v296 = vsel %vm288, %v275, %v278
    %v297 = vsel %vm291, %v284, 920167782
    %v298 = vsel %vm290, %v281, %v297
    %v299 = vsel %vm289, %v296, %v298
    %v300 = vsel %vm288, %v278, %v281
    %v301 = vsel %vm291, %v287, 1326507024
    %v302 = vsel %vm290, %v284, %v301
    %v303 = vsel %vm289, %v300, %v302
    %v304 = vshll.u32 %v264, 8
    %v305 = vand.u32 %v304, 65535
    %v306 = vshrl.u32 %v304, 16
    %v307 = vand.u32 %v303, 65535
    %v308 = vshrl.u32 %v303, 16
    %v309 = vmul.u32 %v305, %v307
    %v310 = vmul.u32 %v305, %v308
    %v311 = vmul.u32 %v306, %v307
    %v312 = vmul.u32 %v306, %v308
    %v313 = vshll.u32 %v310, 16
    %v314 = vshrl.u32 %v310, 16
    %v315 = vshll.u32 %v311, 16
    %v316 = vshrl.u32 %v311, 16
    %vm317 = vc.u32 %v309, %v313
    %v318 = vsel %vm317, 1, 0
    %v319 = vadd.s32 %v309, %v313
    %v320 = vadd.s32 %v312, %v318
    %vm321 = vc.u32 %v319, %v315
    %v322 = vsel %vm321, 1, 0
    %v323 = vadd.s32 %v319, %v315
    %v324 = vadd.s32 %v320, %v322
    %v325 = vadd.s32 %v324, %v314
    %v326 = vadd.s32 %v325, %v316
    %v327 = vand.u32 %v304, 65535
    %v328 = vshrl.u32 %v304, 16
    %v329 = vand.u32 %v299, 65535
    %v330 = vshrl.u32 %v299, 16
    %v331 = vmul.u32 %v327, %v329
    %v332 = vmul.u32 %v327, %v330
    %v333 = vmul.u32 %v328, %v329
    %v334 = vmul.u32 %v328, %v330
    %v335 = vshll.u32 %v332, 16
    %v336 = vshrl.u32 %v332, 16
    %v337 = vshll.u32 %v333, 16
    %v338 = vshrl.u32 %v333, 16
    %vm339 = vc.u32 %v331, %v335
    %v340 = vsel %vm339, 1, 0
    %v341 = vadd.s32 %v331, %v335
    %v342 = vadd.s32 %v334, %v340
    %vm343 = vc.u32 %v341, %v337
    %v344 = vsel %vm343, 1, 0
    %v345 = vadd.s32 %v341, %v337
    %v346 = vadd.s32 %v342, %v344
    %v347 = vadd.s32 %v346, %v336
    %v348 = vadd.s32 %v347, %v338
    %v349 = vmul.u32 %v304, %v295
    %v350 = vadd.s32 %v326, %v345
    %vm351 = vc.u32 %v326, %v345
    %v352 = vadd.s32 %v348, 1
    %v353 = vsel %vm351, %v352, %v348
    %v354 = vadd.s32 %v349, %v353
    %v355 = vadd.s32 %v354, 536870912
    %v356 = vshrl.u32 %v355, 30
    %v357 = vshll.u32 %v356, 30
    %v358 = vsub.s32 %v354, %v357
    %vm359 = vcmp.lt.s32.totalorder %v358, 0
    %v360 = vsub.s32 0, %v358
    %v361 = vsel %vm359, %v360, %v358
    %v362 = vclz %v361
    %v363 = vsub.s32 %v362, 2
    %vm364 = vcmp.gt.s32.totalorder 0, %v363
    %v365 = vsel %vm364, 0, %v363
    %v366 = vsub.s32 32, %v365
    %v367 = vshll.u32 %v358, %v365
    %v368 = vshrl.u32 %v350, %v366
    %v369 = vor.u32 %v367, %v368
    %v370 = vsub.s32 4294967266, %v365
    %v371 = vadd.s32 %v370, 127
    %v372 = vshll.u32 %v371, 23
    %v373 = vor.u32 4788187, %v372
    %v374 = vand.u32 2147483647, %v373
    %v376 = vcvt.s32.f32 %v369
    %v377 = vmul.f32 %v376, %v374
    %v378 = vxor.u32 %v377, 2147483648
    %v379 = vsel %vm258, %v378, %v377
    %v380 = vsub.s32 4, %v356
    %v381 = vsel %vm258, %v380, %v356
    %v382 = vsel %vm257, %v98, %v379
    %v383 = vsel %vm257, 0, %v381
    %v384 = vmul.f32 %v382, %v382
    %v385 = vmul.f32 %v384, -0.001358992
    %v386 = vadd.f32 %v385, 0.041655596
    %v387 = vmul.f32 %v384, %v386
    %v388 = vadd.f32 %v387, -0.4999988
    %v389 = vmul.f32 %v384, %v388
    %v390 = vadd.f32 1.0, %v389
    %v391 = vmul.f32 %v382, %v382
    %v392 = vmul.f32 %v391, -0.00019511016
    %v393 = vadd.f32 %v392, 0.008332121
    %v394 = vmul.f32 %v391, %v393
    %v395 = vadd.f32 %v394, -0.16666654
    %v396 = vmul.f32 %v391, %v395
    %v397 = vadd.f32 %v396, 1.0
    %v398 = vmul.f32 %v397, %v382
    %vm399 = vweird.f32 %v98
    %v400 = vadd.s32 %v383, 3
    %v401 = vand.u32 %v400, 3
    %vm402 = vcmp.lt.s32.totalorder %v401, 2
    %vm403 = vcmp.eq.s32.totalorder %v401, 0
    %v404 = vxor.u32 %v398, 2147483648
    %v405 = vsel %vm403, %v390, %v404
    %vm406 = vcmp.eq.s32.totalorder %v401, 2
    %v407 = vxor.u32 %v390, 2147483648
    %v408 = vsel %vm406, %v407, %v398
    %v409 = vsel %vm402, %v405, %v408
    %v410 = vsel %vm399, nan, %v409
    %v411 = vand.u32 2147483647, %v97
    %vm412 = vcmp.le.f32.partialorder %v411, 0.7853982
    %vm413 = vcmp.lt.s32.totalorder %v97, 0
    %v414 = vand.u32 %v97, 2139095040
    %v415 = vshrl.u32 %v414, 23
    %v416 = vsub.s32 %v415, 127
    %v417 = vand.u32 2147483647, %v97
    %v418 = vand.u32 %v417, 8388607
    %v419 = vor.u32 %v418, 8388608
    %v420 = vsub.s32 0, %v419
    %v421 = vadd.s32 %v416, 1
    %vm422 = vcmp.gt.s32.totalorder %v421, 0
    %v423 = vsel %vm422, %v421, 0
    %v424 = vshrl.u32 %v423, 5
    %v425 = vand.u32 %v423, 31
    %v426 = vsub.s32 32, %v425
    %v427 = vshrl.u32 683565275, %v426
    %v428 = vshll.u32 683565275, %v425
    %v429 = vshrl.u32 2475754826, %v426
    %v430 = vor.u32 %v428, %v429
    %v431 = vshll.u32 2475754826, %v425
    %v432 = vshrl.u32 2131351028, %v426
    %v433 = vor.u32 %v431, %v432
    %v434 = vshll.u32 2131351028, %v425
    %v435 = vshrl.u32 2102212464, %v426
    %v436 = vor.u32 %v434, %v435
    %v437 = vshll.u32 2102212464, %v425
    %v438 = vshrl.u32 920167782, %v426
    %v439 = vor.u32 %v437, %v438
    %v440 = vshll.u32 920167782, %v425
    %v441 = vshrl.u32 1326507024, %v426
    %v442 = vor.u32 %v440, %v441
    %vm443 = vcmp.lt.s32.totalorder %v424, 1
    %vm444 = vcmp.lt.s32.totalorder %v424, 2
    %vm445 = vcmp.lt.s32.totalorder %v424, 3
    %vm446 = vcmp.lt.s32.totalorder %v424, 4
    %v447 = vsel %vm443, %v427, %v430
    %v448 = vsel %vm446, %v436, 2102212464
    %v449 = vsel %vm445, %v433, %v448
    %v450 = vsel %vm444, %v447, %v449
    %v451 = vsel %vm443, %v430, %v433
    %v452 = vsel %vm446, %v439, 920167782
    %v453 = vsel %vm445, %v436, %v452
    %v454 = vsel %vm444, %v451, %v453
    %v455 = vsel %vm443, %v433, %v436
    %v456 = vsel %vm446, %v442, 1326507024
    %v457 = vsel %vm445, %v439, %v456
    %v458 = vsel %vm444, %v455, %v457
    %v459 = vshll.u32 %v419, 8
    %v460 = vand.u32 %v459, 65535
    %v461 = vshrl.u32 %v459, 16
    %v462 = vand.u32 %v458, 65535
    %v463 = vshrl.u32 %v458, 16
    %v464 = vmul.u32 %v460, %v462
    %v465 = vmul.u32 %v460, %v463
    %v466 = vmul.u32 %v461, %v462
    %v467 = vmul.u32 %v461, %v463
    %v468 = vshll.u32 %v465, 16
    %v469 = vshrl.u32 %v465, 16
    %v470 = vshll.u32 %v466, 16
    %v471 = vshrl.u32 %v466, 16
    %vm472 = vc.u32 %v464, %v468
    %v473 = vsel %vm472, 1, 0
    %v474 = vadd.s32 %v464, %v468
    %v475 = vadd.s32 %v467, %v473
    %vm476 = vc.u32 %v474, %v470
    %v477 = vsel %vm476, 1, 0
    %v478 = vadd.s32 %v474, %v470
    %v479 = vadd.s32 %v475, %v477
    %v480 = vadd.s32 %v479, %v469
    %v481 = vadd.s32 %v480, %v471
    %v482 = vand.u32 %v459, 65535
    %v483 = vshrl.u32 %v459, 16
    %v484 = vand.u32 %v454, 65535
    %v485 = vshrl.u32 %v454, 16
    %v486 = vmul.u32 %v482, %v484
    %v487 = vmul.u32 %v482, %v485
    %v488 = vmul.u32 %v483, %v484
    %v489 = vmul.u32 %v483, %v485
    %v490 = vshll.u32 %v487, 16
    %v491 = vshrl.u32 %v487, 16
    %v492 = vshll.u32 %v488, 16
    %v493 = vshrl.u32 %v488, 16
    %vm494 = vc.u32 %v486, %v490
    %v495 = vsel %vm494, 1, 0
    %v496 = vadd.s32 %v486, %v490
    %v497 = vadd.s32 %v489, %v495
    %vm498 = vc.u32 %v496, %v492
    %v499 = vsel %vm498, 1, 0
    %v500 = vadd.s32 %v496, %v492
    %v501 = vadd.s32 %v497, %v499
    %v502 = vadd.s32 %v501, %v491
    %v503 = vadd.s32 %v502, %v493
    %v504 = vmul.u32 %v459, %v450
    %v505 = vadd.s32 %v481, %v500
    %vm506 = vc.u32 %v481, %v500
    %v507 = vadd.s32 %v503, 1
    %v508 = vsel %vm506, %v507, %v503
    %v509 = vadd.s32 %v504, %v508
    %v510 = vadd.s32 %v509, 536870912
    %v511 = vshrl.u32 %v510, 30
    %v512 = vshll.u32 %v511, 30
    %v513 = vsub.s32 %v509, %v512
    %vm514 = vcmp.lt.s32.totalorder %v513, 0
    %v515 = vsub.s32 0, %v513
    %v516 = vsel %vm514, %v515, %v513
    %v517 = vclz %v516
    %v518 = vsub.s32 %v517, 2
    %vm519 = vcmp.gt.s32.totalorder 0, %v518
    %v520 = vsel %vm519, 0, %v518
    %v521 = vsub.s32 32, %v520
    %v522 = vshll.u32 %v513, %v520
    %v523 = vshrl.u32 %v505, %v521
    %v524 = vor.u32 %v522, %v523
    %v525 = vsub.s32 4294967266, %v520
    %v526 = vadd.s32 %v525, 127
    %v527 = vshll.u32 %v526, 23
    %v528 = vor.u32 4788187, %v527
    %v529 = vand.u32 2147483647, %v528
    %v531 = vcvt.s32.f32 %v524
    %v532 = vmul.f32 %v531, %v529
    %v533 = vxor.u32 %v532, 2147483648
    %v534 = vsel %vm413, %v533, %v532
    %v535 = vsub.s32 4, %v511
    %v536 = vsel %vm413, %v535, %v511
    %v537 = vsel %vm412, %v97, %v534
    %v538 = vsel %vm412, 0, %v536
    %v539 = vmul.f32 %v537, %v537
    %v540 = vmul.f32 %v539, -0.001358992
    %v541 = vadd.f32 %v540, 0.041655596
    %v542 = vmul.f32 %v539, %v541
    %v543 = vadd.f32 %v542, -0.4999988
    %v544 = vmul.f32 %v539, %v543
    %v545 = vadd.f32 1.0, %v544
    %v546 = vmul.f32 %v537, %v537
    %v547 = vmul.f32 %v546, -0.00019511016
    %v548 = vadd.f32 %v547, 0.008332121
    %v549 = vmul.f32 %v546, %v548
    %v550 = vadd.f32 %v549, -0.16666654
    %v551 = vmul.f32 %v546, %v550
    %v552 = vadd.f32 %v551, 1.0
    %v553 = vmul.f32 %v552, %v537
    %vm554 = vweird.f32 %v97
    %v555 = vand.u32 %v538, 3
    %vm556 = vcmp.lt.s32.totalorder %v555, 2
    %vm557 = vcmp.eq.s32.totalorder %v555, 0
    %v558 = vxor.u32 %v553, 2147483648
    %v559 = vsel %vm557, %v545, %v558
    %vm560 = vcmp.eq.s32.totalorder %v555, 2
    %v561 = vxor.u32 %v545, 2147483648
    %v562 = vsel %vm560, %v561, %v553
    %v563 = vsel %vm556, %v559, %v562
    %v564 = vsel %vm554, nan, %v563
    %v565 = vand.u32 2147483647, %v98
    %vm566 = vcmp.le.f32.partialorder %v565, 0.7853982
    %vm567 = vcmp.lt.s32.totalorder %v98, 0
    %v568 = vand.u32 %v98, 2139095040
    %v569 = vshrl.u32 %v568, 23
    %v570 = vsub.s32 %v569, 127
    %v571 = vand.u32 2147483647, %v98
    %v572 = vand.u32 %v571, 8388607
    %v573 = vor.u32 %v572, 8388608
    %v574 = vsub.s32 0, %v573
    %v575 = vadd.s32 %v570, 1
    %vm576 = vcmp.gt.s32.totalorder %v575, 0
    %v577 = vsel %vm576, %v575, 0
    %v578 = vshrl.u32 %v577, 5
    %v579 = vand.u32 %v577, 31
    %v580 = vsub.s32 32, %v579
    %v581 = vshrl.u32 683565275, %v580
    %v582 = vshll.u32 683565275, %v579
    %v583 = vshrl.u32 2475754826, %v580
    %v584 = vor.u32 %v582, %v583
    %v585 = vshll.u32 2475754826, %v579
    %v586 = vshrl.u32 2131351028, %v580
    %v587 = vor.u32 %v585, %v586
    %v588 = vshll.u32 2131351028, %v579
    %v589 = vshrl.u32 2102212464, %v580
    %v590 = vor.u32 %v588, %v589
    %v591 = vshll.u32 2102212464, %v579
    %v592 = vshrl.u32 920167782, %v580
    %v593 = vor.u32 %v591, %v592
    %v594 = vshll.u32 920167782, %v579
    %v595 = vshrl.u32 1326507024, %v580
    %v596 = vor.u32 %v594, %v595
    %vm597 = vcmp.lt.s32.totalorder %v578, 1
    %vm598 = vcmp.lt.s32.totalorder %v578, 2
    %vm599 = vcmp.lt.s32.totalorder %v578, 3
    %vm600 = vcmp.lt.s32.totalorder %v578, 4
    %v601 = vsel %vm597, %v581, %v584
    %v602 = vsel %vm600, %v590, 2102212464
    %v603 = vsel %vm599, %v587, %v602
    %v604 = vsel %vm598, %v601, %v603
    %v605 = vsel %vm597, %v584, %v587
    %v606 = vsel %vm600, %v593, 920167782
    %v607 = vsel %vm599, %v590, %v606
    %v608 = vsel %vm598, %v605, %v607
    %v609 = vsel %vm597, %v587, %v590
    %v610 = vsel %vm600, %v596, 1326507024
    %v611 = vsel %vm599, %v593, %v610
    %v612 = vsel %vm598, %v609, %v611
    %v613 = vshll.u32 %v573, 8
    %v614 = vand.u32 %v613, 65535
    %v615 = vshrl.u32 %v613, 16
    %v616 = vand.u32 %v612, 65535
    %v617 = vshrl.u32 %v612, 16
    %v618 = vmul.u32 %v614, %v616
    %v619 = vmul.u32 %v614, %v617
    %v620 = vmul.u32 %v615, %v616
    %v621 = vmul.u32 %v615, %v617
    %v622 = vshll.u32 %v619, 16
    %v623 = vshrl.u32 %v619, 16
    %v624 = vshll.u32 %v620, 16
    %v625 = vshrl.u32 %v620, 16
    %vm626 = vc.u32 %v618, %v622
    %v627 = vsel %vm626, 1, 0
    %v628 = vadd.s32 %v618, %v622
    %v629 = vadd.s32 %v621, %v627
    %vm630 = vc.u32 %v628, %v624
    %v631 = vsel %vm630, 1, 0
    %v632 = vadd.s32 %v628, %v624
    %v633 = vadd.s32 %v629, %v631
    %v634 = vadd.s32 %v633, %v623
    %v635 = vadd.s32 %v634, %v625
    %v636 = vand.u32 %v613, 65535
    %v637 = vshrl.u32 %v613, 16
    %v638 = vand.u32 %v608, 65535
    %v639 = vshrl.u32 %v608, 16
    %v640 = vmul.u32 %v636, %v638
    %v641 = vmul.u32 %v636, %v639
    %v642 = vmul.u32 %v637, %v638
    %v643 = vmul.u32 %v637, %v639
    %v644 = vshll.u32 %v641, 16
    %v645 = vshrl.u32 %v641, 16
    %v646 = vshll.u32 %v642, 16
    %v647 = vshrl.u32 %v642, 16
    %vm648 = vc.u32 %v640, %v644
    %v649 = vsel %vm648, 1, 0
    %v650 = vadd.s32 %v640, %v644
    %v651 = vadd.s32 %v643, %v649
    %vm652 = vc.u32 %v650, %v646
    %v653 = vsel %vm652, 1, 0
    %v654 = vadd.s32 %v650, %v646
    %v655 = vadd.s32 %v651, %v653
    %v656 = vadd.s32 %v655, %v645
    %v657 = vadd.s32 %v656, %v647
    %v658 = vmul.u32 %v613, %v604
    %v659 = vadd.s32 %v635, %v654
    %vm660 = vc.u32 %v635, %v654
    %v661 = vadd.s32 %v657, 1
    %v662 = vsel %vm660, %v661, %v657
    %v663 = vadd.s32 %v658, %v662
    %v664 = vadd.s32 %v663, 536870912
    %v665 = vshrl.u32 %v664, 30
    %v666 = vshll.u32 %v665, 30
    %v667 = vsub.s32 %v663, %v666
    %vm668 = vcmp.lt.s32.totalorder %v667, 0
    %v669 = vsub.s32 0, %v667
    %v670 = vsel %vm668, %v669, %v667
    %v671 = vclz %v670
    %v672 = vsub.s32 %v671, 2
    %vm673 = vcmp.gt.s32.totalorder 0, %v672
    %v674 = vsel %vm673, 0, %v672
    %v675 = vsub.s32 32, %v674
    %v676 = vshll.u32 %v667, %v674
    %v677 = vshrl.u32 %v659, %v675
    %v678 = vor.u32 %v676, %v677
    %v679 = vsub.s32 4294967266, %v674
    %v680 = vadd.s32 %v679, 127
    %v681 = vshll.u32 %v680, 23
    %v682 = vor.u32 4788187, %v681
    %v683 = vand.u32 2147483647, %v682
    %v685 = vcvt.s32.f32 %v678
    %v686 = vmul.f32 %v685, %v683
    %v687 = vxor.u32 %v686, 2147483648
    %v688 = vsel %vm567, %v687, %v686
    %v689 = vsub.s32 4, %v665
    %v690 = vsel %vm567, %v689, %v665
    %v691 = vsel %vm566, %v98, %v688
    %v692 = vsel %vm566, 0, %v690
    %v693 = vmul.f32 %v691, %v691
    %v694 = vmul.f32 %v693, -0.001358992
    %v695 = vadd.f32 %v694, 0.041655596
    %v696 = vmul.f32 %v693, %v695
    %v697 = vadd.f32 %v696, -0.4999988
    %v698 = vmul.f32 %v693, %v697
    %v699 = vadd.f32 1.0, %v698
    %v700 = vmul.f32 %v691, %v691
    %v701 = vmul.f32 %v700, -0.00019511016
    %v702 = vadd.f32 %v701, 0.008332121
    %v703 = vmul.f32 %v700, %v702
    %v704 = vadd.f32 %v703, -0.16666654
    %v705 = vmul.f32 %v700, %v704
    %v706 = vadd.f32 %v705, 1.0
    %v707 = vmul.f32 %v706, %v691
    %vm708 = vweird.f32 %v98
    %v709 = vand.u32 %v692, 3
    %vm710 = vcmp.lt.s32.totalorder %v709, 2
    %vm711 = vcmp.eq.s32.totalorder %v709, 0
    %v712 = vxor.u32 %v707, 2147483648
    %v713 = vsel %vm711, %v699, %v712
    %vm714 = vcmp.eq.s32.totalorder %v709, 2
    %v715 = vxor.u32 %v699, 2147483648
    %v716 = vsel %vm714, %v715, %v707
    %v717 = vsel %vm710, %v713, %v716
    %v718 = vsel %vm708, nan, %v717
    %721 = vrot.lane.b32.xlu0 %v255, 4
    %v722 = vpop.permute.xlu0 %721
    %723 = vrot.lane.b32.xlu0 %v410, 4
    %v724 = vpop.permute.xlu0 %723
    %729 = vrot.lane.b32.xlu0 %v564, 12
    %v730 = vpop.permute.xlu0 %729
    %731 = vrot.lane.b32.xlu0 %v718, 12
    %v732 = vpop.permute.xlu0 %731
    %vm735 = vcmask 31744
    %v736 = vsel %vm735, %v99, %v722
    %v737 = vsel %vm735, %v100, %v724
    %vm738 = vcmask 97280
    %v739 = vsel %vm738, %v736, %v730
    %v740 = vsel %vm738, %v737, %v732
    %v741 = vld [vmem:[%s2] sm:$0xff]
    %v742 = vld [vmem:[%s2 + $0x8] sm:$0xff]
    %v743 = vld [vmem:[%s17] sm:$0x7]
    %v744 = vld [vmem:[%s18] sm:$0x7]
    %v745 = vld [vmem:[%s5] sm:$0xff]
    %v746 = vld [vmem:[%s5 + $0x8] sm:$0xff]
    %v747 = vld [vmem:[%s5 + $0x10] sm:$0xff]
    %v748 = vld [vmem:[%s5 + $0x18] sm:$0xff]
    %v749 = vld [vmem:[%s5 + $0x20] sm:$0xff]
    %v750 = vld [vmem:[%s5 + $0x28] sm:$0xff]
    %v751 = vld [vmem:[%s5 + $0x30] sm:$0xff]
    %v752 = vld [vmem:[%s5 + $0x38] sm:$0xf]
    %v753 = vld [vmem:[%s6] sm:$0x1]
    %v755 = vperm.slane %v753, 0
    %vm757 = vcmask 162816
    %v759 = vsel %vm757, %v739, 0
    %v762 = vsel %vm757, %v740, 0
    %v765 = vsel %vm757, %v745, 0
    %v768 = vsel %vm757, %v746, 0
    %v771 = vsel %vm757, %v747, 0
    %v774 = vsel %vm757, %v748, 0
    %v777 = vsel %vm757, %v749, 0
    %v780 = vsel %vm757, %v750, 0
    %v783 = vsel %vm757, %v751, 0
    %v786 = vsel %vm757, %v752, 0
    %788 = vmatpush.xpose.msra.mxu0 0.0
    %789 = vmatpush.xpose.msra.mxu0 0.0
    %790 = vmatpush.xpose.msra.mxu0 0.0
    %791 = vmatpush.xpose.msra.mxu0 0.0
    %792 = vmatpush.xpose.msra.mxu0 0.0
    %793 = vmatpush.xpose.msra.mxu0 0.0
    %794 = vmatpush.xpose.msra.mxu0 0.0
    %795 = vmatpush.xpose.msra.mxu0 0.0
    %796 = vmatpush.xpose.msra.mxu0 %v786
    %797 = vmatpush.xpose.msra.mxu0 %v783
    %798 = vmatpush.xpose.msra.mxu0 %v780
    %799 = vmatpush.xpose.msra.mxu0 %v777
    %800 = vmatpush.xpose.msra.mxu0 %v774
    %801 = vmatpush.xpose.msra.mxu0 %v771
    %802 = vmatpush.xpose.msra.mxu0 %v768
    %803 = vmatpush.xpose.msra.mxu0 %v765
    %804 = vmatmul.f32.gmra.mxu0 %v759
    %v805 = vpop.f32.mrf.mxu0
    %v806 = vadd.f32 %v755, %v805
    %807 = vmatmul.f32.gmra.mxu0 %v762
    %v808 = vpop.f32.mrf.mxu0
    %v809 = vadd.f32 %v755, %v808
    %810 = vdwg.mxu0
    %v813 = vrot.slane %v806, 1
    %v814 = vrot.slane %v806, 2
    %v815 = vrot.slane %v806, 3
    %v816 = vrot.slane %v806, 4
    %v817 = vrot.slane %v806, 5
    %v818 = vrot.slane %v806, 6
    %v819 = vrot.slane %v806, 7
    %v820 = vrot.slane %v809, 1
    %v821 = vrot.slane %v809, 2
    %v822 = vrot.slane %v809, 3
    %v823 = vrot.slane %v809, 4
    %v824 = vrot.slane %v809, 5
    %v825 = vrot.slane %v809, 6
    %v826 = vrot.slane %v809, 7
    %v827 = vperm.slane %v806, 0
    %v828 = vperm.slane %v813, 0
    %v829 = vperm.slane %v814, 0
    %v830 = vperm.slane %v815, 0
    %v831 = vperm.slane %v816, 0
    %v832 = vperm.slane %v817, 0
    %v833 = vperm.slane %v818, 0
    %v834 = vperm.slane %v819, 0
    %v835 = vperm.slane %v809, 0
    %v836 = vperm.slane %v820, 0
    %v837 = vperm.slane %v821, 0
    %v838 = vperm.slane %v822, 0
    %v839 = vperm.slane %v823, 0
    %v840 = vperm.slane %v824, 0
    %v841 = vperm.slane %v825, 0
    %v842 = vperm.slane %v826, 0
    %859 = vrot.lane.b32.xlu0 %v806, 108
    %v860 = vpop.permute.xlu0 %859
    %861 = vrot.lane.b32.xlu0 %v809, 108
    %v862 = vpop.permute.xlu0 %861
    %v865 = vmul.f32 %v827, %v860
    %v866 = vmul.f32 %v828, %v860
    %v867 = vmul.f32 %v829, %v860
    %v868 = vmul.f32 %v830, %v860
    %v869 = vmul.f32 %v831, %v860
    %v870 = vmul.f32 %v832, %v860
    %v871 = vmul.f32 %v833, %v860
    %v872 = vmul.f32 %v834, %v860
    %v873 = vmul.f32 %v835, %v862
    %v874 = vmul.f32 %v836, %v862
    %v875 = vmul.f32 %v837, %v862
    %v876 = vmul.f32 %v838, %v862
    %v877 = vmul.f32 %v839, %v862
    %v878 = vmul.f32 %v840, %v862
    %v879 = vmul.f32 %v841, %v862
    %v880 = vmul.f32 %v842, %v862
    %v881 = vsel %vm757, %v865, 0.0
    %882 = vadd.xlane.f32.xlu0 %v881
    %v883 = vpop.xlane.xlu0 %882
    %v884 = vsel %vm757, %v866, 0.0
    %885 = vadd.xlane.f32.xlu0 %v884
    %v886 = vpop.xlane.xlu0 %885
    %v887 = vsel %vm757, %v867, 0.0
    %888 = vadd.xlane.f32.xlu0 %v887
    %v889 = vpop.xlane.xlu0 %888
    %v890 = vsel %vm757, %v868, 0.0
    %891 = vadd.xlane.f32.xlu0 %v890
    %v892 = vpop.xlane.xlu0 %891
    %v893 = vsel %vm757, %v869, 0.0
    %894 = vadd.xlane.f32.xlu0 %v893
    %v895 = vpop.xlane.xlu0 %894
    %v896 = vsel %vm757, %v870, 0.0
    %897 = vadd.xlane.f32.xlu0 %v896
    %v898 = vpop.xlane.xlu0 %897
    %v899 = vsel %vm757, %v871, 0.0
    %900 = vadd.xlane.f32.xlu0 %v899
    %v901 = vpop.xlane.xlu0 %900
    %v902 = vsel %vm757, %v872, 0.0
    %903 = vadd.xlane.f32.xlu0 %v902
    %v904 = vpop.xlane.xlu0 %903
    %v905 = vsel %vm757, %v873, 0.0
    %906 = vadd.xlane.f32.xlu0 %v905
    %v907 = vpop.xlane.xlu0 %906
    %v908 = vsel %vm757, %v874, 0.0
    %909 = vadd.xlane.f32.xlu0 %v908
    %v910 = vpop.xlane.xlu0 %909
    %v911 = vsel %vm757, %v875, 0.0
    %912 = vadd.xlane.f32.xlu0 %v911
    %v913 = vpop.xlane.xlu0 %912
    %v914 = vsel %vm757, %v876, 0.0
    %915 = vadd.xlane.f32.xlu0 %v914
    %v916 = vpop.xlane.xlu0 %915
    %v917 = vsel %vm757, %v877, 0.0
    %918 = vadd.xlane.f32.xlu0 %v917
    %v919 = vpop.xlane.xlu0 %918
    %v920 = vsel %vm757, %v878, 0.0
    %921 = vadd.xlane.f32.xlu0 %v920
    %v922 = vpop.xlane.xlu0 %921
    %v923 = vsel %vm757, %v879, 0.0
    %924 = vadd.xlane.f32.xlu0 %v923
    %v925 = vpop.xlane.xlu0 %924
    %v926 = vsel %vm757, %v880, 0.0
    %927 = vadd.xlane.f32.xlu0 %v926
    %v928 = vpop.xlane.xlu0 %927
    %v929 = vmul.f32 %v883, 0.2236068
    %v930 = vmul.f32 %v886, 0.2236068
    %v931 = vmul.f32 %v889, 0.2236068
    %v932 = vmul.f32 %v892, 0.2236068
    %v933 = vmul.f32 %v895, 0.2236068
    %v934 = vmul.f32 %v898, 0.2236068
    %v935 = vmul.f32 %v901, 0.2236068
    %v936 = vmul.f32 %v904, 0.2236068
    %v937 = vmul.f32 %v907, 0.2236068
    %v938 = vmul.f32 %v910, 0.2236068
    %v939 = vmul.f32 %v913, 0.2236068
    %v940 = vmul.f32 %v916, 0.2236068
    %v941 = vmul.f32 %v919, 0.2236068
    %v942 = vmul.f32 %v922, 0.2236068
    %v943 = vmul.f32 %v925, 0.2236068
    %v944 = vmul.f32 %v928, 0.2236068
    %v961 = vlaneseq
    %v962 = vand.u32 %v961, 127
    %v963 = vperm.slane %v929, %v962
    %v964 = vperm.slane %v930, %v962
    %v965 = vperm.slane %v931, %v962
    %v966 = vperm.slane %v932, %v962
    %v967 = vperm.slane %v933, %v962
    %v968 = vperm.slane %v934, %v962
    %v969 = vperm.slane %v935, %v962
    %v970 = vperm.slane %v936, %v962
    %v971 = vperm.slane %v937, %v962
    %v972 = vperm.slane %v938, %v962
    %v973 = vperm.slane %v939, %v962
    %v974 = vperm.slane %v940, %v962
    %v975 = vperm.slane %v941, %v962
    %v976 = vperm.slane %v942, %v962
    %v977 = vperm.slane %v943, %v962
    %v978 = vperm.slane %v944, %v962
    %vm979 = vcmask 1041409
    %v980 = vsel %vm979, %v964, %v963
    %vm981 = vcmask 1042434
    %v982 = vsel %vm981, %v965, %v980
    %vm983 = vcmask 1043459
    %v984 = vsel %vm983, %v966, %v982
    %vm985 = vcmask 1044484
    %v986 = vsel %vm985, %v967, %v984
    %vm987 = vcmask 1045509
    %v988 = vsel %vm987, %v968, %v986
    %vm989 = vcmask 1046534
    %v990 = vsel %vm989, %v969, %v988
    %vm991 = vcmask 1047559
    %v992 = vsel %vm991, %v970, %v990
    %v993 = vsel %vm979, %v972, %v971
    %v994 = vsel %vm981, %v973, %v993
    %v995 = vsel %vm983, %v974, %v994
    %v996 = vsel %vm985, %v975, %v995
    %v997 = vsel %vm987, %v976, %v996
    %v998 = vsel %vm989, %v977, %v997
    %v999 = vsel %vm991, %v978, %v998
    %vm1002 = vcmask 64512
    %v1003 = vsel %vm1002, %v992, -inf
    %1004 = vmax.xlane.f32.xlu0 %v1003
    %v1005 = vpop.xlane.xlu0 %1004
    %v1006 = vsel %vm1002, %v999, -inf
    %1007 = vmax.xlane.f32.xlu0 %v1006
    %v1008 = vpop.xlane.xlu0 %1007
    %v1011 = vperm.slane %v1005, 0
    %v1012 = vperm.slane %v1005, 1
    %v1013 = vperm.slane %v1005, 2
    %v1014 = vperm.slane %v1005, 3
    %v1015 = vperm.slane %v1005, 4
    %v1016 = vperm.slane %v1005, 5
    %v1017 = vperm.slane %v1005, 6
    %v1018 = vperm.slane %v1005, 7
    %v1019 = vperm.slane %v1008, 0
    %v1020 = vperm.slane %v1008, 1
    %v1021 = vperm.slane %v1008, 2
    %v1022 = vperm.slane %v1008, 3
    %v1023 = vperm.slane %v1008, 4
    %v1024 = vperm.slane %v1008, 5
    %v1025 = vperm.slane %v1008, 6
    %v1026 = vperm.slane %v1008, 7
    %v1043 = vsub.f32 %v929, %v1011
    %v1044 = vsub.f32 %v930, %v1012
    %v1045 = vsub.f32 %v931, %v1013
    %v1046 = vsub.f32 %v932, %v1014
    %v1047 = vsub.f32 %v933, %v1015
    %v1048 = vsub.f32 %v934, %v1016
    %v1049 = vsub.f32 %v935, %v1017
    %v1050 = vsub.f32 %v936, %v1018
    %v1051 = vsub.f32 %v937, %v1019
    %v1052 = vsub.f32 %v938, %v1020
    %v1053 = vsub.f32 %v939, %v1021
    %v1054 = vsub.f32 %v940, %v1022
    %v1055 = vsub.f32 %v941, %v1023
    %v1056 = vsub.f32 %v942, %v1024
    %v1057 = vsub.f32 %v943, %v1025
    %v1058 = vsub.f32 %v944, %v1026
    %v1059 = vmul.f32 %v1043, 1.442695
    %v1060 = vpow.pop %v1059
    %v1061 = vmul.f32 %v1044, 1.442695
    %v1062 = vpow.pop %v1061
    %v1063 = vmul.f32 %v1045, 1.442695
    %v1064 = vpow.pop %v1063
    %v1065 = vmul.f32 %v1046, 1.442695
    %v1066 = vpow.pop %v1065
    %v1067 = vmul.f32 %v1047, 1.442695
    %v1068 = vpow.pop %v1067
    %v1069 = vmul.f32 %v1048, 1.442695
    %v1070 = vpow.pop %v1069
    %v1071 = vmul.f32 %v1049, 1.442695
    %v1072 = vpow.pop %v1071
    %v1073 = vmul.f32 %v1050, 1.442695
    %v1074 = vpow.pop %v1073
    %v1075 = vmul.f32 %v1051, 1.442695
    %v1076 = vpow.pop %v1075
    %v1077 = vmul.f32 %v1052, 1.442695
    %v1078 = vpow.pop %v1077
    %v1079 = vmul.f32 %v1053, 1.442695
    %v1080 = vpow.pop %v1079
    %v1081 = vmul.f32 %v1054, 1.442695
    %v1082 = vpow.pop %v1081
    %v1083 = vmul.f32 %v1055, 1.442695
    %v1084 = vpow.pop %v1083
    %v1085 = vmul.f32 %v1056, 1.442695
    %v1086 = vpow.pop %v1085
    %v1087 = vmul.f32 %v1057, 1.442695
    %v1088 = vpow.pop %v1087
    %v1089 = vmul.f32 %v1058, 1.442695
    %v1090 = vpow.pop %v1089
    %1107 = vset.pattern.permute.xlu0 0
    %1108 = vperm.xlu0 %1107, %v1060
    %v1109 = vpop.permute.xlu0 %1108
    %1110 = vset.pattern.permute.xlu0 0
    %1111 = vperm.xlu0 %1110, %v1062
    %v1112 = vpop.permute.xlu0 %1111
    %1113 = vset.pattern.permute.xlu0 0
    %1114 = vperm.xlu0 %1113, %v1064
    %v1115 = vpop.permute.xlu0 %1114
    %1116 = vset.pattern.permute.xlu0 0
    %1117 = vperm.xlu0 %1116, %v1066
    %v1118 = vpop.permute.xlu0 %1117
    %1119 = vset.pattern.permute.xlu0 0
    %1120 = vperm.xlu0 %1119, %v1068
    %v1121 = vpop.permute.xlu0 %1120
    %1122 = vset.pattern.permute.xlu0 0
    %1123 = vperm.xlu0 %1122, %v1070
    %v1124 = vpop.permute.xlu0 %1123
    %1125 = vset.pattern.permute.xlu0 0
    %1126 = vperm.xlu0 %1125, %v1072
    %v1127 = vpop.permute.xlu0 %1126
    %1128 = vset.pattern.permute.xlu0 0
    %1129 = vperm.xlu0 %1128, %v1074
    %v1130 = vpop.permute.xlu0 %1129
    %1131 = vset.pattern.permute.xlu0 0
    %1132 = vperm.xlu0 %1131, %v1076
    %v1133 = vpop.permute.xlu0 %1132
    %1134 = vset.pattern.permute.xlu0 0
    %1135 = vperm.xlu0 %1134, %v1078
    %v1136 = vpop.permute.xlu0 %1135
    %1137 = vset.pattern.permute.xlu0 0
    %1138 = vperm.xlu0 %1137, %v1080
    %v1139 = vpop.permute.xlu0 %1138
    %1140 = vset.pattern.permute.xlu0 0
    %1141 = vperm.xlu0 %1140, %v1082
    %v1142 = vpop.permute.xlu0 %1141
    %1143 = vset.pattern.permute.xlu0 0
    %1144 = vperm.xlu0 %1143, %v1084
    %v1145 = vpop.permute.xlu0 %1144
    %1146 = vset.pattern.permute.xlu0 0
    %1147 = vperm.xlu0 %1146, %v1086
    %v1148 = vpop.permute.xlu0 %1147
    %1149 = vset.pattern.permute.xlu0 0
    %1150 = vperm.xlu0 %1149, %v1088
    %v1151 = vpop.permute.xlu0 %1150
    %1152 = vset.pattern.permute.xlu0 0
    %1153 = vperm.xlu0 %1152, %v1090
    %v1154 = vpop.permute.xlu0 %1153
    %v1155 = vperm.slane %v1109, %v962
    %v1156 = vperm.slane %v1112, %v962
    %v1157 = vperm.slane %v1115, %v962
    %v1158 = vperm.slane %v1118, %v962
    %v1159 = vperm.slane %v1121, %v962
    %v1160 = vperm.slane %v1124, %v962
    %v1161 = vperm.slane %v1127, %v962
    %v1162 = vperm.slane %v1130, %v962
    %v1163 = vperm.slane %v1133, %v962
    %v1164 = vperm.slane %v1136, %v962
    %v1165 = vperm.slane %v1139, %v962
    %v1166 = vperm.slane %v1142, %v962
    %v1167 = vperm.slane %v1145, %v962
    %v1168 = vperm.slane %v1148, %v962
    %v1169 = vperm.slane %v1151, %v962
    %v1170 = vperm.slane %v1154, %v962
    %v1171 = vsel %vm979, %v1156, %v1155
    %v1172 = vsel %vm981, %v1157, %v1171
    %v1173 = vsel %vm983, %v1158, %v1172
    %v1174 = vsel %vm985, %v1159, %v1173
    %v1175 = vsel %vm987, %v1160, %v1174
    %v1176 = vsel %vm989, %v1161, %v1175
    %v1177 = vsel %vm991, %v1162, %v1176
    %v1178 = vsel %vm979, %v1164, %v1163
    %v1179 = vsel %vm981, %v1165, %v1178
    %v1180 = vsel %vm983, %v1166, %v1179
    %v1181 = vsel %vm985, %v1167, %v1180
    %v1182 = vsel %vm987, %v1168, %v1181
    %v1183 = vsel %vm989, %v1169, %v1182
    %v1184 = vsel %vm991, %v1170, %v1183
    %v1187 = vsel %vm1002, %v1177, 0.0
    %1188 = vadd.xlane.f32.xlu0 %v1187
    %v1189 = vpop.xlane.xlu0 %1188
    %v1190 = vsel %vm1002, %v1184, 0.0
    %1191 = vadd.xlane.f32.xlu0 %v1190
    %v1192 = vpop.xlane.xlu0 %1191
    %v1195 = vperm.slane %v1189, 0
    %v1196 = vperm.slane %v1189, 1
    %v1197 = vperm.slane %v1189, 2
    %v1198 = vperm.slane %v1189, 3
    %v1199 = vperm.slane %v1189, 4
    %v1200 = vperm.slane %v1189, 5
    %v1201 = vperm.slane %v1189, 6
    %v1202 = vperm.slane %v1189, 7
    %v1203 = vperm.slane %v1192, 0
    %v1204 = vperm.slane %v1192, 1
    %v1205 = vperm.slane %v1192, 2
    %v1206 = vperm.slane %v1192, 3
    %v1207 = vperm.slane %v1192, 4
    %v1208 = vperm.slane %v1192, 5
    %v1209 = vperm.slane %v1192, 6
    %v1210 = vperm.slane %v1192, 7
    %v1227 = vrcp.pop %v1195
    %v1228 = vmul.f32 %v1195, %v1227
    %v1229 = vsub.f32 1.0, %v1228
    %v1230 = vmul.f32 %v1227, %v1229
    %v1231 = vadd.f32 %v1227, %v1230
    %vm1232 = vweird.f32 %v1195
    %vm1233 = vweird.f32 %v1227
    %vm1234 = vmor %vm1232, %vm1233
    %v1235 = vsel %vm1234, %v1227, %v1231
    %v1236 = vand.u32 2147483647, %v1195
    %vm1237 = vcmp.eq.f32.partialorder %v1236, 8.507059e+37
    %v1238 = vand.u32 %v1195, 2147483648
    %v1239 = vor.u32 1.1754944e-38, %v1238
    %v1240 = vsel %vm1237, %v1239, %v1235
    %v1241 = vmul.f32 %v1060, %v1240
    %v1242 = vrcp.pop %v1196
    %v1243 = vmul.f32 %v1196, %v1242
    %v1244 = vsub.f32 1.0, %v1243
    %v1245 = vmul.f32 %v1242, %v1244
    %v1246 = vadd.f32 %v1242, %v1245
    %vm1247 = vweird.f32 %v1196
    %vm1248 = vweird.f32 %v1242
    %vm1249 = vmor %vm1247, %vm1248
    %v1250 = vsel %vm1249, %v1242, %v1246
    %v1251 = vand.u32 2147483647, %v1196
    %vm1252 = vcmp.eq.f32.partialorder %v1251, 8.507059e+37
    %v1253 = vand.u32 %v1196, 2147483648
    %v1254 = vor.u32 1.1754944e-38, %v1253
    %v1255 = vsel %vm1252, %v1254, %v1250
    %v1256 = vmul.f32 %v1062, %v1255
    %v1257 = vrcp.pop %v1197
    %v1258 = vmul.f32 %v1197, %v1257
    %v1259 = vsub.f32 1.0, %v1258
    %v1260 = vmul.f32 %v1257, %v1259
    %v1261 = vadd.f32 %v1257, %v1260
    %vm1262 = vweird.f32 %v1197
    %vm1263 = vweird.f32 %v1257
    %vm1264 = vmor %vm1262, %vm1263
    %v1265 = vsel %vm1264, %v1257, %v1261
    %v1266 = vand.u32 2147483647, %v1197
    %vm1267 = vcmp.eq.f32.partialorder %v1266, 8.507059e+37
    %v1268 = vand.u32 %v1197, 2147483648
    %v1269 = vor.u32 1.1754944e-38, %v1268
    %v1270 = vsel %vm1267, %v1269, %v1265
    %v1271 = vmul.f32 %v1064, %v1270
    %v1272 = vrcp.pop %v1198
    %v1273 = vmul.f32 %v1198, %v1272
    %v1274 = vsub.f32 1.0, %v1273
    %v1275 = vmul.f32 %v1272, %v1274
    %v1276 = vadd.f32 %v1272, %v1275
    %vm1277 = vweird.f32 %v1198
    %vm1278 = vweird.f32 %v1272
    %vm1279 = vmor %vm1277, %vm1278
    %v1280 = vsel %vm1279, %v1272, %v1276
    %v1281 = vand.u32 2147483647, %v1198
    %vm1282 = vcmp.eq.f32.partialorder %v1281, 8.507059e+37
    %v1283 = vand.u32 %v1198, 2147483648
    %v1284 = vor.u32 1.1754944e-38, %v1283
    %v1285 = vsel %vm1282, %v1284, %v1280
    %v1286 = vmul.f32 %v1066, %v1285
    %v1287 = vrcp.pop %v1199
    %v1288 = vmul.f32 %v1199, %v1287
    %v1289 = vsub.f32 1.0, %v1288
    %v1290 = vmul.f32 %v1287, %v1289
    %v1291 = vadd.f32 %v1287, %v1290
    %vm1292 = vweird.f32 %v1199
    %vm1293 = vweird.f32 %v1287
    %vm1294 = vmor %vm1292, %vm1293
    %v1295 = vsel %vm1294, %v1287, %v1291
    %v1296 = vand.u32 2147483647, %v1199
    %vm1297 = vcmp.eq.f32.partialorder %v1296, 8.507059e+37
    %v1298 = vand.u32 %v1199, 2147483648
    %v1299 = vor.u32 1.1754944e-38, %v1298
    %v1300 = vsel %vm1297, %v1299, %v1295
    %v1301 = vmul.f32 %v1068, %v1300
    %v1302 = vrcp.pop %v1200
    %v1303 = vmul.f32 %v1200, %v1302
    %v1304 = vsub.f32 1.0, %v1303
    %v1305 = vmul.f32 %v1302, %v1304
    %v1306 = vadd.f32 %v1302, %v1305
    %vm1307 = vweird.f32 %v1200
    %vm1308 = vweird.f32 %v1302
    %vm1309 = vmor %vm1307, %vm1308
    %v1310 = vsel %vm1309, %v1302, %v1306
    %v1311 = vand.u32 2147483647, %v1200
    %vm1312 = vcmp.eq.f32.partialorder %v1311, 8.507059e+37
    %v1313 = vand.u32 %v1200, 2147483648
    %v1314 = vor.u32 1.1754944e-38, %v1313
    %v1315 = vsel %vm1312, %v1314, %v1310
    %v1316 = vmul.f32 %v1070, %v1315
    %v1317 = vrcp.pop %v1201
    %v1318 = vmul.f32 %v1201, %v1317
    %v1319 = vsub.f32 1.0, %v1318
    %v1320 = vmul.f32 %v1317, %v1319
    %v1321 = vadd.f32 %v1317, %v1320
    %vm1322 = vweird.f32 %v1201
    %vm1323 = vweird.f32 %v1317
    %vm1324 = vmor %vm1322, %vm1323
    %v1325 = vsel %vm1324, %v1317, %v1321
    %v1326 = vand.u32 2147483647, %v1201
    %vm1327 = vcmp.eq.f32.partialorder %v1326, 8.507059e+37
    %v1328 = vand.u32 %v1201, 2147483648
    %v1329 = vor.u32 1.1754944e-38, %v1328
    %v1330 = vsel %vm1327, %v1329, %v1325
    %v1331 = vmul.f32 %v1072, %v1330
    %v1332 = vrcp.pop %v1202
    %v1333 = vmul.f32 %v1202, %v1332
    %v1334 = vsub.f32 1.0, %v1333
    %v1335 = vmul.f32 %v1332, %v1334
    %v1336 = vadd.f32 %v1332, %v1335
    %vm1337 = vweird.f32 %v1202
    %vm1338 = vweird.f32 %v1332
    %vm1339 = vmor %vm1337, %vm1338
    %v1340 = vsel %vm1339, %v1332, %v1336
    %v1341 = vand.u32 2147483647, %v1202
    %vm1342 = vcmp.eq.f32.partialorder %v1341, 8.507059e+37
    %v1343 = vand.u32 %v1202, 2147483648
    %v1344 = vor.u32 1.1754944e-38, %v1343
    %v1345 = vsel %vm1342, %v1344, %v1340
    %v1346 = vmul.f32 %v1074, %v1345
    %v1347 = vrcp.pop %v1203
    %v1348 = vmul.f32 %v1203, %v1347
    %v1349 = vsub.f32 1.0, %v1348
    %v1350 = vmul.f32 %v1347, %v1349
    %v1351 = vadd.f32 %v1347, %v1350
    %vm1352 = vweird.f32 %v1203
    %vm1353 = vweird.f32 %v1347
    %vm1354 = vmor %vm1352, %vm1353
    %v1355 = vsel %vm1354, %v1347, %v1351
    %v1356 = vand.u32 2147483647, %v1203
    %vm1357 = vcmp.eq.f32.partialorder %v1356, 8.507059e+37
    %v1358 = vand.u32 %v1203, 2147483648
    %v1359 = vor.u32 1.1754944e-38, %v1358
    %v1360 = vsel %vm1357, %v1359, %v1355
    %v1361 = vmul.f32 %v1076, %v1360
    %v1362 = vrcp.pop %v1204
    %v1363 = vmul.f32 %v1204, %v1362
    %v1364 = vsub.f32 1.0, %v1363
    %v1365 = vmul.f32 %v1362, %v1364
    %v1366 = vadd.f32 %v1362, %v1365
    %vm1367 = vweird.f32 %v1204
    %vm1368 = vweird.f32 %v1362
    %vm1369 = vmor %vm1367, %vm1368
    %v1370 = vsel %vm1369, %v1362, %v1366
    %v1371 = vand.u32 2147483647, %v1204
    %vm1372 = vcmp.eq.f32.partialorder %v1371, 8.507059e+37
    %v1373 = vand.u32 %v1204, 2147483648
    %v1374 = vor.u32 1.1754944e-38, %v1373
    %v1375 = vsel %vm1372, %v1374, %v1370
    %v1376 = vmul.f32 %v1078, %v1375
    %v1377 = vrcp.pop %v1205
    %v1378 = vmul.f32 %v1205, %v1377
    %v1379 = vsub.f32 1.0, %v1378
    %v1380 = vmul.f32 %v1377, %v1379
    %v1381 = vadd.f32 %v1377, %v1380
    %vm1382 = vweird.f32 %v1205
    %vm1383 = vweird.f32 %v1377
    %vm1384 = vmor %vm1382, %vm1383
    %v1385 = vsel %vm1384, %v1377, %v1381
    %v1386 = vand.u32 2147483647, %v1205
    %vm1387 = vcmp.eq.f32.partialorder %v1386, 8.507059e+37
    %v1388 = vand.u32 %v1205, 2147483648
    %v1389 = vor.u32 1.1754944e-38, %v1388
    %v1390 = vsel %vm1387, %v1389, %v1385
    %v1391 = vmul.f32 %v1080, %v1390
    %v1392 = vrcp.pop %v1206
    %v1393 = vmul.f32 %v1206, %v1392
    %v1394 = vsub.f32 1.0, %v1393
    %v1395 = vmul.f32 %v1392, %v1394
    %v1396 = vadd.f32 %v1392, %v1395
    %vm1397 = vweird.f32 %v1206
    %vm1398 = vweird.f32 %v1392
    %vm1399 = vmor %vm1397, %vm1398
    %v1400 = vsel %vm1399, %v1392, %v1396
    %v1401 = vand.u32 2147483647, %v1206
    %vm1402 = vcmp.eq.f32.partialorder %v1401, 8.507059e+37
    %v1403 = vand.u32 %v1206, 2147483648
    %v1404 = vor.u32 1.1754944e-38, %v1403
    %v1405 = vsel %vm1402, %v1404, %v1400
    %v1406 = vmul.f32 %v1082, %v1405
    %v1407 = vrcp.pop %v1207
    %v1408 = vmul.f32 %v1207, %v1407
    %v1409 = vsub.f32 1.0, %v1408
    %v1410 = vmul.f32 %v1407, %v1409
    %v1411 = vadd.f32 %v1407, %v1410
    %vm1412 = vweird.f32 %v1207
    %vm1413 = vweird.f32 %v1407
    %vm1414 = vmor %vm1412, %vm1413
    %v1415 = vsel %vm1414, %v1407, %v1411
    %v1416 = vand.u32 2147483647, %v1207
    %vm1417 = vcmp.eq.f32.partialorder %v1416, 8.507059e+37
    %v1418 = vand.u32 %v1207, 2147483648
    %v1419 = vor.u32 1.1754944e-38, %v1418
    %v1420 = vsel %vm1417, %v1419, %v1415
    %v1421 = vmul.f32 %v1084, %v1420
    %v1422 = vrcp.pop %v1208
    %v1423 = vmul.f32 %v1208, %v1422
    %v1424 = vsub.f32 1.0, %v1423
    %v1425 = vmul.f32 %v1422, %v1424
    %v1426 = vadd.f32 %v1422, %v1425
    %vm1427 = vweird.f32 %v1208
    %vm1428 = vweird.f32 %v1422
    %vm1429 = vmor %vm1427, %vm1428
    %v1430 = vsel %vm1429, %v1422, %v1426
    %v1431 = vand.u32 2147483647, %v1208
    %vm1432 = vcmp.eq.f32.partialorder %v1431, 8.507059e+37
    %v1433 = vand.u32 %v1208, 2147483648
    %v1434 = vor.u32 1.1754944e-38, %v1433
    %v1435 = vsel %vm1432, %v1434, %v1430
    %v1436 = vmul.f32 %v1086, %v1435
    %v1437 = vrcp.pop %v1209
    %v1438 = vmul.f32 %v1209, %v1437
    %v1439 = vsub.f32 1.0, %v1438
    %v1440 = vmul.f32 %v1437, %v1439
    %v1441 = vadd.f32 %v1437, %v1440
    %vm1442 = vweird.f32 %v1209
    %vm1443 = vweird.f32 %v1437
    %vm1444 = vmor %vm1442, %vm1443
    %v1445 = vsel %vm1444, %v1437, %v1441
    %v1446 = vand.u32 2147483647, %v1209
    %vm1447 = vcmp.eq.f32.partialorder %v1446, 8.507059e+37
    %v1448 = vand.u32 %v1209, 2147483648
    %v1449 = vor.u32 1.1754944e-38, %v1448
    %v1450 = vsel %vm1447, %v1449, %v1445
    %v1451 = vmul.f32 %v1088, %v1450
    %v1452 = vrcp.pop %v1210
    %v1453 = vmul.f32 %v1210, %v1452
    %v1454 = vsub.f32 1.0, %v1453
    %v1455 = vmul.f32 %v1452, %v1454
    %v1456 = vadd.f32 %v1452, %v1455
    %vm1457 = vweird.f32 %v1210
    %vm1458 = vweird.f32 %v1452
    %vm1459 = vmor %vm1457, %vm1458
    %v1460 = vsel %vm1459, %v1452, %v1456
    %v1461 = vand.u32 2147483647, %v1210
    %vm1462 = vcmp.eq.f32.partialorder %v1461, 8.507059e+37
    %v1463 = vand.u32 %v1210, 2147483648
    %v1464 = vor.u32 1.1754944e-38, %v1463
    %v1465 = vsel %vm1462, %v1464, %v1460
    %v1466 = vmul.f32 %v1090, %v1465
    %1468 = vset.pattern.permute.xlu0 0
    %1469 = vperm.xlu0 %1468, %v1241
    %v1470 = vpop.permute.xlu0 %1469
    %1473 = vset.pattern.permute.xlu0 0
    %1474 = vperm.xlu0 %1473, %v1256
    %v1475 = vpop.permute.xlu0 %1474
    %1478 = vset.pattern.permute.xlu0 0
    %1479 = vperm.xlu0 %1478, %v1271
    %v1480 = vpop.permute.xlu0 %1479
    %1483 = vset.pattern.permute.xlu0 0
    %1484 = vperm.xlu0 %1483, %v1286
    %v1485 = vpop.permute.xlu0 %1484
    %1488 = vset.pattern.permute.xlu0 0
    %1489 = vperm.xlu0 %1488, %v1301
    %v1490 = vpop.permute.xlu0 %1489
    %1493 = vset.pattern.permute.xlu0 0
    %1494 = vperm.xlu0 %1493, %v1316
    %v1495 = vpop.permute.xlu0 %1494
    %1498 = vset.pattern.permute.xlu0 0
    %1499 = vperm.xlu0 %1498, %v1331
    %v1500 = vpop.permute.xlu0 %1499
    %1503 = vset.pattern.permute.xlu0 0
    %1504 = vperm.xlu0 %1503, %v1346
    %v1505 = vpop.permute.xlu0 %1504
    %1508 = vset.pattern.permute.xlu0 0
    %1509 = vperm.xlu0 %1508, %v1361
    %v1510 = vpop.permute.xlu0 %1509
    %1513 = vset.pattern.permute.xlu0 0
    %1514 = vperm.xlu0 %1513, %v1376
    %v1515 = vpop.permute.xlu0 %1514
    %1518 = vset.pattern.permute.xlu0 0
    %1519 = vperm.xlu0 %1518, %v1391
    %v1520 = vpop.permute.xlu0 %1519
    %1523 = vset.pattern.permute.xlu0 0
    %1524 = vperm.xlu0 %1523, %v1406
    %v1525 = vpop.permute.xlu0 %1524
    %1528 = vset.pattern.permute.xlu0 0
    %1529 = vperm.xlu0 %1528, %v1421
    %v1530 = vpop.permute.xlu0 %1529
    %1533 = vset.pattern.permute.xlu0 0
    %1534 = vperm.xlu0 %1533, %v1436
    %v1535 = vpop.permute.xlu0 %1534
    %1538 = vset.pattern.permute.xlu0 0
    %1539 = vperm.xlu0 %1538, %v1451
    %v1540 = vpop.permute.xlu0 %1539
    %1543 = vset.pattern.permute.xlu0 0
    %1544 = vperm.xlu0 %1543, %v1466
    %v1545 = vpop.permute.xlu0 %1544
    %v1547 = vmul.f32 %v1470, %v806
    %v1548 = vmul.f32 %v1475, %v806
    %v1549 = vmul.f32 %v1480, %v806
    %v1550 = vmul.f32 %v1485, %v806
    %v1551 = vmul.f32 %v1490, %v806
    %v1552 = vmul.f32 %v1495, %v806
    %v1553 = vmul.f32 %v1500, %v806
    %v1554 = vmul.f32 %v1505, %v806
    %v1555 = vmul.f32 %v1510, %v809
    %v1556 = vmul.f32 %v1515, %v809
    %v1557 = vmul.f32 %v1520, %v809
    %v1558 = vmul.f32 %v1525, %v809
    %v1559 = vmul.f32 %v1530, %v809
    %v1560 = vmul.f32 %v1535, %v809
    %v1561 = vmul.f32 %v1540, %v809
    %v1562 = vmul.f32 %v1545, %v809
    %vm1563 = vcmask 490816
    %v1564 = vsel %vm1563, %v1547, 0.0
    %v1565 = vrot.slane %v1564, 4
    %v1566 = vadd.f32 %v1564, %v1565
    %v1567 = vrot.slane %v1566, 2
    %v1568 = vadd.f32 %v1566, %v1567
    %v1569 = vrot.slane %v1568, 1
    %v1570 = vadd.f32 %v1568, %v1569
    %v1571 = vsel %vm1563, %v1548, 0.0
    %v1572 = vrot.slane %v1571, 4
    %v1573 = vadd.f32 %v1571, %v1572
    %v1574 = vrot.slane %v1573, 2
    %v1575 = vadd.f32 %v1573, %v1574
    %v1576 = vrot.slane %v1575, 1
    %v1577 = vadd.f32 %v1575, %v1576
    %v1578 = vsel %vm1563, %v1549, 0.0
    %v1579 = vrot.slane %v1578, 4
    %v1580 = vadd.f32 %v1578, %v1579
    %v1581 = vrot.slane %v1580, 2
    %v1582 = vadd.f32 %v1580, %v1581
    %v1583 = vrot.slane %v1582, 1
    %v1584 = vadd.f32 %v1582, %v1583
    %v1585 = vsel %vm1563, %v1550, 0.0
    %v1586 = vrot.slane %v1585, 4
    %v1587 = vadd.f32 %v1585, %v1586
    %v1588 = vrot.slane %v1587, 2
    %v1589 = vadd.f32 %v1587, %v1588
    %v1590 = vrot.slane %v1589, 1
    %v1591 = vadd.f32 %v1589, %v1590
    %v1592 = vsel %vm1563, %v1551, 0.0
    %v1593 = vrot.slane %v1592, 4
    %v1594 = vadd.f32 %v1592, %v1593
    %v1595 = vrot.slane %v1594, 2
    %v1596 = vadd.f32 %v1594, %v1595
    %v1597 = vrot.slane %v1596, 1
    %v1598 = vadd.f32 %v1596, %v1597
    %v1599 = vsel %vm1563, %v1552, 0.0
    %v1600 = vrot.slane %v1599, 4
    %v1601 = vadd.f32 %v1599, %v1600
    %v1602 = vrot.slane %v1601, 2
    %v1603 = vadd.f32 %v1601, %v1602
    %v1604 = vrot.slane %v1603, 1
    %v1605 = vadd.f32 %v1603, %v1604
    %v1606 = vsel %vm1563, %v1553, 0.0
    %v1607 = vrot.slane %v1606, 4
    %v1608 = vadd.f32 %v1606, %v1607
    %v1609 = vrot.slane %v1608, 2
    %v1610 = vadd.f32 %v1608, %v1609
    %v1611 = vrot.slane %v1610, 1
    %v1612 = vadd.f32 %v1610, %v1611
    %v1613 = vsel %vm1563, %v1554, 0.0
    %v1614 = vrot.slane %v1613, 4
    %v1615 = vadd.f32 %v1613, %v1614
    %v1616 = vrot.slane %v1615, 2
    %v1617 = vadd.f32 %v1615, %v1616
    %v1618 = vrot.slane %v1617, 1
    %v1619 = vadd.f32 %v1617, %v1618
    %v1620 = vsel %vm1563, %v1555, 0.0
    %v1621 = vrot.slane %v1620, 4
    %v1622 = vadd.f32 %v1620, %v1621
    %v1623 = vrot.slane %v1622, 2
    %v1624 = vadd.f32 %v1622, %v1623
    %v1625 = vrot.slane %v1624, 1
    %v1626 = vadd.f32 %v1624, %v1625
    %v1627 = vsel %vm1563, %v1556, 0.0
    %v1628 = vrot.slane %v1627, 4
    %v1629 = vadd.f32 %v1627, %v1628
    %v1630 = vrot.slane %v1629, 2
    %v1631 = vadd.f32 %v1629, %v1630
    %v1632 = vrot.slane %v1631, 1
    %v1633 = vadd.f32 %v1631, %v1632
    %v1634 = vsel %vm1563, %v1557, 0.0
    %v1635 = vrot.slane %v1634, 4
    %v1636 = vadd.f32 %v1634, %v1635
    %v1637 = vrot.slane %v1636, 2
    %v1638 = vadd.f32 %v1636, %v1637
    %v1639 = vrot.slane %v1638, 1
    %v1640 = vadd.f32 %v1638, %v1639
    %v1641 = vsel %vm1563, %v1558, 0.0
    %v1642 = vrot.slane %v1641, 4
    %v1643 = vadd.f32 %v1641, %v1642
    %v1644 = vrot.slane %v1643, 2
    %v1645 = vadd.f32 %v1643, %v1644
    %v1646 = vrot.slane %v1645, 1
    %v1647 = vadd.f32 %v1645, %v1646
    %v1648 = vsel %vm1563, %v1559, 0.0
    %v1649 = vrot.slane %v1648, 4
    %v1650 = vadd.f32 %v1648, %v1649
    %v1651 = vrot.slane %v1650, 2
    %v1652 = vadd.f32 %v1650, %v1651
    %v1653 = vrot.slane %v1652, 1
    %v1654 = vadd.f32 %v1652, %v1653
    %v1655 = vsel %vm1563, %v1560, 0.0
    %v1656 = vrot.slane %v1655, 4
    %v1657 = vadd.f32 %v1655, %v1656
    %v1658 = vrot.slane %v1657, 2
    %v1659 = vadd.f32 %v1657, %v1658
    %v1660 = vrot.slane %v1659, 1
    %v1661 = vadd.f32 %v1659, %v1660
    %v1662 = vsel %vm1563, %v1561, 0.0
    %v1663 = vrot.slane %v1662, 4
    %v1664 = vadd.f32 %v1662, %v1663
    %v1665 = vrot.slane %v1664, 2
    %v1666 = vadd.f32 %v1664, %v1665
    %v1667 = vrot.slane %v1666, 1
    %v1668 = vadd.f32 %v1666, %v1667
    %v1669 = vsel %vm1563, %v1562, 0.0
    %v1670 = vrot.slane %v1669, 4
    %v1671 = vadd.f32 %v1669, %v1670
    %v1672 = vrot.slane %v1671, 2
    %v1673 = vadd.f32 %v1671, %v1672
    %v1674 = vrot.slane %v1673, 1
    %v1675 = vadd.f32 %v1673, %v1674
    %v1676 = vld [vmem:[%s7] sm:$0xff]
    %v1677 = vld [vmem:[%s7 + $0x8] sm:$0xff]
    %v1678 = vld [vmem:[%s7 + $0x10] sm:$0xf]
    %v1679 = vld [vmem:[%s8] sm:$0x1]
    %v1681 = vperm.slane %v1679, 0
    %v1699 = vsel %vm979, %v1577, %v1570
    %v1700 = vsel %vm981, %v1584, %v1699
    %v1701 = vsel %vm983, %v1591, %v1700
    %v1702 = vsel %vm985, %v1598, %v1701
    %v1703 = vsel %vm987, %v1605, %v1702
    %v1704 = vsel %vm989, %v1612, %v1703
    %v1705 = vsel %vm991, %v1619, %v1704
    %v1706 = vsel %vm979, %v1633, %v1626
    %v1707 = vsel %vm981, %v1640, %v1706
    %v1708 = vsel %vm983, %v1647, %v1707
    %v1709 = vsel %vm985, %v1654, %v1708
    %v1710 = vsel %vm987, %v1661, %v1709
    %v1711 = vsel %vm989, %v1668, %v1710
    %v1712 = vsel %vm991, %v1675, %v1711
    %1713 = vrot.lane.b32.xlu0 %v1705, 88
    %v1714 = vpop.permute.xlu0 %1713
    %1715 = vrot.lane.b32.xlu0 %v1712, 88
    %v1716 = vpop.permute.xlu0 %1715
    %v1717 = vsel %vm757, %v1714, 0
    %v1719 = vsel %vm757, %v1716, 0
    %v1722 = vsel %vm757, %v1676, 0
    %v1725 = vsel %vm757, %v1677, 0
    %v1728 = vsel %vm757, %v1678, 0
    %1730 = vmatpush.xpose.msra.mxu0 0.0
    %1731 = vmatpush.xpose.msra.mxu0 0.0
    %1732 = vmatpush.xpose.msra.mxu0 0.0
    %1733 = vmatpush.xpose.msra.mxu0 0.0
    %1734 = vmatpush.xpose.msra.mxu0 0.0
    %1735 = vmatpush.xpose.msra.mxu0 0.0
    %1736 = vmatpush.xpose.msra.mxu0 0.0
    %1737 = vmatpush.xpose.msra.mxu0 0.0
    %1738 = vmatpush.xpose.msra.mxu0 0.0
    %1739 = vmatpush.xpose.msra.mxu0 0.0
    %1740 = vmatpush.xpose.msra.mxu0 0.0
    %1741 = vmatpush.xpose.msra.mxu0 0.0
    %1742 = vmatpush.xpose.msra.mxu0 0.0
    %1743 = vmatpush.xpose.msra.mxu0 %v1728
    %1744 = vmatpush.xpose.msra.mxu0 %v1725
    %1745 = vmatpush.xpose.msra.mxu0 %v1722
    %1746 = vmatmul.f32.gmra.mxu0 %v1717
    %v1747 = vpop.f32.mrf.mxu0
    %v1748 = vadd.f32 %v1681, %v1747
    %1749 = vmatmul.f32.gmra.mxu0 %v1719
    %v1750 = vpop.f32.mrf.mxu0
    %v1751 = vadd.f32 %v1681, %v1750
    %1752 = vdwg.mxu0
    %v1753 = vadd.f32 %v739, %v1748
    %v1754 = vadd.f32 %v740, %v1751
    %v1755 = vsel %vm757, %v1753, 0.0
    %1756 = vadd.xlane.f32.xlu0 %v1755
    %v1757 = vpop.xlane.xlu0 %1756
    %v1758 = vsel %vm757, %v1754, 0.0
    %1759 = vadd.xlane.f32.xlu0 %v1758
    %v1760 = vpop.xlane.xlu0 %1759
    %v1761 = vrcp.pop 20.0
    %v1762 = vmul.f32 20.0, %v1761
    %v1763 = vsub.f32 1.0, %v1762
    %v1764 = vmul.f32 %v1761, %v1763
    %v1765 = vadd.f32 %v1761, %v1764
    %vm1766 = vweird.f32 %v1761
    %v1767 = vsel %vm1766, %v1761, %v1765
    %v1768 = vmul.f32 %v1757, %v1767
    %v1769 = vmul.f32 %v1760, %v1767
    %v1770 = vsub.f32 %v1753, %v1768
    %v1771 = vsub.f32 %v1754, %v1769
    %v1772 = vmul.f32 %v1770, %v1770
    %v1773 = vmul.f32 %v1771, %v1771
    %v1774 = vsel %vm757, %v1772, 0.0
    %1775 = vadd.xlane.f32.xlu0 %v1774
    %v1776 = vpop.xlane.xlu0 %1775
    %v1777 = vsel %vm757, %v1773, 0.0
    %1778 = vadd.xlane.f32.xlu0 %v1777
    %v1779 = vpop.xlane.xlu0 %1778
    %v1780 = vmul.f32 %v1776, %v1767
    %v1781 = vmul.f32 %v1779, %v1767
    %v1782 = vadd.f32 %v1780, 1e-05
    %v1783 = vadd.f32 %v1781, 1e-05
    %v1784 = vrsqrt.pop %v1782
    %v1785 = vmul.f32 %v1784, %v1782
    %v1786 = vmul.f32 %v1785, %v1784
    %v1787 = vmul.f32 0.5, %v1786
    %v1788 = vsub.f32 1.5, %v1787
    %v1789 = vmul.f32 %v1784, %v1788
    %vm1790 = vweird.f32 %v1782
    %vm1791 = vweird.f32 %v1784
    %vm1792 = vmor %vm1790, %vm1791
    %v1793 = vsel %vm1792, %v1784, %v1789
    %v1794 = vrsqrt.pop %v1783
    %v1795 = vmul.f32 %v1794, %v1783
    %v1796 = vmul.f32 %v1795, %v1794
    %v1797 = vmul.f32 0.5, %v1796
    %v1798 = vsub.f32 1.5, %v1797
    %v1799 = vmul.f32 %v1794, %v1798
    %vm1800 = vweird.f32 %v1783
    %vm1801 = vweird.f32 %v1794
    %vm1802 = vmor %vm1800, %vm1801
    %v1803 = vsel %vm1802, %v1794, %v1799
    %v1804 = vmul.f32 %v1770, %v1793
    %v1805 = vmul.f32 %v1771, %v1803
    %v1806 = vperm.slane %v743, 0
    %v1807 = vmul.f32 %v1804, %v1806
    %v1808 = vmul.f32 %v1805, %v1806
    %v1809 = vperm.slane %v744, 0
    %v1810 = vadd.f32 %v1807, %v1809
    %v1811 = vadd.f32 %v1808, %v1809
    %v1812 = vld [vmem:[%s9] sm:$0xff]
    %v1813 = vld [vmem:[%s9 + $0x8] sm:$0xff]
    %v1814 = vld [vmem:[%s9 + $0x10] sm:$0xff]
    %v1815 = vld [vmem:[%s9 + $0x18] sm:$0xff]
    %v1816 = vld [vmem:[%s9 + $0x20] sm:$0xff]
    %v1817 = vld [vmem:[%s9 + $0x28] sm:$0xff]
    %v1818 = vld [vmem:[%s9 + $0x30] sm:$0xff]
    %v1819 = vld [vmem:[%s9 + $0x38] sm:$0xf]
    %v1820 = vld [vmem:[%s10] sm:$0x1]
    %v1822 = vperm.slane %v1820, 0
    %v1825 = vsel %vm757, %v1810, 0
    %v1828 = vsel %vm757, %v1811, 0
    %v1831 = vsel %vm757, %v1812, 0
    %v1834 = vsel %vm757, %v1813, 0
    %v1837 = vsel %vm757, %v1814, 0
    %1839 = vmatpush.xpose.msra.mxu0 0.0
    %1840 = vmatpush.xpose.msra.mxu0 0.0
    %1841 = vmatpush.xpose.msra.mxu0 0.0
    %1842 = vmatpush.xpose.msra.mxu0 0.0
    %1843 = vmatpush.xpose.msra.mxu0 0.0
    %1844 = vmatpush.xpose.msra.mxu0 0.0
    %1845 = vmatpush.xpose.msra.mxu0 0.0
    %1846 = vmatpush.xpose.msra.mxu0 0.0
    %1847 = vmatpush.xpose.msra.mxu0 0.0
    %1848 = vmatpush.xpose.msra.mxu0 0.0
    %1849 = vmatpush.xpose.msra.mxu0 0.0
    %1850 = vmatpush.xpose.msra.mxu0 0.0
    %1851 = vmatpush.xpose.msra.mxu0 0.0
    %1852 = vmatpush.xpose.msra.mxu0 %v1837
    %1853 = vmatpush.xpose.msra.mxu0 %v1834
    %1854 = vmatpush.xpose.msra.mxu0 %v1831
    %1855 = vmatmul.f32.gmra.mxu0 %v1825
    %v1856 = vpop.f32.mrf.mxu0
    %v1857 = vadd.f32 %v1822, %v1856
    %1858 = vmatmul.f32.gmra.mxu0 %v1828
    %v1859 = vpop.f32.mrf.mxu0
    %v1860 = vadd.f32 %v1822, %v1859
    %1861 = vdwg.mxu0
    %vm1867 = vcmask 1043456
    %v1868 = vrot.slane %v1814, 4
    %v1869 = vrot.slane %v1815, 4
    %v1870 = vsel %vm1867, %v1868, %v1869
    %v1871 = vrot.slane %v1816, 4
    %v1872 = vsel %vm1867, %v1869, %v1871
    %v1873 = vrot.slane %v1817, 4
    %v1874 = vsel %vm1867, %v1871, %v1873
    %v1875 = vrot.slane %v1818, 4
    %v1876 = vsel %vm1867, %v1873, %v1875
    %v1877 = vrot.slane %v1819, 4
    %v1878 = vsel %vm1867, %v1875, %v1877
    %1879 = vrot.lane.b32.xlu0 %v1822, 108
    %v1880 = vpop.permute.xlu0 %1879
    %v1883 = vsel %vm757, %v741, 0
    %v1886 = vsel %vm757, %v742, 0
    %v1888 = vsel %vm757, %v1870, 0
    %v1890 = vsel %vm757, %v1872, 0
    %v1892 = vsel %vm757, %v1874, 0
    %v1894 = vsel %vm757, %v1876, 0
    %v1896 = vsel %vm757, %v1878, 0
    %1898 = vmatpush.xpose.msra.mxu0 0.0
    %1899 = vmatpush.xpose.msra.mxu0 0.0
    %1900 = vmatpush.xpose.msra.mxu0 0.0
    %1901 = vmatpush.xpose.msra.mxu0 0.0
    %1902 = vmatpush.xpose.msra.mxu0 0.0
    %1903 = vmatpush.xpose.msra.mxu0 0.0
    %1904 = vmatpush.xpose.msra.mxu0 0.0
    %1905 = vmatpush.xpose.msra.mxu0 0.0
    %1906 = vmatpush.xpose.msra.mxu0 0.0
    %1907 = vmatpush.xpose.msra.mxu0 0.0
    %1908 = vmatpush.xpose.msra.mxu0 0.0
    %1909 = vmatpush.xpose.msra.mxu0 %v1896
    %1910 = vmatpush.xpose.msra.mxu0 %v1894
    %1911 = vmatpush.xpose.msra.mxu0 %v1892
    %1912 = vmatpush.xpose.msra.mxu0 %v1890
    %1913 = vmatpush.xpose.msra.mxu0 %v1888
    %1914 = vmatmul.f32.gmra.mxu0 %v1883
    %v1915 = vpop.f32.mrf.mxu0
    %v1916 = vadd.f32 %v1880, %v1915
    %1917 = vmatmul.f32.gmra.mxu0 %v1886
    %v1918 = vpop.f32.mrf.mxu0
    %v1919 = vadd.f32 %v1880, %v1918
    %1920 = vdwg.mxu0
    %v1923 = vrot.slane %v1857, 1
    %v1924 = vrot.slane %v1857, 2
    %v1925 = vrot.slane %v1857, 3
    %v1926 = vrot.slane %v1857, 4
    %v1927 = vrot.slane %v1857, 5
    %v1928 = vrot.slane %v1857, 6
    %v1929 = vrot.slane %v1857, 7
    %v1930 = vrot.slane %v1860, 1
    %v1931 = vrot.slane %v1860, 2
    %v1932 = vrot.slane %v1860, 3
    %v1933 = vrot.slane %v1860, 4
    %v1934 = vrot.slane %v1860, 5
    %v1935 = vrot.slane %v1860, 6
    %v1936 = vrot.slane %v1860, 7
    %v1937 = vperm.slane %v1857, 0
    %v1938 = vperm.slane %v1923, 0
    %v1939 = vperm.slane %v1924, 0
    %v1940 = vperm.slane %v1925, 0
    %v1941 = vperm.slane %v1926, 0
    %v1942 = vperm.slane %v1927, 0
    %v1943 = vperm.slane %v1928, 0
    %v1944 = vperm.slane %v1929, 0
    %v1945 = vperm.slane %v1860, 0
    %v1946 = vperm.slane %v1930, 0
    %v1947 = vperm.slane %v1931, 0
    %v1948 = vperm.slane %v1932, 0
    %v1949 = vperm.slane %v1933, 0
    %v1950 = vperm.slane %v1934, 0
    %v1951 = vperm.slane %v1935, 0
    %v1952 = vperm.slane %v1936, 0
    %v1969 = vmul.f32 %v1937, %v1916
    %v1970 = vmul.f32 %v1938, %v1916
    %v1971 = vmul.f32 %v1939, %v1916
    %v1972 = vmul.f32 %v1940, %v1916
    %v1973 = vmul.f32 %v1941, %v1916
    %v1974 = vmul.f32 %v1942, %v1916
    %v1975 = vmul.f32 %v1943, %v1916
    %v1976 = vmul.f32 %v1944, %v1916
    %v1977 = vmul.f32 %v1945, %v1919
    %v1978 = vmul.f32 %v1946, %v1919
    %v1979 = vmul.f32 %v1947, %v1919
    %v1980 = vmul.f32 %v1948, %v1919
    %v1981 = vmul.f32 %v1949, %v1919
    %v1982 = vmul.f32 %v1950, %v1919
    %v1983 = vmul.f32 %v1951, %v1919
    %v1984 = vmul.f32 %v1952, %v1919
    %v1985 = vsel %vm757, %v1969, 0.0
    %1986 = vadd.xlane.f32.xlu0 %v1985
    %v1987 = vpop.xlane.xlu0 %1986
    %v1988 = vsel %vm757, %v1970, 0.0
    %1989 = vadd.xlane.f32.xlu0 %v1988
    %v1990 = vpop.xlane.xlu0 %1989
    %v1991 = vsel %vm757, %v1971, 0.0
    %1992 = vadd.xlane.f32.xlu0 %v1991
    %v1993 = vpop.xlane.xlu0 %1992
    %v1994 = vsel %vm757, %v1972, 0.0
    %1995 = vadd.xlane.f32.xlu0 %v1994
    %v1996 = vpop.xlane.xlu0 %1995
    %v1997 = vsel %vm757, %v1973, 0.0
    %1998 = vadd.xlane.f32.xlu0 %v1997
    %v1999 = vpop.xlane.xlu0 %1998
    %v2000 = vsel %vm757, %v1974, 0.0
    %2001 = vadd.xlane.f32.xlu0 %v2000
    %v2002 = vpop.xlane.xlu0 %2001
    %v2003 = vsel %vm757, %v1975, 0.0
    %2004 = vadd.xlane.f32.xlu0 %v2003
    %v2005 = vpop.xlane.xlu0 %2004
    %v2006 = vsel %vm757, %v1976, 0.0
    %2007 = vadd.xlane.f32.xlu0 %v2006
    %v2008 = vpop.xlane.xlu0 %2007
    %v2009 = vsel %vm757, %v1977, 0.0
    %2010 = vadd.xlane.f32.xlu0 %v2009
    %v2011 = vpop.xlane.xlu0 %2010
    %v2012 = vsel %vm757, %v1978, 0.0
    %2013 = vadd.xlane.f32.xlu0 %v2012
    %v2014 = vpop.xlane.xlu0 %2013
    %v2015 = vsel %vm757, %v1979, 0.0
    %2016 = vadd.xlane.f32.xlu0 %v2015
    %v2017 = vpop.xlane.xlu0 %2016
    %v2018 = vsel %vm757, %v1980, 0.0
    %2019 = vadd.xlane.f32.xlu0 %v2018
    %v2020 = vpop.xlane.xlu0 %2019
    %v2021 = vsel %vm757, %v1981, 0.0
    %2022 = vadd.xlane.f32.xlu0 %v2021
    %v2023 = vpop.xlane.xlu0 %2022
    %v2024 = vsel %vm757, %v1982, 0.0
    %2025 = vadd.xlane.f32.xlu0 %v2024
    %v2026 = vpop.xlane.xlu0 %2025
    %v2027 = vsel %vm757, %v1983, 0.0
    %2028 = vadd.xlane.f32.xlu0 %v2027
    %v2029 = vpop.xlane.xlu0 %2028
    %v2030 = vsel %vm757, %v1984, 0.0
    %2031 = vadd.xlane.f32.xlu0 %v2030
    %v2032 = vpop.xlane.xlu0 %2031
    %v2033 = vmul.f32 %v1987, 0.2236068
    %v2034 = vmul.f32 %v1990, 0.2236068
    %v2035 = vmul.f32 %v1993, 0.2236068
    %v2036 = vmul.f32 %v1996, 0.2236068
    %v2037 = vmul.f32 %v1999, 0.2236068
    %v2038 = vmul.f32 %v2002, 0.2236068
    %v2039 = vmul.f32 %v2005, 0.2236068
    %v2040 = vmul.f32 %v2008, 0.2236068
    %v2041 = vmul.f32 %v2011, 0.2236068
    %v2042 = vmul.f32 %v2014, 0.2236068
    %v2043 = vmul.f32 %v2017, 0.2236068
    %v2044 = vmul.f32 %v2020, 0.2236068
    %v2045 = vmul.f32 %v2023, 0.2236068
    %v2046 = vmul.f32 %v2026, 0.2236068
    %v2047 = vmul.f32 %v2029, 0.2236068
    %v2048 = vmul.f32 %v2032, 0.2236068
    %v2065 = vperm.slane %v2033, %v962
    %v2066 = vperm.slane %v2034, %v962
    %v2067 = vperm.slane %v2035, %v962
    %v2068 = vperm.slane %v2036, %v962
    %v2069 = vperm.slane %v2037, %v962
    %v2070 = vperm.slane %v2038, %v962
    %v2071 = vperm.slane %v2039, %v962
    %v2072 = vperm.slane %v2040, %v962
    %v2073 = vperm.slane %v2041, %v962
    %v2074 = vperm.slane %v2042, %v962
    %v2075 = vperm.slane %v2043, %v962
    %v2076 = vperm.slane %v2044, %v962
    %v2077 = vperm.slane %v2045, %v962
    %v2078 = vperm.slane %v2046, %v962
    %v2079 = vperm.slane %v2047, %v962
    %v2080 = vperm.slane %v2048, %v962
    %v2081 = vsel %vm979, %v2066, %v2065
    %v2082 = vsel %vm981, %v2067, %v2081
    %v2083 = vsel %vm983, %v2068, %v2082
    %v2084 = vsel %vm985, %v2069, %v2083
    %v2085 = vsel %vm987, %v2070, %v2084
    %v2086 = vsel %vm989, %v2071, %v2085
    %v2087 = vsel %vm991, %v2072, %v2086
    %v2088 = vsel %vm979, %v2074, %v2073
    %v2089 = vsel %vm981, %v2075, %v2088
    %v2090 = vsel %vm983, %v2076, %v2089
    %v2091 = vsel %vm985, %v2077, %v2090
    %v2092 = vsel %vm987, %v2078, %v2091
    %v2093 = vsel %vm989, %v2079, %v2092
    %v2094 = vsel %vm991, %v2080, %v2093
    %v2097 = vsel %vm1002, %v2087, -inf
    %2098 = vmax.xlane.f32.xlu0 %v2097
    %v2099 = vpop.xlane.xlu0 %2098
    %v2100 = vsel %vm1002, %v2094, -inf
    %2101 = vmax.xlane.f32.xlu0 %v2100
    %v2102 = vpop.xlane.xlu0 %2101
    %v2105 = vperm.slane %v2099, 0
    %v2106 = vperm.slane %v2099, 1
    %v2107 = vperm.slane %v2099, 2
    %v2108 = vperm.slane %v2099, 3
    %v2109 = vperm.slane %v2099, 4
    %v2110 = vperm.slane %v2099, 5
    %v2111 = vperm.slane %v2099, 6
    %v2112 = vperm.slane %v2099, 7
    %v2113 = vperm.slane %v2102, 0
    %v2114 = vperm.slane %v2102, 1
    %v2115 = vperm.slane %v2102, 2
    %v2116 = vperm.slane %v2102, 3
    %v2117 = vperm.slane %v2102, 4
    %v2118 = vperm.slane %v2102, 5
    %v2119 = vperm.slane %v2102, 6
    %v2120 = vperm.slane %v2102, 7
    %v2137 = vsub.f32 %v2033, %v2105
    %v2138 = vsub.f32 %v2034, %v2106
    %v2139 = vsub.f32 %v2035, %v2107
    %v2140 = vsub.f32 %v2036, %v2108
    %v2141 = vsub.f32 %v2037, %v2109
    %v2142 = vsub.f32 %v2038, %v2110
    %v2143 = vsub.f32 %v2039, %v2111
    %v2144 = vsub.f32 %v2040, %v2112
    %v2145 = vsub.f32 %v2041, %v2113
    %v2146 = vsub.f32 %v2042, %v2114
    %v2147 = vsub.f32 %v2043, %v2115
    %v2148 = vsub.f32 %v2044, %v2116
    %v2149 = vsub.f32 %v2045, %v2117
    %v2150 = vsub.f32 %v2046, %v2118
    %v2151 = vsub.f32 %v2047, %v2119
    %v2152 = vsub.f32 %v2048, %v2120
    %v2153 = vmul.f32 %v2137, 1.442695
    %v2154 = vpow.pop %v2153
    %v2155 = vmul.f32 %v2138, 1.442695
    %v2156 = vpow.pop %v2155
    %v2157 = vmul.f32 %v2139, 1.442695
    %v2158 = vpow.pop %v2157
    %v2159 = vmul.f32 %v2140, 1.442695
    %v2160 = vpow.pop %v2159
    %v2161 = vmul.f32 %v2141, 1.442695
    %v2162 = vpow.pop %v2161
    %v2163 = vmul.f32 %v2142, 1.442695
    %v2164 = vpow.pop %v2163
    %v2165 = vmul.f32 %v2143, 1.442695
    %v2166 = vpow.pop %v2165
    %v2167 = vmul.f32 %v2144, 1.442695
    %v2168 = vpow.pop %v2167
    %v2169 = vmul.f32 %v2145, 1.442695
    %v2170 = vpow.pop %v2169
    %v2171 = vmul.f32 %v2146, 1.442695
    %v2172 = vpow.pop %v2171
    %v2173 = vmul.f32 %v2147, 1.442695
    %v2174 = vpow.pop %v2173
    %v2175 = vmul.f32 %v2148, 1.442695
    %v2176 = vpow.pop %v2175
    %v2177 = vmul.f32 %v2149, 1.442695
    %v2178 = vpow.pop %v2177
    %v2179 = vmul.f32 %v2150, 1.442695
    %v2180 = vpow.pop %v2179
    %v2181 = vmul.f32 %v2151, 1.442695
    %v2182 = vpow.pop %v2181
    %v2183 = vmul.f32 %v2152, 1.442695
    %v2184 = vpow.pop %v2183
    %2201 = vset.pattern.permute.xlu0 0
    %2202 = vperm.xlu0 %2201, %v2154
    %v2203 = vpop.permute.xlu0 %2202
    %2204 = vset.pattern.permute.xlu0 0
    %2205 = vperm.xlu0 %2204, %v2156
    %v2206 = vpop.permute.xlu0 %2205
    %2207 = vset.pattern.permute.xlu0 0
    %2208 = vperm.xlu0 %2207, %v2158
    %v2209 = vpop.permute.xlu0 %2208
    %2210 = vset.pattern.permute.xlu0 0
    %2211 = vperm.xlu0 %2210, %v2160
    %v2212 = vpop.permute.xlu0 %2211
    %2213 = vset.pattern.permute.xlu0 0
    %2214 = vperm.xlu0 %2213, %v2162
    %v2215 = vpop.permute.xlu0 %2214
    %2216 = vset.pattern.permute.xlu0 0
    %2217 = vperm.xlu0 %2216, %v2164
    %v2218 = vpop.permute.xlu0 %2217
    %2219 = vset.pattern.permute.xlu0 0
    %2220 = vperm.xlu0 %2219, %v2166
    %v2221 = vpop.permute.xlu0 %2220
    %2222 = vset.pattern.permute.xlu0 0
    %2223 = vperm.xlu0 %2222, %v2168
    %v2224 = vpop.permute.xlu0 %2223
    %2225 = vset.pattern.permute.xlu0 0
    %2226 = vperm.xlu0 %2225, %v2170
    %v2227 = vpop.permute.xlu0 %2226
    %2228 = vset.pattern.permute.xlu0 0
    %2229 = vperm.xlu0 %2228, %v2172
    %v2230 = vpop.permute.xlu0 %2229
    %2231 = vset.pattern.permute.xlu0 0
    %2232 = vperm.xlu0 %2231, %v2174
    %v2233 = vpop.permute.xlu0 %2232
    %2234 = vset.pattern.permute.xlu0 0
    %2235 = vperm.xlu0 %2234, %v2176
    %v2236 = vpop.permute.xlu0 %2235
    %2237 = vset.pattern.permute.xlu0 0
    %2238 = vperm.xlu0 %2237, %v2178
    %v2239 = vpop.permute.xlu0 %2238
    %2240 = vset.pattern.permute.xlu0 0
    %2241 = vperm.xlu0 %2240, %v2180
    %v2242 = vpop.permute.xlu0 %2241
    %2243 = vset.pattern.permute.xlu0 0
    %2244 = vperm.xlu0 %2243, %v2182
    %v2245 = vpop.permute.xlu0 %2244
    %2246 = vset.pattern.permute.xlu0 0
    %2247 = vperm.xlu0 %2246, %v2184
    %v2248 = vpop.permute.xlu0 %2247
    %v2249 = vperm.slane %v2203, %v962
    %v2250 = vperm.slane %v2206, %v962
    %v2251 = vperm.slane %v2209, %v962
    %v2252 = vperm.slane %v2212, %v962
    %v2253 = vperm.slane %v2215, %v962
    %v2254 = vperm.slane %v2218, %v962
    %v2255 = vperm.slane %v2221, %v962
    %v2256 = vperm.slane %v2224, %v962
    %v2257 = vperm.slane %v2227, %v962
    %v2258 = vperm.slane %v2230, %v962
    %v2259 = vperm.slane %v2233, %v962
    %v2260 = vperm.slane %v2236, %v962
    %v2261 = vperm.slane %v2239, %v962
    %v2262 = vperm.slane %v2242, %v962
    %v2263 = vperm.slane %v2245, %v962
    %v2264 = vperm.slane %v2248, %v962
    %v2265 = vsel %vm979, %v2250, %v2249
    %v2266 = vsel %vm981, %v2251, %v2265
    %v2267 = vsel %vm983, %v2252, %v2266
    %v2268 = vsel %vm985, %v2253, %v2267
    %v2269 = vsel %vm987, %v2254, %v2268
    %v2270 = vsel %vm989, %v2255, %v2269
    %v2271 = vsel %vm991, %v2256, %v2270
    %v2272 = vsel %vm979, %v2258, %v2257
    %v2273 = vsel %vm981, %v2259, %v2272
    %v2274 = vsel %vm983, %v2260, %v2273
    %v2275 = vsel %vm985, %v2261, %v2274
    %v2276 = vsel %vm987, %v2262, %v2275
    %v2277 = vsel %vm989, %v2263, %v2276
    %v2278 = vsel %vm991, %v2264, %v2277
    %v2281 = vsel %vm1002, %v2271, 0.0
    %2282 = vadd.xlane.f32.xlu0 %v2281
    %v2283 = vpop.xlane.xlu0 %2282
    %v2284 = vsel %vm1002, %v2278, 0.0
    %2285 = vadd.xlane.f32.xlu0 %v2284
    %v2286 = vpop.xlane.xlu0 %2285
    %v2289 = vperm.slane %v2283, 0
    %v2290 = vperm.slane %v2283, 1
    %v2291 = vperm.slane %v2283, 2
    %v2292 = vperm.slane %v2283, 3
    %v2293 = vperm.slane %v2283, 4
    %v2294 = vperm.slane %v2283, 5
    %v2295 = vperm.slane %v2283, 6
    %v2296 = vperm.slane %v2283, 7
    %v2297 = vperm.slane %v2286, 0
    %v2298 = vperm.slane %v2286, 1
    %v2299 = vperm.slane %v2286, 2
    %v2300 = vperm.slane %v2286, 3
    %v2301 = vperm.slane %v2286, 4
    %v2302 = vperm.slane %v2286, 5
    %v2303 = vperm.slane %v2286, 6
    %v2304 = vperm.slane %v2286, 7
    %v2321 = vrcp.pop %v2289
    %v2322 = vmul.f32 %v2289, %v2321
    %v2323 = vsub.f32 1.0, %v2322
    %v2324 = vmul.f32 %v2321, %v2323
    %v2325 = vadd.f32 %v2321, %v2324
    %vm2326 = vweird.f32 %v2289
    %vm2327 = vweird.f32 %v2321
    %vm2328 = vmor %vm2326, %vm2327
    %v2329 = vsel %vm2328, %v2321, %v2325
    %v2330 = vand.u32 2147483647, %v2289
    %vm2331 = vcmp.eq.f32.partialorder %v2330, 8.507059e+37
    %v2332 = vand.u32 %v2289, 2147483648
    %v2333 = vor.u32 1.1754944e-38, %v2332
    %v2334 = vsel %vm2331, %v2333, %v2329
    %v2335 = vmul.f32 %v2154, %v2334
    %v2336 = vrcp.pop %v2290
    %v2337 = vmul.f32 %v2290, %v2336
    %v2338 = vsub.f32 1.0, %v2337
    %v2339 = vmul.f32 %v2336, %v2338
    %v2340 = vadd.f32 %v2336, %v2339
    %vm2341 = vweird.f32 %v2290
    %vm2342 = vweird.f32 %v2336
    %vm2343 = vmor %vm2341, %vm2342
    %v2344 = vsel %vm2343, %v2336, %v2340
    %v2345 = vand.u32 2147483647, %v2290
    %vm2346 = vcmp.eq.f32.partialorder %v2345, 8.507059e+37
    %v2347 = vand.u32 %v2290, 2147483648
    %v2348 = vor.u32 1.1754944e-38, %v2347
    %v2349 = vsel %vm2346, %v2348, %v2344
    %v2350 = vmul.f32 %v2156, %v2349
    %v2351 = vrcp.pop %v2291
    %v2352 = vmul.f32 %v2291, %v2351
    %v2353 = vsub.f32 1.0, %v2352
    %v2354 = vmul.f32 %v2351, %v2353
    %v2355 = vadd.f32 %v2351, %v2354
    %vm2356 = vweird.f32 %v2291
    %vm2357 = vweird.f32 %v2351
    %vm2358 = vmor %vm2356, %vm2357
    %v2359 = vsel %vm2358, %v2351, %v2355
    %v2360 = vand.u32 2147483647, %v2291
    %vm2361 = vcmp.eq.f32.partialorder %v2360, 8.507059e+37
    %v2362 = vand.u32 %v2291, 2147483648
    %v2363 = vor.u32 1.1754944e-38, %v2362
    %v2364 = vsel %vm2361, %v2363, %v2359
    %v2365 = vmul.f32 %v2158, %v2364
    %v2366 = vrcp.pop %v2292
    %v2367 = vmul.f32 %v2292, %v2366
    %v2368 = vsub.f32 1.0, %v2367
    %v2369 = vmul.f32 %v2366, %v2368
    %v2370 = vadd.f32 %v2366, %v2369
    %vm2371 = vweird.f32 %v2292
    %vm2372 = vweird.f32 %v2366
    %vm2373 = vmor %vm2371, %vm2372
    %v2374 = vsel %vm2373, %v2366, %v2370
    %v2375 = vand.u32 2147483647, %v2292
    %vm2376 = vcmp.eq.f32.partialorder %v2375, 8.507059e+37
    %v2377 = vand.u32 %v2292, 2147483648
    %v2378 = vor.u32 1.1754944e-38, %v2377
    %v2379 = vsel %vm2376, %v2378, %v2374
    %v2380 = vmul.f32 %v2160, %v2379
    %v2381 = vrcp.pop %v2293
    %v2382 = vmul.f32 %v2293, %v2381
    %v2383 = vsub.f32 1.0, %v2382
    %v2384 = vmul.f32 %v2381, %v2383
    %v2385 = vadd.f32 %v2381, %v2384
    %vm2386 = vweird.f32 %v2293
    %vm2387 = vweird.f32 %v2381
    %vm2388 = vmor %vm2386, %vm2387
    %v2389 = vsel %vm2388, %v2381, %v2385
    %v2390 = vand.u32 2147483647, %v2293
    %vm2391 = vcmp.eq.f32.partialorder %v2390, 8.507059e+37
    %v2392 = vand.u32 %v2293, 2147483648
    %v2393 = vor.u32 1.1754944e-38, %v2392
    %v2394 = vsel %vm2391, %v2393, %v2389
    %v2395 = vmul.f32 %v2162, %v2394
    %v2396 = vrcp.pop %v2294
    %v2397 = vmul.f32 %v2294, %v2396
    %v2398 = vsub.f32 1.0, %v2397
    %v2399 = vmul.f32 %v2396, %v2398
    %v2400 = vadd.f32 %v2396, %v2399
    %vm2401 = vweird.f32 %v2294
    %vm2402 = vweird.f32 %v2396
    %vm2403 = vmor %vm2401, %vm2402
    %v2404 = vsel %vm2403, %v2396, %v2400
    %v2405 = vand.u32 2147483647, %v2294
    %vm2406 = vcmp.eq.f32.partialorder %v2405, 8.507059e+37
    %v2407 = vand.u32 %v2294, 2147483648
    %v2408 = vor.u32 1.1754944e-38, %v2407
    %v2409 = vsel %vm2406, %v2408, %v2404
    %v2410 = vmul.f32 %v2164, %v2409
    %v2411 = vrcp.pop %v2295
    %v2412 = vmul.f32 %v2295, %v2411
    %v2413 = vsub.f32 1.0, %v2412
    %v2414 = vmul.f32 %v2411, %v2413
    %v2415 = vadd.f32 %v2411, %v2414
    %vm2416 = vweird.f32 %v2295
    %vm2417 = vweird.f32 %v2411
    %vm2418 = vmor %vm2416, %vm2417
    %v2419 = vsel %vm2418, %v2411, %v2415
    %v2420 = vand.u32 2147483647, %v2295
    %vm2421 = vcmp.eq.f32.partialorder %v2420, 8.507059e+37
    %v2422 = vand.u32 %v2295, 2147483648
    %v2423 = vor.u32 1.1754944e-38, %v2422
    %v2424 = vsel %vm2421, %v2423, %v2419
    %v2425 = vmul.f32 %v2166, %v2424
    %v2426 = vrcp.pop %v2296
    %v2427 = vmul.f32 %v2296, %v2426
    %v2428 = vsub.f32 1.0, %v2427
    %v2429 = vmul.f32 %v2426, %v2428
    %v2430 = vadd.f32 %v2426, %v2429
    %vm2431 = vweird.f32 %v2296
    %vm2432 = vweird.f32 %v2426
    %vm2433 = vmor %vm2431, %vm2432
    %v2434 = vsel %vm2433, %v2426, %v2430
    %v2435 = vand.u32 2147483647, %v2296
    %vm2436 = vcmp.eq.f32.partialorder %v2435, 8.507059e+37
    %v2437 = vand.u32 %v2296, 2147483648
    %v2438 = vor.u32 1.1754944e-38, %v2437
    %v2439 = vsel %vm2436, %v2438, %v2434
    %v2440 = vmul.f32 %v2168, %v2439
    %v2441 = vrcp.pop %v2297
    %v2442 = vmul.f32 %v2297, %v2441
    %v2443 = vsub.f32 1.0, %v2442
    %v2444 = vmul.f32 %v2441, %v2443
    %v2445 = vadd.f32 %v2441, %v2444
    %vm2446 = vweird.f32 %v2297
    %vm2447 = vweird.f32 %v2441
    %vm2448 = vmor %vm2446, %vm2447
    %v2449 = vsel %vm2448, %v2441, %v2445
    %v2450 = vand.u32 2147483647, %v2297
    %vm2451 = vcmp.eq.f32.partialorder %v2450, 8.507059e+37
    %v2452 = vand.u32 %v2297, 2147483648
    %v2453 = vor.u32 1.1754944e-38, %v2452
    %v2454 = vsel %vm2451, %v2453, %v2449
    %v2455 = vmul.f32 %v2170, %v2454
    %v2456 = vrcp.pop %v2298
    %v2457 = vmul.f32 %v2298, %v2456
    %v2458 = vsub.f32 1.0, %v2457
    %v2459 = vmul.f32 %v2456, %v2458
    %v2460 = vadd.f32 %v2456, %v2459
    %vm2461 = vweird.f32 %v2298
    %vm2462 = vweird.f32 %v2456
    %vm2463 = vmor %vm2461, %vm2462
    %v2464 = vsel %vm2463, %v2456, %v2460
    %v2465 = vand.u32 2147483647, %v2298
    %vm2466 = vcmp.eq.f32.partialorder %v2465, 8.507059e+37
    %v2467 = vand.u32 %v2298, 2147483648
    %v2468 = vor.u32 1.1754944e-38, %v2467
    %v2469 = vsel %vm2466, %v2468, %v2464
    %v2470 = vmul.f32 %v2172, %v2469
    %v2471 = vrcp.pop %v2299
    %v2472 = vmul.f32 %v2299, %v2471
    %v2473 = vsub.f32 1.0, %v2472
    %v2474 = vmul.f32 %v2471, %v2473
    %v2475 = vadd.f32 %v2471, %v2474
    %vm2476 = vweird.f32 %v2299
    %vm2477 = vweird.f32 %v2471
    %vm2478 = vmor %vm2476, %vm2477
    %v2479 = vsel %vm2478, %v2471, %v2475
    %v2480 = vand.u32 2147483647, %v2299
    %vm2481 = vcmp.eq.f32.partialorder %v2480, 8.507059e+37
    %v2482 = vand.u32 %v2299, 2147483648
    %v2483 = vor.u32 1.1754944e-38, %v2482
    %v2484 = vsel %vm2481, %v2483, %v2479
    %v2485 = vmul.f32 %v2174, %v2484
    %v2486 = vrcp.pop %v2300
    %v2487 = vmul.f32 %v2300, %v2486
    %v2488 = vsub.f32 1.0, %v2487
    %v2489 = vmul.f32 %v2486, %v2488
    %v2490 = vadd.f32 %v2486, %v2489
    %vm2491 = vweird.f32 %v2300
    %vm2492 = vweird.f32 %v2486
    %vm2493 = vmor %vm2491, %vm2492
    %v2494 = vsel %vm2493, %v2486, %v2490
    %v2495 = vand.u32 2147483647, %v2300
    %vm2496 = vcmp.eq.f32.partialorder %v2495, 8.507059e+37
    %v2497 = vand.u32 %v2300, 2147483648
    %v2498 = vor.u32 1.1754944e-38, %v2497
    %v2499 = vsel %vm2496, %v2498, %v2494
    %v2500 = vmul.f32 %v2176, %v2499
    %v2501 = vrcp.pop %v2301
    %v2502 = vmul.f32 %v2301, %v2501
    %v2503 = vsub.f32 1.0, %v2502
    %v2504 = vmul.f32 %v2501, %v2503
    %v2505 = vadd.f32 %v2501, %v2504
    %vm2506 = vweird.f32 %v2301
    %vm2507 = vweird.f32 %v2501
    %vm2508 = vmor %vm2506, %vm2507
    %v2509 = vsel %vm2508, %v2501, %v2505
    %v2510 = vand.u32 2147483647, %v2301
    %vm2511 = vcmp.eq.f32.partialorder %v2510, 8.507059e+37
    %v2512 = vand.u32 %v2301, 2147483648
    %v2513 = vor.u32 1.1754944e-38, %v2512
    %v2514 = vsel %vm2511, %v2513, %v2509
    %v2515 = vmul.f32 %v2178, %v2514
    %v2516 = vrcp.pop %v2302
    %v2517 = vmul.f32 %v2302, %v2516
    %v2518 = vsub.f32 1.0, %v2517
    %v2519 = vmul.f32 %v2516, %v2518
    %v2520 = vadd.f32 %v2516, %v2519
    %vm2521 = vweird.f32 %v2302
    %vm2522 = vweird.f32 %v2516
    %vm2523 = vmor %vm2521, %vm2522
    %v2524 = vsel %vm2523, %v2516, %v2520
    %v2525 = vand.u32 2147483647, %v2302
    %vm2526 = vcmp.eq.f32.partialorder %v2525, 8.507059e+37
    %v2527 = vand.u32 %v2302, 2147483648
    %v2528 = vor.u32 1.1754944e-38, %v2527
    %v2529 = vsel %vm2526, %v2528, %v2524
    %v2530 = vmul.f32 %v2180, %v2529
    %v2531 = vrcp.pop %v2303
    %v2532 = vmul.f32 %v2303, %v2531
    %v2533 = vsub.f32 1.0, %v2532
    %v2534 = vmul.f32 %v2531, %v2533
    %v2535 = vadd.f32 %v2531, %v2534
    %vm2536 = vweird.f32 %v2303
    %vm2537 = vweird.f32 %v2531
    %vm2538 = vmor %vm2536, %vm2537
    %v2539 = vsel %vm2538, %v2531, %v2535
    %v2540 = vand.u32 2147483647, %v2303
    %vm2541 = vcmp.eq.f32.partialorder %v2540, 8.507059e+37
    %v2542 = vand.u32 %v2303, 2147483648
    %v2543 = vor.u32 1.1754944e-38, %v2542
    %v2544 = vsel %vm2541, %v2543, %v2539
    %v2545 = vmul.f32 %v2182, %v2544
    %v2546 = vrcp.pop %v2304
    %v2547 = vmul.f32 %v2304, %v2546
    %v2548 = vsub.f32 1.0, %v2547
    %v2549 = vmul.f32 %v2546, %v2548
    %v2550 = vadd.f32 %v2546, %v2549
    %vm2551 = vweird.f32 %v2304
    %vm2552 = vweird.f32 %v2546
    %vm2553 = vmor %vm2551, %vm2552
    %v2554 = vsel %vm2553, %v2546, %v2550
    %v2555 = vand.u32 2147483647, %v2304
    %vm2556 = vcmp.eq.f32.partialorder %v2555, 8.507059e+37
    %v2557 = vand.u32 %v2304, 2147483648
    %v2558 = vor.u32 1.1754944e-38, %v2557
    %v2559 = vsel %vm2556, %v2558, %v2554
    %v2560 = vmul.f32 %v2184, %v2559
    %2562 = vset.pattern.permute.xlu0 0
    %2563 = vperm.xlu0 %2562, %v2335
    %v2564 = vpop.permute.xlu0 %2563
    %2567 = vset.pattern.permute.xlu0 0
    %2568 = vperm.xlu0 %2567, %v2350
    %v2569 = vpop.permute.xlu0 %2568
    %2572 = vset.pattern.permute.xlu0 0
    %2573 = vperm.xlu0 %2572, %v2365
    %v2574 = vpop.permute.xlu0 %2573
    %2577 = vset.pattern.permute.xlu0 0
    %2578 = vperm.xlu0 %2577, %v2380
    %v2579 = vpop.permute.xlu0 %2578
    %2582 = vset.pattern.permute.xlu0 0
    %2583 = vperm.xlu0 %2582, %v2395
    %v2584 = vpop.permute.xlu0 %2583
    %2587 = vset.pattern.permute.xlu0 0
    %2588 = vperm.xlu0 %2587, %v2410
    %v2589 = vpop.permute.xlu0 %2588
    %2592 = vset.pattern.permute.xlu0 0
    %2593 = vperm.xlu0 %2592, %v2425
    %v2594 = vpop.permute.xlu0 %2593
    %2597 = vset.pattern.permute.xlu0 0
    %2598 = vperm.xlu0 %2597, %v2440
    %v2599 = vpop.permute.xlu0 %2598
    %2602 = vset.pattern.permute.xlu0 0
    %2603 = vperm.xlu0 %2602, %v2455
    %v2604 = vpop.permute.xlu0 %2603
    %2607 = vset.pattern.permute.xlu0 0
    %2608 = vperm.xlu0 %2607, %v2470
    %v2609 = vpop.permute.xlu0 %2608
    %2612 = vset.pattern.permute.xlu0 0
    %2613 = vperm.xlu0 %2612, %v2485
    %v2614 = vpop.permute.xlu0 %2613
    %2617 = vset.pattern.permute.xlu0 0
    %2618 = vperm.xlu0 %2617, %v2500
    %v2619 = vpop.permute.xlu0 %2618
    %2622 = vset.pattern.permute.xlu0 0
    %2623 = vperm.xlu0 %2622, %v2515
    %v2624 = vpop.permute.xlu0 %2623
    %2627 = vset.pattern.permute.xlu0 0
    %2628 = vperm.xlu0 %2627, %v2530
    %v2629 = vpop.permute.xlu0 %2628
    %2632 = vset.pattern.permute.xlu0 0
    %2633 = vperm.xlu0 %2632, %v2545
    %v2634 = vpop.permute.xlu0 %2633
    %2637 = vset.pattern.permute.xlu0 0
    %2638 = vperm.xlu0 %2637, %v2560
    %v2639 = vpop.permute.xlu0 %2638
    %v2641 = vmul.f32 %v2564, %v1916
    %v2642 = vmul.f32 %v2569, %v1916
    %v2643 = vmul.f32 %v2574, %v1916
    %v2644 = vmul.f32 %v2579, %v1916
    %v2645 = vmul.f32 %v2584, %v1916
    %v2646 = vmul.f32 %v2589, %v1916
    %v2647 = vmul.f32 %v2594, %v1916
    %v2648 = vmul.f32 %v2599, %v1916
    %v2649 = vmul.f32 %v2604, %v1919
    %v2650 = vmul.f32 %v2609, %v1919
    %v2651 = vmul.f32 %v2614, %v1919
    %v2652 = vmul.f32 %v2619, %v1919
    %v2653 = vmul.f32 %v2624, %v1919
    %v2654 = vmul.f32 %v2629, %v1919
    %v2655 = vmul.f32 %v2634, %v1919
    %v2656 = vmul.f32 %v2639, %v1919
    %vm2657 = vcmask 326816
    %v2658 = vsel %vm2657, %v2641, 0.0
    %v2659 = vrot.slane %v2658, 4
    %v2660 = vadd.f32 %v2658, %v2659
    %v2661 = vrot.slane %v2660, 2
    %v2662 = vadd.f32 %v2660, %v2661
    %v2663 = vrot.slane %v2662, 1
    %v2664 = vadd.f32 %v2662, %v2663
    %v2665 = vsel %vm2657, %v2642, 0.0
    %v2666 = vrot.slane %v2665, 4
    %v2667 = vadd.f32 %v2665, %v2666
    %v2668 = vrot.slane %v2667, 2
    %v2669 = vadd.f32 %v2667, %v2668
    %v2670 = vrot.slane %v2669, 1
    %v2671 = vadd.f32 %v2669, %v2670
    %v2672 = vsel %vm2657, %v2643, 0.0
    %v2673 = vrot.slane %v2672, 4
    %v2674 = vadd.f32 %v2672, %v2673
    %v2675 = vrot.slane %v2674, 2
    %v2676 = vadd.f32 %v2674, %v2675
    %v2677 = vrot.slane %v2676, 1
    %v2678 = vadd.f32 %v2676, %v2677
    %v2679 = vsel %vm2657, %v2644, 0.0
    %v2680 = vrot.slane %v2679, 4
    %v2681 = vadd.f32 %v2679, %v2680
    %v2682 = vrot.slane %v2681, 2
    %v2683 = vadd.f32 %v2681, %v2682
    %v2684 = vrot.slane %v2683, 1
    %v2685 = vadd.f32 %v2683, %v2684
    %v2686 = vsel %vm2657, %v2645, 0.0
    %v2687 = vrot.slane %v2686, 4
    %v2688 = vadd.f32 %v2686, %v2687
    %v2689 = vrot.slane %v2688, 2
    %v2690 = vadd.f32 %v2688, %v2689
    %v2691 = vrot.slane %v2690, 1
    %v2692 = vadd.f32 %v2690, %v2691
    %v2693 = vsel %vm2657, %v2646, 0.0
    %v2694 = vrot.slane %v2693, 4
    %v2695 = vadd.f32 %v2693, %v2694
    %v2696 = vrot.slane %v2695, 2
    %v2697 = vadd.f32 %v2695, %v2696
    %v2698 = vrot.slane %v2697, 1
    %v2699 = vadd.f32 %v2697, %v2698
    %v2700 = vsel %vm2657, %v2647, 0.0
    %v2701 = vrot.slane %v2700, 4
    %v2702 = vadd.f32 %v2700, %v2701
    %v2703 = vrot.slane %v2702, 2
    %v2704 = vadd.f32 %v2702, %v2703
    %v2705 = vrot.slane %v2704, 1
    %v2706 = vadd.f32 %v2704, %v2705
    %v2707 = vsel %vm2657, %v2648, 0.0
    %v2708 = vrot.slane %v2707, 4
    %v2709 = vadd.f32 %v2707, %v2708
    %v2710 = vrot.slane %v2709, 2
    %v2711 = vadd.f32 %v2709, %v2710
    %v2712 = vrot.slane %v2711, 1
    %v2713 = vadd.f32 %v2711, %v2712
    %v2714 = vsel %vm2657, %v2649, 0.0
    %v2715 = vrot.slane %v2714, 4
    %v2716 = vadd.f32 %v2714, %v2715
    %v2717 = vrot.slane %v2716, 2
    %v2718 = vadd.f32 %v2716, %v2717
    %v2719 = vrot.slane %v2718, 1
    %v2720 = vadd.f32 %v2718, %v2719
    %v2721 = vsel %vm2657, %v2650, 0.0
    %v2722 = vrot.slane %v2721, 4
    %v2723 = vadd.f32 %v2721, %v2722
    %v2724 = vrot.slane %v2723, 2
    %v2725 = vadd.f32 %v2723, %v2724
    %v2726 = vrot.slane %v2725, 1
    %v2727 = vadd.f32 %v2725, %v2726
    %v2728 = vsel %vm2657, %v2651, 0.0
    %v2729 = vrot.slane %v2728, 4
    %v2730 = vadd.f32 %v2728, %v2729
    %v2731 = vrot.slane %v2730, 2
    %v2732 = vadd.f32 %v2730, %v2731
    %v2733 = vrot.slane %v2732, 1
    %v2734 = vadd.f32 %v2732, %v2733
    %v2735 = vsel %vm2657, %v2652, 0.0
    %v2736 = vrot.slane %v2735, 4
    %v2737 = vadd.f32 %v2735, %v2736
    %v2738 = vrot.slane %v2737, 2
    %v2739 = vadd.f32 %v2737, %v2738
    %v2740 = vrot.slane %v2739, 1
    %v2741 = vadd.f32 %v2739, %v2740
    %v2742 = vsel %vm2657, %v2653, 0.0
    %v2743 = vrot.slane %v2742, 4
    %v2744 = vadd.f32 %v2742, %v2743
    %v2745 = vrot.slane %v2744, 2
    %v2746 = vadd.f32 %v2744, %v2745
    %v2747 = vrot.slane %v2746, 1
    %v2748 = vadd.f32 %v2746, %v2747
    %v2749 = vsel %vm2657, %v2654, 0.0
    %v2750 = vrot.slane %v2749, 4
    %v2751 = vadd.f32 %v2749, %v2750
    %v2752 = vrot.slane %v2751, 2
    %v2753 = vadd.f32 %v2751, %v2752
    %v2754 = vrot.slane %v2753, 1
    %v2755 = vadd.f32 %v2753, %v2754
    %v2756 = vsel %vm2657, %v2655, 0.0
    %v2757 = vrot.slane %v2756, 4
    %v2758 = vadd.f32 %v2756, %v2757
    %v2759 = vrot.slane %v2758, 2
    %v2760 = vadd.f32 %v2758, %v2759
    %v2761 = vrot.slane %v2760, 1
    %v2762 = vadd.f32 %v2760, %v2761
    %v2763 = vsel %vm2657, %v2656, 0.0
    %v2764 = vrot.slane %v2763, 4
    %v2765 = vadd.f32 %v2763, %v2764
    %v2766 = vrot.slane %v2765, 2
    %v2767 = vadd.f32 %v2765, %v2766
    %v2768 = vrot.slane %v2767, 1
    %v2769 = vadd.f32 %v2767, %v2768
    %v2770 = vld [vmem:[%s11] sm:$0xff]
    %v2771 = vld [vmem:[%s11 + $0x8] sm:$0xff]
    %v2772 = vld [vmem:[%s11 + $0x10] sm:$0xf]
    %v2773 = vld [vmem:[%s12] sm:$0x1]
    %v2775 = vperm.slane %v2773, 0
    %v2793 = vsel %vm979, %v2671, %v2664
    %v2794 = vsel %vm981, %v2678, %v2793
    %v2795 = vsel %vm983, %v2685, %v2794
    %v2796 = vsel %vm985, %v2692, %v2795
    %v2797 = vsel %vm987, %v2699, %v2796
    %v2798 = vsel %vm989, %v2706, %v2797
    %v2799 = vsel %vm991, %v2713, %v2798
    %v2800 = vsel %vm979, %v2727, %v2720
    %v2801 = vsel %vm981, %v2734, %v2800
    %v2802 = vsel %vm983, %v2741, %v2801
    %v2803 = vsel %vm985, %v2748, %v2802
    %v2804 = vsel %vm987, %v2755, %v2803
    %v2805 = vsel %vm989, %v2762, %v2804
    %v2806 = vsel %vm991, %v2769, %v2805
    %2807 = vrot.lane.b32.xlu0 %v2799, 108
    %v2808 = vpop.permute.xlu0 %2807
    %2809 = vrot.lane.b32.xlu0 %v2806, 108
    %v2810 = vpop.permute.xlu0 %2809
    %v2811 = vsel %vm757, %v2808, 0
    %v2813 = vsel %vm757, %v2810, 0
    %v2816 = vsel %vm757, %v2770, 0
    %v2819 = vsel %vm757, %v2771, 0
    %v2822 = vsel %vm757, %v2772, 0
    %2824 = vmatpush.xpose.msra.mxu0 0.0
    %2825 = vmatpush.xpose.msra.mxu0 0.0
    %2826 = vmatpush.xpose.msra.mxu0 0.0
    %2827 = vmatpush.xpose.msra.mxu0 0.0
    %2828 = vmatpush.xpose.msra.mxu0 0.0
    %2829 = vmatpush.xpose.msra.mxu0 0.0
    %2830 = vmatpush.xpose.msra.mxu0 0.0
    %2831 = vmatpush.xpose.msra.mxu0 0.0
    %2832 = vmatpush.xpose.msra.mxu0 0.0
    %2833 = vmatpush.xpose.msra.mxu0 0.0
    %2834 = vmatpush.xpose.msra.mxu0 0.0
    %2835 = vmatpush.xpose.msra.mxu0 0.0
    %2836 = vmatpush.xpose.msra.mxu0 0.0
    %2837 = vmatpush.xpose.msra.mxu0 %v2822
    %2838 = vmatpush.xpose.msra.mxu0 %v2819
    %2839 = vmatpush.xpose.msra.mxu0 %v2816
    %2840 = vmatmul.f32.gmra.mxu0 %v2811
    %v2841 = vpop.f32.mrf.mxu0
    %v2842 = vadd.f32 %v2775, %v2841
    %2843 = vmatmul.f32.gmra.mxu0 %v2813
    %v2844 = vpop.f32.mrf.mxu0
    %v2845 = vadd.f32 %v2775, %v2844
    %2846 = vdwg.mxu0
    %v2847 = vadd.f32 %v1810, %v2842
    %v2848 = vadd.f32 %v1811, %v2845
    %v2849 = vsel %vm757, %v2847, 0.0
    %2850 = vadd.xlane.f32.xlu0 %v2849
    %v2851 = vpop.xlane.xlu0 %2850
    %v2852 = vsel %vm757, %v2848, 0.0
    %2853 = vadd.xlane.f32.xlu0 %v2852
    %v2854 = vpop.xlane.xlu0 %2853
    %v2855 = vmul.f32 %v2851, %v1767
    %v2856 = vmul.f32 %v2854, %v1767
    %v2857 = vsub.f32 %v2847, %v2855
    %v2858 = vsub.f32 %v2848, %v2856
    %v2859 = vmul.f32 %v2857, %v2857
    %v2860 = vmul.f32 %v2858, %v2858
    %v2861 = vsel %vm757, %v2859, 0.0
    %2862 = vadd.xlane.f32.xlu0 %v2861
    %v2863 = vpop.xlane.xlu0 %2862
    %v2864 = vsel %vm757, %v2860, 0.0
    %2865 = vadd.xlane.f32.xlu0 %v2864
    %v2866 = vpop.xlane.xlu0 %2865
    %v2867 = vmul.f32 %v2863, %v1767
    %v2868 = vmul.f32 %v2866, %v1767
    %v2869 = vadd.f32 %v2867, 1e-05
    %v2870 = vadd.f32 %v2868, 1e-05
    %v2871 = vrsqrt.pop %v2869
    %v2872 = vmul.f32 %v2871, %v2869
    %v2873 = vmul.f32 %v2872, %v2871
    %v2874 = vmul.f32 0.5, %v2873
    %v2875 = vsub.f32 1.5, %v2874
    %v2876 = vmul.f32 %v2871, %v2875
    %vm2877 = vweird.f32 %v2869
    %vm2878 = vweird.f32 %v2871
    %vm2879 = vmor %vm2877, %vm2878
    %v2880 = vsel %vm2879, %v2871, %v2876
    %v2881 = vrsqrt.pop %v2870
    %v2882 = vmul.f32 %v2881, %v2870
    %v2883 = vmul.f32 %v2882, %v2881
    %v2884 = vmul.f32 0.5, %v2883
    %v2885 = vsub.f32 1.5, %v2884
    %v2886 = vmul.f32 %v2881, %v2885
    %vm2887 = vweird.f32 %v2870
    %vm2888 = vweird.f32 %v2881
    %vm2889 = vmor %vm2887, %vm2888
    %v2890 = vsel %vm2889, %v2881, %v2886
    %v2891 = vmul.f32 %v2857, %v2880
    %v2892 = vmul.f32 %v2858, %v2890
    %v2893 = vperm.slane %v743, 1
    %v2894 = vmul.f32 %v2891, %v2893
    %v2895 = vmul.f32 %v2892, %v2893
    %v2896 = vperm.slane %v744, 1
    %v2897 = vadd.f32 %v2894, %v2896
    %v2898 = vadd.f32 %v2895, %v2896
    %v2899 = vld [vmem:[%s13] sm:$0xff]
    %v2900 = vld [vmem:[%s13 + $0x8] sm:$0xff]
    %v2901 = vld [vmem:[%s13 + $0x10] sm:$0xff]
    %v2902 = vld [vmem:[%s13 + $0x18] sm:$0xff]
    %v2903 = vld [vmem:[%s14] sm:$0x1]
    %v2905 = vperm.slane %v2903, 0
    %v2908 = vsel %vm757, %v2897, 0
    %v2911 = vsel %vm757, %v2898, 0
    %v2914 = vsel %vm757, %v2899, 0
    %v2917 = vsel %vm757, %v2900, 0
    %v2920 = vsel %vm757, %v2901, 0
    %v2923 = vsel %vm757, %v2902, 0
    %2925 = vmatpush.xpose.msra.mxu0 0.0
    %2926 = vmatpush.xpose.msra.mxu0 0.0
    %2927 = vmatpush.xpose.msra.mxu0 0.0
    %2928 = vmatpush.xpose.msra.mxu0 0.0
    %2929 = vmatpush.xpose.msra.mxu0 0.0
    %2930 = vmatpush.xpose.msra.mxu0 0.0
    %2931 = vmatpush.xpose.msra.mxu0 0.0
    %2932 = vmatpush.xpose.msra.mxu0 0.0
    %2933 = vmatpush.xpose.msra.mxu0 0.0
    %2934 = vmatpush.xpose.msra.mxu0 0.0
    %2935 = vmatpush.xpose.msra.mxu0 0.0
    %2936 = vmatpush.xpose.msra.mxu0 0.0
    %2937 = vmatpush.xpose.msra.mxu0 %v2923
    %2938 = vmatpush.xpose.msra.mxu0 %v2920
    %2939 = vmatpush.xpose.msra.mxu0 %v2917
    %2940 = vmatpush.xpose.msra.mxu0 %v2914
    %2941 = vmatmul.f32.gmra.mxu0 %v2908
    %v2942 = vpop.f32.mrf.mxu0
    %v2943 = vadd.f32 %v2905, %v2942
    %2944 = vmatmul.f32.gmra.mxu0 %v2911
    %v2945 = vpop.f32.mrf.mxu0
    %v2946 = vadd.f32 %v2905, %v2945
    %2947 = vdwg.mxu0
    %v2948 = vmax.f32 %v2943, 0.0
    %v2949 = vmax.f32 %v2946, 0.0
    %v2950 = vld [vmem:[%s15] sm:$0xff]
    %v2951 = vld [vmem:[%s15 + $0x8] sm:$0xff]
    %v2952 = vld [vmem:[%s15 + $0x10] sm:$0xf]
    %v2953 = vld [vmem:[%s16] sm:$0x1]
    %v2955 = vperm.slane %v2953, 0
    %vm2957 = vcmask 261120
    %v2959 = vsel %vm2957, %v2948, 0
    %v2962 = vsel %vm2957, %v2949, 0
    %v2965 = vsel %vm2957, %v2950, 0
    %v2968 = vsel %vm2957, %v2951, 0
    %v2971 = vsel %vm2957, %v2952, 0
    %2973 = vmatpush.xpose.msra.mxu0 0.0
    %2974 = vmatpush.xpose.msra.mxu0 0.0
    %2975 = vmatpush.xpose.msra.mxu0 0.0
    %2976 = vmatpush.xpose.msra.mxu0 0.0
    %2977 = vmatpush.xpose.msra.mxu0 0.0
    %2978 = vmatpush.xpose.msra.mxu0 0.0
    %2979 = vmatpush.xpose.msra.mxu0 0.0
    %2980 = vmatpush.xpose.msra.mxu0 0.0
    %2981 = vmatpush.xpose.msra.mxu0 0.0
    %2982 = vmatpush.xpose.msra.mxu0 0.0
    %2983 = vmatpush.xpose.msra.mxu0 0.0
    %2984 = vmatpush.xpose.msra.mxu0 0.0
    %2985 = vmatpush.xpose.msra.mxu0 0.0
    %2986 = vmatpush.xpose.msra.mxu0 %v2971
    %2987 = vmatpush.xpose.msra.mxu0 %v2968
    %2988 = vmatpush.xpose.msra.mxu0 %v2965
    %2989 = vmatmul.f32.gmra.mxu0 %v2959
    %v2990 = vpop.f32.mrf.mxu0
    %v2991 = vadd.f32 %v2955, %v2990
    %2992 = vmatmul.f32.gmra.mxu0 %v2962
    %v2993 = vpop.f32.mrf.mxu0
    %v2994 = vadd.f32 %v2955, %v2993
    %2995 = vdwg.mxu0
    %v2996 = vadd.f32 %v2897, %v2991
    %v2997 = vadd.f32 %v2898, %v2994
    %v2998 = vsel %vm757, %v2996, 0.0
    %2999 = vadd.xlane.f32.xlu0 %v2998
    %v3000 = vpop.xlane.xlu0 %2999
    %v3001 = vsel %vm757, %v2997, 0.0
    %3002 = vadd.xlane.f32.xlu0 %v3001
    %v3003 = vpop.xlane.xlu0 %3002
    %v3004 = vmul.f32 %v3000, %v1767
    %v3005 = vmul.f32 %v3003, %v1767
    %v3006 = vsub.f32 %v2996, %v3004
    %v3007 = vsub.f32 %v2997, %v3005
    %v3008 = vmul.f32 %v3006, %v3006
    %v3009 = vmul.f32 %v3007, %v3007
    %v3010 = vsel %vm757, %v3008, 0.0
    %3011 = vadd.xlane.f32.xlu0 %v3010
    %v3012 = vpop.xlane.xlu0 %3011
    %v3013 = vsel %vm757, %v3009, 0.0
    %3014 = vadd.xlane.f32.xlu0 %v3013
    %v3015 = vpop.xlane.xlu0 %3014
    %v3016 = vmul.f32 %v3012, %v1767
    %v3017 = vmul.f32 %v3015, %v1767
    %v3018 = vadd.f32 %v3016, 1e-05
    %v3019 = vadd.f32 %v3017, 1e-05
    %v3020 = vrsqrt.pop %v3018
    %v3021 = vmul.f32 %v3020, %v3018
    %v3022 = vmul.f32 %v3021, %v3020
    %v3023 = vmul.f32 0.5, %v3022
    %v3024 = vsub.f32 1.5, %v3023
    %v3025 = vmul.f32 %v3020, %v3024
    %vm3026 = vweird.f32 %v3018
    %vm3027 = vweird.f32 %v3020
    %vm3028 = vmor %vm3026, %vm3027
    %v3029 = vsel %vm3028, %v3020, %v3025
    %v3030 = vrsqrt.pop %v3019
    %v3031 = vmul.f32 %v3030, %v3019
    %v3032 = vmul.f32 %v3031, %v3030
    %v3033 = vmul.f32 0.5, %v3032
    %v3034 = vsub.f32 1.5, %v3033
    %v3035 = vmul.f32 %v3030, %v3034
    %vm3036 = vweird.f32 %v3019
    %vm3037 = vweird.f32 %v3030
    %vm3038 = vmor %vm3036, %vm3037
    %v3039 = vsel %vm3038, %v3030, %v3035
    %v3040 = vmul.f32 %v3006, %v3029
    %v3041 = vmul.f32 %v3007, %v3039
    %v3042 = vperm.slane %v743, 2
    %v3043 = vmul.f32 %v3040, %v3042
    %v3044 = vmul.f32 %v3041, %v3042
    %v3045 = vperm.slane %v744, 2
    %v3046 = vadd.f32 %v3043, %v3045
    %v3047 = vadd.f32 %v3044, %v3045
    %s3048 = scalar_lea.vmem %s17, 4
    %v3049 = vld [vmem:[%s3048] sm:$0x7]
    %s3050 = scalar_lea.vmem %s18, 4
    %v3051 = vld [vmem:[%s3050] sm:$0x7]
    %s3052 = scalar_lea.vmem %s5, 64
    %v3053 = vld [vmem:[%s3052] sm:$0xff]
    %v3054 = vld [vmem:[%s3052 + $0x8] sm:$0xff]
    %v3055 = vld [vmem:[%s3052 + $0x10] sm:$0xff]
    %v3056 = vld [vmem:[%s3052 + $0x18] sm:$0xff]
    %v3057 = vld [vmem:[%s3052 + $0x20] sm:$0xff]
    %v3058 = vld [vmem:[%s3052 + $0x28] sm:$0xff]
    %v3059 = vld [vmem:[%s3052 + $0x30] sm:$0xff]
    %v3060 = vld [vmem:[%s3052 + $0x38] sm:$0xf]
    %s3061 = scalar_lea.vmem %s6, 1
    %v3062 = vld [vmem:[%s3061] sm:$0x1]
    %v3064 = vperm.slane %v3062, 0
    %v3067 = vsel %vm757, %v3046, 0
    %v3070 = vsel %vm757, %v3047, 0
    %v3073 = vsel %vm757, %v3053, 0
    %v3076 = vsel %vm757, %v3054, 0
    %v3079 = vsel %vm757, %v3055, 0
    %v3082 = vsel %vm757, %v3056, 0
    %v3085 = vsel %vm757, %v3057, 0
    %v3088 = vsel %vm757, %v3058, 0
    %v3091 = vsel %vm757, %v3059, 0
    %v3094 = vsel %vm757, %v3060, 0
    %3096 = vmatpush.xpose.msra.mxu0 0.0
    %3097 = vmatpush.xpose.msra.mxu0 0.0
    %3098 = vmatpush.xpose.msra.mxu0 0.0
    %3099 = vmatpush.xpose.msra.mxu0 0.0
    %3100 = vmatpush.xpose.msra.mxu0 0.0
    %3101 = vmatpush.xpose.msra.mxu0 0.0
    %3102 = vmatpush.xpose.msra.mxu0 0.0
    %3103 = vmatpush.xpose.msra.mxu0 0.0
    %3104 = vmatpush.xpose.msra.mxu0 %v3094
    %3105 = vmatpush.xpose.msra.mxu0 %v3091
    %3106 = vmatpush.xpose.msra.mxu0 %v3088
    %3107 = vmatpush.xpose.msra.mxu0 %v3085
    %3108 = vmatpush.xpose.msra.mxu0 %v3082
    %3109 = vmatpush.xpose.msra.mxu0 %v3079
    %3110 = vmatpush.xpose.msra.mxu0 %v3076
    %3111 = vmatpush.xpose.msra.mxu0 %v3073
    %3112 = vmatmul.f32.gmra.mxu0 %v3067
    %v3113 = vpop.f32.mrf.mxu0
    %v3114 = vadd.f32 %v3064, %v3113
    %3115 = vmatmul.f32.gmra.mxu0 %v3070
    %v3116 = vpop.f32.mrf.mxu0
    %v3117 = vadd.f32 %v3064, %v3116
    %3118 = vdwg.mxu0
    %v3121 = vrot.slane %v3114, 1
    %v3122 = vrot.slane %v3114, 2
    %v3123 = vrot.slane %v3114, 3
    %v3124 = vrot.slane %v3114, 4
    %v3125 = vrot.slane %v3114, 5
    %v3126 = vrot.slane %v3114, 6
    %v3127 = vrot.slane %v3114, 7
    %v3128 = vrot.slane %v3117, 1
    %v3129 = vrot.slane %v3117, 2
    %v3130 = vrot.slane %v3117, 3
    %v3131 = vrot.slane %v3117, 4
    %v3132 = vrot.slane %v3117, 5
    %v3133 = vrot.slane %v3117, 6
    %v3134 = vrot.slane %v3117, 7
    %v3135 = vperm.slane %v3114, 0
    %v3136 = vperm.slane %v3121, 0
    %v3137 = vperm.slane %v3122, 0
    %v3138 = vperm.slane %v3123, 0
    %v3139 = vperm.slane %v3124, 0
    %v3140 = vperm.slane %v3125, 0
    %v3141 = vperm.slane %v3126, 0
    %v3142 = vperm.slane %v3127, 0
    %v3143 = vperm.slane %v3117, 0
    %v3144 = vperm.slane %v3128, 0
    %v3145 = vperm.slane %v3129, 0
    %v3146 = vperm.slane %v3130, 0
    %v3147 = vperm.slane %v3131, 0
    %v3148 = vperm.slane %v3132, 0
    %v3149 = vperm.slane %v3133, 0
    %v3150 = vperm.slane %v3134, 0
    %3167 = vrot.lane.b32.xlu0 %v3114, 108
    %v3168 = vpop.permute.xlu0 %3167
    %3169 = vrot.lane.b32.xlu0 %v3117, 108
    %v3170 = vpop.permute.xlu0 %3169
    %v3173 = vmul.f32 %v3135, %v3168
    %v3174 = vmul.f32 %v3136, %v3168
    %v3175 = vmul.f32 %v3137, %v3168
    %v3176 = vmul.f32 %v3138, %v3168
    %v3177 = vmul.f32 %v3139, %v3168
    %v3178 = vmul.f32 %v3140, %v3168
    %v3179 = vmul.f32 %v3141, %v3168
    %v3180 = vmul.f32 %v3142, %v3168
    %v3181 = vmul.f32 %v3143, %v3170
    %v3182 = vmul.f32 %v3144, %v3170
    %v3183 = vmul.f32 %v3145, %v3170
    %v3184 = vmul.f32 %v3146, %v3170
    %v3185 = vmul.f32 %v3147, %v3170
    %v3186 = vmul.f32 %v3148, %v3170
    %v3187 = vmul.f32 %v3149, %v3170
    %v3188 = vmul.f32 %v3150, %v3170
    %v3189 = vsel %vm757, %v3173, 0.0
    %3190 = vadd.xlane.f32.xlu0 %v3189
    %v3191 = vpop.xlane.xlu0 %3190
    %v3192 = vsel %vm757, %v3174, 0.0
    %3193 = vadd.xlane.f32.xlu0 %v3192
    %v3194 = vpop.xlane.xlu0 %3193
    %v3195 = vsel %vm757, %v3175, 0.0
    %3196 = vadd.xlane.f32.xlu0 %v3195
    %v3197 = vpop.xlane.xlu0 %3196
    %v3198 = vsel %vm757, %v3176, 0.0
    %3199 = vadd.xlane.f32.xlu0 %v3198
    %v3200 = vpop.xlane.xlu0 %3199
    %v3201 = vsel %vm757, %v3177, 0.0
    %3202 = vadd.xlane.f32.xlu0 %v3201
    %v3203 = vpop.xlane.xlu0 %3202
    %v3204 = vsel %vm757, %v3178, 0.0
    %3205 = vadd.xlane.f32.xlu0 %v3204
    %v3206 = vpop.xlane.xlu0 %3205
    %v3207 = vsel %vm757, %v3179, 0.0
    %3208 = vadd.xlane.f32.xlu0 %v3207
    %v3209 = vpop.xlane.xlu0 %3208
    %v3210 = vsel %vm757, %v3180, 0.0
    %3211 = vadd.xlane.f32.xlu0 %v3210
    %v3212 = vpop.xlane.xlu0 %3211
    %v3213 = vsel %vm757, %v3181, 0.0
    %3214 = vadd.xlane.f32.xlu0 %v3213
    %v3215 = vpop.xlane.xlu0 %3214
    %v3216 = vsel %vm757, %v3182, 0.0
    %3217 = vadd.xlane.f32.xlu0 %v3216
    %v3218 = vpop.xlane.xlu0 %3217
    %v3219 = vsel %vm757, %v3183, 0.0
    %3220 = vadd.xlane.f32.xlu0 %v3219
    %v3221 = vpop.xlane.xlu0 %3220
    %v3222 = vsel %vm757, %v3184, 0.0
    %3223 = vadd.xlane.f32.xlu0 %v3222
    %v3224 = vpop.xlane.xlu0 %3223
    %v3225 = vsel %vm757, %v3185, 0.0
    %3226 = vadd.xlane.f32.xlu0 %v3225
    %v3227 = vpop.xlane.xlu0 %3226
    %v3228 = vsel %vm757, %v3186, 0.0
    %3229 = vadd.xlane.f32.xlu0 %v3228
    %v3230 = vpop.xlane.xlu0 %3229
    %v3231 = vsel %vm757, %v3187, 0.0
    %3232 = vadd.xlane.f32.xlu0 %v3231
    %v3233 = vpop.xlane.xlu0 %3232
    %v3234 = vsel %vm757, %v3188, 0.0
    %3235 = vadd.xlane.f32.xlu0 %v3234
    %v3236 = vpop.xlane.xlu0 %3235
    %v3237 = vmul.f32 %v3191, 0.2236068
    %v3238 = vmul.f32 %v3194, 0.2236068
    %v3239 = vmul.f32 %v3197, 0.2236068
    %v3240 = vmul.f32 %v3200, 0.2236068
    %v3241 = vmul.f32 %v3203, 0.2236068
    %v3242 = vmul.f32 %v3206, 0.2236068
    %v3243 = vmul.f32 %v3209, 0.2236068
    %v3244 = vmul.f32 %v3212, 0.2236068
    %v3245 = vmul.f32 %v3215, 0.2236068
    %v3246 = vmul.f32 %v3218, 0.2236068
    %v3247 = vmul.f32 %v3221, 0.2236068
    %v3248 = vmul.f32 %v3224, 0.2236068
    %v3249 = vmul.f32 %v3227, 0.2236068
    %v3250 = vmul.f32 %v3230, 0.2236068
    %v3251 = vmul.f32 %v3233, 0.2236068
    %v3252 = vmul.f32 %v3236, 0.2236068
    %v3269 = vperm.slane %v3237, %v962
    %v3270 = vperm.slane %v3238, %v962
    %v3271 = vperm.slane %v3239, %v962
    %v3272 = vperm.slane %v3240, %v962
    %v3273 = vperm.slane %v3241, %v962
    %v3274 = vperm.slane %v3242, %v962
    %v3275 = vperm.slane %v3243, %v962
    %v3276 = vperm.slane %v3244, %v962
    %v3277 = vperm.slane %v3245, %v962
    %v3278 = vperm.slane %v3246, %v962
    %v3279 = vperm.slane %v3247, %v962
    %v3280 = vperm.slane %v3248, %v962
    %v3281 = vperm.slane %v3249, %v962
    %v3282 = vperm.slane %v3250, %v962
    %v3283 = vperm.slane %v3251, %v962
    %v3284 = vperm.slane %v3252, %v962
    %v3285 = vsel %vm979, %v3270, %v3269
    %v3286 = vsel %vm981, %v3271, %v3285
    %v3287 = vsel %vm983, %v3272, %v3286
    %v3288 = vsel %vm985, %v3273, %v3287
    %v3289 = vsel %vm987, %v3274, %v3288
    %v3290 = vsel %vm989, %v3275, %v3289
    %v3291 = vsel %vm991, %v3276, %v3290
    %v3292 = vsel %vm979, %v3278, %v3277
    %v3293 = vsel %vm981, %v3279, %v3292
    %v3294 = vsel %vm983, %v3280, %v3293
    %v3295 = vsel %vm985, %v3281, %v3294
    %v3296 = vsel %vm987, %v3282, %v3295
    %v3297 = vsel %vm989, %v3283, %v3296
    %v3298 = vsel %vm991, %v3284, %v3297
    %v3301 = vsel %vm1002, %v3291, -inf
    %3302 = vmax.xlane.f32.xlu0 %v3301
    %v3303 = vpop.xlane.xlu0 %3302
    %v3304 = vsel %vm1002, %v3298, -inf
    %3305 = vmax.xlane.f32.xlu0 %v3304
    %v3306 = vpop.xlane.xlu0 %3305
    %v3309 = vperm.slane %v3303, 0
    %v3310 = vperm.slane %v3303, 1
    %v3311 = vperm.slane %v3303, 2
    %v3312 = vperm.slane %v3303, 3
    %v3313 = vperm.slane %v3303, 4
    %v3314 = vperm.slane %v3303, 5
    %v3315 = vperm.slane %v3303, 6
    %v3316 = vperm.slane %v3303, 7
    %v3317 = vperm.slane %v3306, 0
    %v3318 = vperm.slane %v3306, 1
    %v3319 = vperm.slane %v3306, 2
    %v3320 = vperm.slane %v3306, 3
    %v3321 = vperm.slane %v3306, 4
    %v3322 = vperm.slane %v3306, 5
    %v3323 = vperm.slane %v3306, 6
    %v3324 = vperm.slane %v3306, 7
    %v3341 = vsub.f32 %v3237, %v3309
    %v3342 = vsub.f32 %v3238, %v3310
    %v3343 = vsub.f32 %v3239, %v3311
    %v3344 = vsub.f32 %v3240, %v3312
    %v3345 = vsub.f32 %v3241, %v3313
    %v3346 = vsub.f32 %v3242, %v3314
    %v3347 = vsub.f32 %v3243, %v3315
    %v3348 = vsub.f32 %v3244, %v3316
    %v3349 = vsub.f32 %v3245, %v3317
    %v3350 = vsub.f32 %v3246, %v3318
    %v3351 = vsub.f32 %v3247, %v3319
    %v3352 = vsub.f32 %v3248, %v3320
    %v3353 = vsub.f32 %v3249, %v3321
    %v3354 = vsub.f32 %v3250, %v3322
    %v3355 = vsub.f32 %v3251, %v3323
    %v3356 = vsub.f32 %v3252, %v3324
    %v3357 = vmul.f32 %v3341, 1.442695
    %v3358 = vpow.pop %v3357
    %v3359 = vmul.f32 %v3342, 1.442695
    %v3360 = vpow.pop %v3359
    %v3361 = vmul.f32 %v3343, 1.442695
    %v3362 = vpow.pop %v3361
    %v3363 = vmul.f32 %v3344, 1.442695
    %v3364 = vpow.pop %v3363
    %v3365 = vmul.f32 %v3345, 1.442695
    %v3366 = vpow.pop %v3365
    %v3367 = vmul.f32 %v3346, 1.442695
    %v3368 = vpow.pop %v3367
    %v3369 = vmul.f32 %v3347, 1.442695
    %v3370 = vpow.pop %v3369
    %v3371 = vmul.f32 %v3348, 1.442695
    %v3372 = vpow.pop %v3371
    %v3373 = vmul.f32 %v3349, 1.442695
    %v3374 = vpow.pop %v3373
    %v3375 = vmul.f32 %v3350, 1.442695
    %v3376 = vpow.pop %v3375
    %v3377 = vmul.f32 %v3351, 1.442695
    %v3378 = vpow.pop %v3377
    %v3379 = vmul.f32 %v3352, 1.442695
    %v3380 = vpow.pop %v3379
    %v3381 = vmul.f32 %v3353, 1.442695
    %v3382 = vpow.pop %v3381
    %v3383 = vmul.f32 %v3354, 1.442695
    %v3384 = vpow.pop %v3383
    %v3385 = vmul.f32 %v3355, 1.442695
    %v3386 = vpow.pop %v3385
    %v3387 = vmul.f32 %v3356, 1.442695
    %v3388 = vpow.pop %v3387
    %3405 = vset.pattern.permute.xlu0 0
    %3406 = vperm.xlu0 %3405, %v3358
    %v3407 = vpop.permute.xlu0 %3406
    %3408 = vset.pattern.permute.xlu0 0
    %3409 = vperm.xlu0 %3408, %v3360
    %v3410 = vpop.permute.xlu0 %3409
    %3411 = vset.pattern.permute.xlu0 0
    %3412 = vperm.xlu0 %3411, %v3362
    %v3413 = vpop.permute.xlu0 %3412
    %3414 = vset.pattern.permute.xlu0 0
    %3415 = vperm.xlu0 %3414, %v3364
    %v3416 = vpop.permute.xlu0 %3415
    %3417 = vset.pattern.permute.xlu0 0
    %3418 = vperm.xlu0 %3417, %v3366
    %v3419 = vpop.permute.xlu0 %3418
    %3420 = vset.pattern.permute.xlu0 0
    %3421 = vperm.xlu0 %3420, %v3368
    %v3422 = vpop.permute.xlu0 %3421
    %3423 = vset.pattern.permute.xlu0 0
    %3424 = vperm.xlu0 %3423, %v3370
    %v3425 = vpop.permute.xlu0 %3424
    %3426 = vset.pattern.permute.xlu0 0
    %3427 = vperm.xlu0 %3426, %v3372
    %v3428 = vpop.permute.xlu0 %3427
    %3429 = vset.pattern.permute.xlu0 0
    %3430 = vperm.xlu0 %3429, %v3374
    %v3431 = vpop.permute.xlu0 %3430
    %3432 = vset.pattern.permute.xlu0 0
    %3433 = vperm.xlu0 %3432, %v3376
    %v3434 = vpop.permute.xlu0 %3433
    %3435 = vset.pattern.permute.xlu0 0
    %3436 = vperm.xlu0 %3435, %v3378
    %v3437 = vpop.permute.xlu0 %3436
    %3438 = vset.pattern.permute.xlu0 0
    %3439 = vperm.xlu0 %3438, %v3380
    %v3440 = vpop.permute.xlu0 %3439
    %3441 = vset.pattern.permute.xlu0 0
    %3442 = vperm.xlu0 %3441, %v3382
    %v3443 = vpop.permute.xlu0 %3442
    %3444 = vset.pattern.permute.xlu0 0
    %3445 = vperm.xlu0 %3444, %v3384
    %v3446 = vpop.permute.xlu0 %3445
    %3447 = vset.pattern.permute.xlu0 0
    %3448 = vperm.xlu0 %3447, %v3386
    %v3449 = vpop.permute.xlu0 %3448
    %3450 = vset.pattern.permute.xlu0 0
    %3451 = vperm.xlu0 %3450, %v3388
    %v3452 = vpop.permute.xlu0 %3451
    %v3453 = vperm.slane %v3407, %v962
    %v3454 = vperm.slane %v3410, %v962
    %v3455 = vperm.slane %v3413, %v962
    %v3456 = vperm.slane %v3416, %v962
    %v3457 = vperm.slane %v3419, %v962
    %v3458 = vperm.slane %v3422, %v962
    %v3459 = vperm.slane %v3425, %v962
    %v3460 = vperm.slane %v3428, %v962
    %v3461 = vperm.slane %v3431, %v962
    %v3462 = vperm.slane %v3434, %v962
    %v3463 = vperm.slane %v3437, %v962
    %v3464 = vperm.slane %v3440, %v962
    %v3465 = vperm.slane %v3443, %v962
    %v3466 = vperm.slane %v3446, %v962
    %v3467 = vperm.slane %v3449, %v962
    %v3468 = vperm.slane %v3452, %v962
    %v3469 = vsel %vm979, %v3454, %v3453
    %v3470 = vsel %vm981, %v3455, %v3469
    %v3471 = vsel %vm983, %v3456, %v3470
    %v3472 = vsel %vm985, %v3457, %v3471
    %v3473 = vsel %vm987, %v3458, %v3472
    %v3474 = vsel %vm989, %v3459, %v3473
    %v3475 = vsel %vm991, %v3460, %v3474
    %v3476 = vsel %vm979, %v3462, %v3461
    %v3477 = vsel %vm981, %v3463, %v3476
    %v3478 = vsel %vm983, %v3464, %v3477
    %v3479 = vsel %vm985, %v3465, %v3478
    %v3480 = vsel %vm987, %v3466, %v3479
    %v3481 = vsel %vm989, %v3467, %v3480
    %v3482 = vsel %vm991, %v3468, %v3481
    %v3485 = vsel %vm1002, %v3475, 0.0
    %3486 = vadd.xlane.f32.xlu0 %v3485
    %v3487 = vpop.xlane.xlu0 %3486
    %v3488 = vsel %vm1002, %v3482, 0.0
    %3489 = vadd.xlane.f32.xlu0 %v3488
    %v3490 = vpop.xlane.xlu0 %3489
    %v3493 = vperm.slane %v3487, 0
    %v3494 = vperm.slane %v3487, 1
    %v3495 = vperm.slane %v3487, 2
    %v3496 = vperm.slane %v3487, 3
    %v3497 = vperm.slane %v3487, 4
    %v3498 = vperm.slane %v3487, 5
    %v3499 = vperm.slane %v3487, 6
    %v3500 = vperm.slane %v3487, 7
    %v3501 = vperm.slane %v3490, 0
    %v3502 = vperm.slane %v3490, 1
    %v3503 = vperm.slane %v3490, 2
    %v3504 = vperm.slane %v3490, 3
    %v3505 = vperm.slane %v3490, 4
    %v3506 = vperm.slane %v3490, 5
    %v3507 = vperm.slane %v3490, 6
    %v3508 = vperm.slane %v3490, 7
    %v3525 = vrcp.pop %v3493
    %v3526 = vmul.f32 %v3493, %v3525
    %v3527 = vsub.f32 1.0, %v3526
    %v3528 = vmul.f32 %v3525, %v3527
    %v3529 = vadd.f32 %v3525, %v3528
    %vm3530 = vweird.f32 %v3493
    %vm3531 = vweird.f32 %v3525
    %vm3532 = vmor %vm3530, %vm3531
    %v3533 = vsel %vm3532, %v3525, %v3529
    %v3534 = vand.u32 2147483647, %v3493
    %vm3535 = vcmp.eq.f32.partialorder %v3534, 8.507059e+37
    %v3536 = vand.u32 %v3493, 2147483648
    %v3537 = vor.u32 1.1754944e-38, %v3536
    %v3538 = vsel %vm3535, %v3537, %v3533
    %v3539 = vmul.f32 %v3358, %v3538
    %v3540 = vrcp.pop %v3494
    %v3541 = vmul.f32 %v3494, %v3540
    %v3542 = vsub.f32 1.0, %v3541
    %v3543 = vmul.f32 %v3540, %v3542
    %v3544 = vadd.f32 %v3540, %v3543
    %vm3545 = vweird.f32 %v3494
    %vm3546 = vweird.f32 %v3540
    %vm3547 = vmor %vm3545, %vm3546
    %v3548 = vsel %vm3547, %v3540, %v3544
    %v3549 = vand.u32 2147483647, %v3494
    %vm3550 = vcmp.eq.f32.partialorder %v3549, 8.507059e+37
    %v3551 = vand.u32 %v3494, 2147483648
    %v3552 = vor.u32 1.1754944e-38, %v3551
    %v3553 = vsel %vm3550, %v3552, %v3548
    %v3554 = vmul.f32 %v3360, %v3553
    %v3555 = vrcp.pop %v3495
    %v3556 = vmul.f32 %v3495, %v3555
    %v3557 = vsub.f32 1.0, %v3556
    %v3558 = vmul.f32 %v3555, %v3557
    %v3559 = vadd.f32 %v3555, %v3558
    %vm3560 = vweird.f32 %v3495
    %vm3561 = vweird.f32 %v3555
    %vm3562 = vmor %vm3560, %vm3561
    %v3563 = vsel %vm3562, %v3555, %v3559
    %v3564 = vand.u32 2147483647, %v3495
    %vm3565 = vcmp.eq.f32.partialorder %v3564, 8.507059e+37
    %v3566 = vand.u32 %v3495, 2147483648
    %v3567 = vor.u32 1.1754944e-38, %v3566
    %v3568 = vsel %vm3565, %v3567, %v3563
    %v3569 = vmul.f32 %v3362, %v3568
    %v3570 = vrcp.pop %v3496
    %v3571 = vmul.f32 %v3496, %v3570
    %v3572 = vsub.f32 1.0, %v3571
    %v3573 = vmul.f32 %v3570, %v3572
    %v3574 = vadd.f32 %v3570, %v3573
    %vm3575 = vweird.f32 %v3496
    %vm3576 = vweird.f32 %v3570
    %vm3577 = vmor %vm3575, %vm3576
    %v3578 = vsel %vm3577, %v3570, %v3574
    %v3579 = vand.u32 2147483647, %v3496
    %vm3580 = vcmp.eq.f32.partialorder %v3579, 8.507059e+37
    %v3581 = vand.u32 %v3496, 2147483648
    %v3582 = vor.u32 1.1754944e-38, %v3581
    %v3583 = vsel %vm3580, %v3582, %v3578
    %v3584 = vmul.f32 %v3364, %v3583
    %v3585 = vrcp.pop %v3497
    %v3586 = vmul.f32 %v3497, %v3585
    %v3587 = vsub.f32 1.0, %v3586
    %v3588 = vmul.f32 %v3585, %v3587
    %v3589 = vadd.f32 %v3585, %v3588
    %vm3590 = vweird.f32 %v3497
    %vm3591 = vweird.f32 %v3585
    %vm3592 = vmor %vm3590, %vm3591
    %v3593 = vsel %vm3592, %v3585, %v3589
    %v3594 = vand.u32 2147483647, %v3497
    %vm3595 = vcmp.eq.f32.partialorder %v3594, 8.507059e+37
    %v3596 = vand.u32 %v3497, 2147483648
    %v3597 = vor.u32 1.1754944e-38, %v3596
    %v3598 = vsel %vm3595, %v3597, %v3593
    %v3599 = vmul.f32 %v3366, %v3598
    %v3600 = vrcp.pop %v3498
    %v3601 = vmul.f32 %v3498, %v3600
    %v3602 = vsub.f32 1.0, %v3601
    %v3603 = vmul.f32 %v3600, %v3602
    %v3604 = vadd.f32 %v3600, %v3603
    %vm3605 = vweird.f32 %v3498
    %vm3606 = vweird.f32 %v3600
    %vm3607 = vmor %vm3605, %vm3606
    %v3608 = vsel %vm3607, %v3600, %v3604
    %v3609 = vand.u32 2147483647, %v3498
    %vm3610 = vcmp.eq.f32.partialorder %v3609, 8.507059e+37
    %v3611 = vand.u32 %v3498, 2147483648
    %v3612 = vor.u32 1.1754944e-38, %v3611
    %v3613 = vsel %vm3610, %v3612, %v3608
    %v3614 = vmul.f32 %v3368, %v3613
    %v3615 = vrcp.pop %v3499
    %v3616 = vmul.f32 %v3499, %v3615
    %v3617 = vsub.f32 1.0, %v3616
    %v3618 = vmul.f32 %v3615, %v3617
    %v3619 = vadd.f32 %v3615, %v3618
    %vm3620 = vweird.f32 %v3499
    %vm3621 = vweird.f32 %v3615
    %vm3622 = vmor %vm3620, %vm3621
    %v3623 = vsel %vm3622, %v3615, %v3619
    %v3624 = vand.u32 2147483647, %v3499
    %vm3625 = vcmp.eq.f32.partialorder %v3624, 8.507059e+37
    %v3626 = vand.u32 %v3499, 2147483648
    %v3627 = vor.u32 1.1754944e-38, %v3626
    %v3628 = vsel %vm3625, %v3627, %v3623
    %v3629 = vmul.f32 %v3370, %v3628
    %v3630 = vrcp.pop %v3500
    %v3631 = vmul.f32 %v3500, %v3630
    %v3632 = vsub.f32 1.0, %v3631
    %v3633 = vmul.f32 %v3630, %v3632
    %v3634 = vadd.f32 %v3630, %v3633
    %vm3635 = vweird.f32 %v3500
    %vm3636 = vweird.f32 %v3630
    %vm3637 = vmor %vm3635, %vm3636
    %v3638 = vsel %vm3637, %v3630, %v3634
    %v3639 = vand.u32 2147483647, %v3500
    %vm3640 = vcmp.eq.f32.partialorder %v3639, 8.507059e+37
    %v3641 = vand.u32 %v3500, 2147483648
    %v3642 = vor.u32 1.1754944e-38, %v3641
    %v3643 = vsel %vm3640, %v3642, %v3638
    %v3644 = vmul.f32 %v3372, %v3643
    %v3645 = vrcp.pop %v3501
    %v3646 = vmul.f32 %v3501, %v3645
    %v3647 = vsub.f32 1.0, %v3646
    %v3648 = vmul.f32 %v3645, %v3647
    %v3649 = vadd.f32 %v3645, %v3648
    %vm3650 = vweird.f32 %v3501
    %vm3651 = vweird.f32 %v3645
    %vm3652 = vmor %vm3650, %vm3651
    %v3653 = vsel %vm3652, %v3645, %v3649
    %v3654 = vand.u32 2147483647, %v3501
    %vm3655 = vcmp.eq.f32.partialorder %v3654, 8.507059e+37
    %v3656 = vand.u32 %v3501, 2147483648
    %v3657 = vor.u32 1.1754944e-38, %v3656
    %v3658 = vsel %vm3655, %v3657, %v3653
    %v3659 = vmul.f32 %v3374, %v3658
    %v3660 = vrcp.pop %v3502
    %v3661 = vmul.f32 %v3502, %v3660
    %v3662 = vsub.f32 1.0, %v3661
    %v3663 = vmul.f32 %v3660, %v3662
    %v3664 = vadd.f32 %v3660, %v3663
    %vm3665 = vweird.f32 %v3502
    %vm3666 = vweird.f32 %v3660
    %vm3667 = vmor %vm3665, %vm3666
    %v3668 = vsel %vm3667, %v3660, %v3664
    %v3669 = vand.u32 2147483647, %v3502
    %vm3670 = vcmp.eq.f32.partialorder %v3669, 8.507059e+37
    %v3671 = vand.u32 %v3502, 2147483648
    %v3672 = vor.u32 1.1754944e-38, %v3671
    %v3673 = vsel %vm3670, %v3672, %v3668
    %v3674 = vmul.f32 %v3376, %v3673
    %v3675 = vrcp.pop %v3503
    %v3676 = vmul.f32 %v3503, %v3675
    %v3677 = vsub.f32 1.0, %v3676
    %v3678 = vmul.f32 %v3675, %v3677
    %v3679 = vadd.f32 %v3675, %v3678
    %vm3680 = vweird.f32 %v3503
    %vm3681 = vweird.f32 %v3675
    %vm3682 = vmor %vm3680, %vm3681
    %v3683 = vsel %vm3682, %v3675, %v3679
    %v3684 = vand.u32 2147483647, %v3503
    %vm3685 = vcmp.eq.f32.partialorder %v3684, 8.507059e+37
    %v3686 = vand.u32 %v3503, 2147483648
    %v3687 = vor.u32 1.1754944e-38, %v3686
    %v3688 = vsel %vm3685, %v3687, %v3683
    %v3689 = vmul.f32 %v3378, %v3688
    %v3690 = vrcp.pop %v3504
    %v3691 = vmul.f32 %v3504, %v3690
    %v3692 = vsub.f32 1.0, %v3691
    %v3693 = vmul.f32 %v3690, %v3692
    %v3694 = vadd.f32 %v3690, %v3693
    %vm3695 = vweird.f32 %v3504
    %vm3696 = vweird.f32 %v3690
    %vm3697 = vmor %vm3695, %vm3696
    %v3698 = vsel %vm3697, %v3690, %v3694
    %v3699 = vand.u32 2147483647, %v3504
    %vm3700 = vcmp.eq.f32.partialorder %v3699, 8.507059e+37
    %v3701 = vand.u32 %v3504, 2147483648
    %v3702 = vor.u32 1.1754944e-38, %v3701
    %v3703 = vsel %vm3700, %v3702, %v3698
    %v3704 = vmul.f32 %v3380, %v3703
    %v3705 = vrcp.pop %v3505
    %v3706 = vmul.f32 %v3505, %v3705
    %v3707 = vsub.f32 1.0, %v3706
    %v3708 = vmul.f32 %v3705, %v3707
    %v3709 = vadd.f32 %v3705, %v3708
    %vm3710 = vweird.f32 %v3505
    %vm3711 = vweird.f32 %v3705
    %vm3712 = vmor %vm3710, %vm3711
    %v3713 = vsel %vm3712, %v3705, %v3709
    %v3714 = vand.u32 2147483647, %v3505
    %vm3715 = vcmp.eq.f32.partialorder %v3714, 8.507059e+37
    %v3716 = vand.u32 %v3505, 2147483648
    %v3717 = vor.u32 1.1754944e-38, %v3716
    %v3718 = vsel %vm3715, %v3717, %v3713
    %v3719 = vmul.f32 %v3382, %v3718
    %v3720 = vrcp.pop %v3506
    %v3721 = vmul.f32 %v3506, %v3720
    %v3722 = vsub.f32 1.0, %v3721
    %v3723 = vmul.f32 %v3720, %v3722
    %v3724 = vadd.f32 %v3720, %v3723
    %vm3725 = vweird.f32 %v3506
    %vm3726 = vweird.f32 %v3720
    %vm3727 = vmor %vm3725, %vm3726
    %v3728 = vsel %vm3727, %v3720, %v3724
    %v3729 = vand.u32 2147483647, %v3506
    %vm3730 = vcmp.eq.f32.partialorder %v3729, 8.507059e+37
    %v3731 = vand.u32 %v3506, 2147483648
    %v3732 = vor.u32 1.1754944e-38, %v3731
    %v3733 = vsel %vm3730, %v3732, %v3728
    %v3734 = vmul.f32 %v3384, %v3733
    %v3735 = vrcp.pop %v3507
    %v3736 = vmul.f32 %v3507, %v3735
    %v3737 = vsub.f32 1.0, %v3736
    %v3738 = vmul.f32 %v3735, %v3737
    %v3739 = vadd.f32 %v3735, %v3738
    %vm3740 = vweird.f32 %v3507
    %vm3741 = vweird.f32 %v3735
    %vm3742 = vmor %vm3740, %vm3741
    %v3743 = vsel %vm3742, %v3735, %v3739
    %v3744 = vand.u32 2147483647, %v3507
    %vm3745 = vcmp.eq.f32.partialorder %v3744, 8.507059e+37
    %v3746 = vand.u32 %v3507, 2147483648
    %v3747 = vor.u32 1.1754944e-38, %v3746
    %v3748 = vsel %vm3745, %v3747, %v3743
    %v3749 = vmul.f32 %v3386, %v3748
    %v3750 = vrcp.pop %v3508
    %v3751 = vmul.f32 %v3508, %v3750
    %v3752 = vsub.f32 1.0, %v3751
    %v3753 = vmul.f32 %v3750, %v3752
    %v3754 = vadd.f32 %v3750, %v3753
    %vm3755 = vweird.f32 %v3508
    %vm3756 = vweird.f32 %v3750
    %vm3757 = vmor %vm3755, %vm3756
    %v3758 = vsel %vm3757, %v3750, %v3754
    %v3759 = vand.u32 2147483647, %v3508
    %vm3760 = vcmp.eq.f32.partialorder %v3759, 8.507059e+37
    %v3761 = vand.u32 %v3508, 2147483648
    %v3762 = vor.u32 1.1754944e-38, %v3761
    %v3763 = vsel %vm3760, %v3762, %v3758
    %v3764 = vmul.f32 %v3388, %v3763
    %3766 = vset.pattern.permute.xlu0 0
    %3767 = vperm.xlu0 %3766, %v3539
    %v3768 = vpop.permute.xlu0 %3767
    %3771 = vset.pattern.permute.xlu0 0
    %3772 = vperm.xlu0 %3771, %v3554
    %v3773 = vpop.permute.xlu0 %3772
    %3776 = vset.pattern.permute.xlu0 0
    %3777 = vperm.xlu0 %3776, %v3569
    %v3778 = vpop.permute.xlu0 %3777
    %3781 = vset.pattern.permute.xlu0 0
    %3782 = vperm.xlu0 %3781, %v3584
    %v3783 = vpop.permute.xlu0 %3782
    %3786 = vset.pattern.permute.xlu0 0
    %3787 = vperm.xlu0 %3786, %v3599
    %v3788 = vpop.permute.xlu0 %3787
    %3791 = vset.pattern.permute.xlu0 0
    %3792 = vperm.xlu0 %3791, %v3614
    %v3793 = vpop.permute.xlu0 %3792
    %3796 = vset.pattern.permute.xlu0 0
    %3797 = vperm.xlu0 %3796, %v3629
    %v3798 = vpop.permute.xlu0 %3797
    %3801 = vset.pattern.permute.xlu0 0
    %3802 = vperm.xlu0 %3801, %v3644
    %v3803 = vpop.permute.xlu0 %3802
    %3806 = vset.pattern.permute.xlu0 0
    %3807 = vperm.xlu0 %3806, %v3659
    %v3808 = vpop.permute.xlu0 %3807
    %3811 = vset.pattern.permute.xlu0 0
    %3812 = vperm.xlu0 %3811, %v3674
    %v3813 = vpop.permute.xlu0 %3812
    %3816 = vset.pattern.permute.xlu0 0
    %3817 = vperm.xlu0 %3816, %v3689
    %v3818 = vpop.permute.xlu0 %3817
    %3821 = vset.pattern.permute.xlu0 0
    %3822 = vperm.xlu0 %3821, %v3704
    %v3823 = vpop.permute.xlu0 %3822
    %3826 = vset.pattern.permute.xlu0 0
    %3827 = vperm.xlu0 %3826, %v3719
    %v3828 = vpop.permute.xlu0 %3827
    %3831 = vset.pattern.permute.xlu0 0
    %3832 = vperm.xlu0 %3831, %v3734
    %v3833 = vpop.permute.xlu0 %3832
    %3836 = vset.pattern.permute.xlu0 0
    %3837 = vperm.xlu0 %3836, %v3749
    %v3838 = vpop.permute.xlu0 %3837
    %3841 = vset.pattern.permute.xlu0 0
    %3842 = vperm.xlu0 %3841, %v3764
    %v3843 = vpop.permute.xlu0 %3842
    %v3845 = vmul.f32 %v3768, %v3114
    %v3846 = vmul.f32 %v3773, %v3114
    %v3847 = vmul.f32 %v3778, %v3114
    %v3848 = vmul.f32 %v3783, %v3114
    %v3849 = vmul.f32 %v3788, %v3114
    %v3850 = vmul.f32 %v3793, %v3114
    %v3851 = vmul.f32 %v3798, %v3114
    %v3852 = vmul.f32 %v3803, %v3114
    %v3853 = vmul.f32 %v3808, %v3117
    %v3854 = vmul.f32 %v3813, %v3117
    %v3855 = vmul.f32 %v3818, %v3117
    %v3856 = vmul.f32 %v3823, %v3117
    %v3857 = vmul.f32 %v3828, %v3117
    %v3858 = vmul.f32 %v3833, %v3117
    %v3859 = vmul.f32 %v3838, %v3117
    %v3860 = vmul.f32 %v3843, %v3117
    %v3861 = vsel %vm1563, %v3845, 0.0
    %v3862 = vrot.slane %v3861, 4
    %v3863 = vadd.f32 %v3861, %v3862
    %v3864 = vrot.slane %v3863, 2
    %v3865 = vadd.f32 %v3863, %v3864
    %v3866 = vrot.slane %v3865, 1
    %v3867 = vadd.f32 %v3865, %v3866
    %v3868 = vsel %vm1563, %v3846, 0.0
    %v3869 = vrot.slane %v3868, 4
    %v3870 = vadd.f32 %v3868, %v3869
    %v3871 = vrot.slane %v3870, 2
    %v3872 = vadd.f32 %v3870, %v3871
    %v3873 = vrot.slane %v3872, 1
    %v3874 = vadd.f32 %v3872, %v3873
    %v3875 = vsel %vm1563, %v3847, 0.0
    %v3876 = vrot.slane %v3875, 4
    %v3877 = vadd.f32 %v3875, %v3876
    %v3878 = vrot.slane %v3877, 2
    %v3879 = vadd.f32 %v3877, %v3878
    %v3880 = vrot.slane %v3879, 1
    %v3881 = vadd.f32 %v3879, %v3880
    %v3882 = vsel %vm1563, %v3848, 0.0
    %v3883 = vrot.slane %v3882, 4
    %v3884 = vadd.f32 %v3882, %v3883
    %v3885 = vrot.slane %v3884, 2
    %v3886 = vadd.f32 %v3884, %v3885
    %v3887 = vrot.slane %v3886, 1
    %v3888 = vadd.f32 %v3886, %v3887
    %v3889 = vsel %vm1563, %v3849, 0.0
    %v3890 = vrot.slane %v3889, 4
    %v3891 = vadd.f32 %v3889, %v3890
    %v3892 = vrot.slane %v3891, 2
    %v3893 = vadd.f32 %v3891, %v3892
    %v3894 = vrot.slane %v3893, 1
    %v3895 = vadd.f32 %v3893, %v3894
    %v3896 = vsel %vm1563, %v3850, 0.0
    %v3897 = vrot.slane %v3896, 4
    %v3898 = vadd.f32 %v3896, %v3897
    %v3899 = vrot.slane %v3898, 2
    %v3900 = vadd.f32 %v3898, %v3899
    %v3901 = vrot.slane %v3900, 1
    %v3902 = vadd.f32 %v3900, %v3901
    %v3903 = vsel %vm1563, %v3851, 0.0
    %v3904 = vrot.slane %v3903, 4
    %v3905 = vadd.f32 %v3903, %v3904
    %v3906 = vrot.slane %v3905, 2
    %v3907 = vadd.f32 %v3905, %v3906
    %v3908 = vrot.slane %v3907, 1
    %v3909 = vadd.f32 %v3907, %v3908
    %v3910 = vsel %vm1563, %v3852, 0.0
    %v3911 = vrot.slane %v3910, 4
    %v3912 = vadd.f32 %v3910, %v3911
    %v3913 = vrot.slane %v3912, 2
    %v3914 = vadd.f32 %v3912, %v3913
    %v3915 = vrot.slane %v3914, 1
    %v3916 = vadd.f32 %v3914, %v3915
    %v3917 = vsel %vm1563, %v3853, 0.0
    %v3918 = vrot.slane %v3917, 4
    %v3919 = vadd.f32 %v3917, %v3918
    %v3920 = vrot.slane %v3919, 2
    %v3921 = vadd.f32 %v3919, %v3920
    %v3922 = vrot.slane %v3921, 1
    %v3923 = vadd.f32 %v3921, %v3922
    %v3924 = vsel %vm1563, %v3854, 0.0
    %v3925 = vrot.slane %v3924, 4
    %v3926 = vadd.f32 %v3924, %v3925
    %v3927 = vrot.slane %v3926, 2
    %v3928 = vadd.f32 %v3926, %v3927
    %v3929 = vrot.slane %v3928, 1
    %v3930 = vadd.f32 %v3928, %v3929
    %v3931 = vsel %vm1563, %v3855, 0.0
    %v3932 = vrot.slane %v3931, 4
    %v3933 = vadd.f32 %v3931, %v3932
    %v3934 = vrot.slane %v3933, 2
    %v3935 = vadd.f32 %v3933, %v3934
    %v3936 = vrot.slane %v3935, 1
    %v3937 = vadd.f32 %v3935, %v3936
    %v3938 = vsel %vm1563, %v3856, 0.0
    %v3939 = vrot.slane %v3938, 4
    %v3940 = vadd.f32 %v3938, %v3939
    %v3941 = vrot.slane %v3940, 2
    %v3942 = vadd.f32 %v3940, %v3941
    %v3943 = vrot.slane %v3942, 1
    %v3944 = vadd.f32 %v3942, %v3943
    %v3945 = vsel %vm1563, %v3857, 0.0
    %v3946 = vrot.slane %v3945, 4
    %v3947 = vadd.f32 %v3945, %v3946
    %v3948 = vrot.slane %v3947, 2
    %v3949 = vadd.f32 %v3947, %v3948
    %v3950 = vrot.slane %v3949, 1
    %v3951 = vadd.f32 %v3949, %v3950
    %v3952 = vsel %vm1563, %v3858, 0.0
    %v3953 = vrot.slane %v3952, 4
    %v3954 = vadd.f32 %v3952, %v3953
    %v3955 = vrot.slane %v3954, 2
    %v3956 = vadd.f32 %v3954, %v3955
    %v3957 = vrot.slane %v3956, 1
    %v3958 = vadd.f32 %v3956, %v3957
    %v3959 = vsel %vm1563, %v3859, 0.0
    %v3960 = vrot.slane %v3959, 4
    %v3961 = vadd.f32 %v3959, %v3960
    %v3962 = vrot.slane %v3961, 2
    %v3963 = vadd.f32 %v3961, %v3962
    %v3964 = vrot.slane %v3963, 1
    %v3965 = vadd.f32 %v3963, %v3964
    %v3966 = vsel %vm1563, %v3860, 0.0
    %v3967 = vrot.slane %v3966, 4
    %v3968 = vadd.f32 %v3966, %v3967
    %v3969 = vrot.slane %v3968, 2
    %v3970 = vadd.f32 %v3968, %v3969
    %v3971 = vrot.slane %v3970, 1
    %v3972 = vadd.f32 %v3970, %v3971
    %s3973 = scalar_lea.vmem %s7, 24
    %v3974 = vld [vmem:[%s3973] sm:$0xff]
    %v3975 = vld [vmem:[%s3973 + $0x8] sm:$0xff]
    %v3976 = vld [vmem:[%s3973 + $0x10] sm:$0xf]
    %s3977 = scalar_lea.vmem %s8, 1
    %v3978 = vld [vmem:[%s3977] sm:$0x1]
    %v3980 = vperm.slane %v3978, 0
    %v3998 = vsel %vm979, %v3874, %v3867
    %v3999 = vsel %vm981, %v3881, %v3998
    %v4000 = vsel %vm983, %v3888, %v3999
    %v4001 = vsel %vm985, %v3895, %v4000
    %v4002 = vsel %vm987, %v3902, %v4001
    %v4003 = vsel %vm989, %v3909, %v4002
    %v4004 = vsel %vm991, %v3916, %v4003
    %v4005 = vsel %vm979, %v3930, %v3923
    %v4006 = vsel %vm981, %v3937, %v4005
    %v4007 = vsel %vm983, %v3944, %v4006
    %v4008 = vsel %vm985, %v3951, %v4007
    %v4009 = vsel %vm987, %v3958, %v4008
    %v4010 = vsel %vm989, %v3965, %v4009
    %v4011 = vsel %vm991, %v3972, %v4010
    %4012 = vrot.lane.b32.xlu0 %v4004, 88
    %v4013 = vpop.permute.xlu0 %4012
    %4014 = vrot.lane.b32.xlu0 %v4011, 88
    %v4015 = vpop.permute.xlu0 %4014
    %v4016 = vsel %vm757, %v4013, 0
    %v4018 = vsel %vm757, %v4015, 0
    %v4021 = vsel %vm757, %v3974, 0
    %v4024 = vsel %vm757, %v3975, 0
    %v4027 = vsel %vm757, %v3976, 0
    %4029 = vmatpush.xpose.msra.mxu0 0.0
    %4030 = vmatpush.xpose.msra.mxu0 0.0
    %4031 = vmatpush.xpose.msra.mxu0 0.0
    %4032 = vmatpush.xpose.msra.mxu0 0.0
    %4033 = vmatpush.xpose.msra.mxu0 0.0
    %4034 = vmatpush.xpose.msra.mxu0 0.0
    %4035 = vmatpush.xpose.msra.mxu0 0.0
    %4036 = vmatpush.xpose.msra.mxu0 0.0
    %4037 = vmatpush.xpose.msra.mxu0 0.0
    %4038 = vmatpush.xpose.msra.mxu0 0.0
    %4039 = vmatpush.xpose.msra.mxu0 0.0
    %4040 = vmatpush.xpose.msra.mxu0 0.0
    %4041 = vmatpush.xpose.msra.mxu0 0.0
    %4042 = vmatpush.xpose.msra.mxu0 %v4027
    %4043 = vmatpush.xpose.msra.mxu0 %v4024
    %4044 = vmatpush.xpose.msra.mxu0 %v4021
    %4045 = vmatmul.f32.gmra.mxu0 %v4016
    %v4046 = vpop.f32.mrf.mxu0
    %v4047 = vadd.f32 %v3980, %v4046
    %4048 = vmatmul.f32.gmra.mxu0 %v4018
    %v4049 = vpop.f32.mrf.mxu0
    %v4050 = vadd.f32 %v3980, %v4049
    %4051 = vdwg.mxu0
    %v4052 = vadd.f32 %v3046, %v4047
    %v4053 = vadd.f32 %v3047, %v4050
    %v4054 = vsel %vm757, %v4052, 0.0
    %4055 = vadd.xlane.f32.xlu0 %v4054
    %v4056 = vpop.xlane.xlu0 %4055
    %v4057 = vsel %vm757, %v4053, 0.0
    %4058 = vadd.xlane.f32.xlu0 %v4057
    %v4059 = vpop.xlane.xlu0 %4058
    %v4060 = vmul.f32 %v4056, %v1767
    %v4061 = vmul.f32 %v4059, %v1767
    %v4062 = vsub.f32 %v4052, %v4060
    %v4063 = vsub.f32 %v4053, %v4061
    %v4064 = vmul.f32 %v4062, %v4062
    %v4065 = vmul.f32 %v4063, %v4063
    %v4066 = vsel %vm757, %v4064, 0.0
    %4067 = vadd.xlane.f32.xlu0 %v4066
    %v4068 = vpop.xlane.xlu0 %4067
    %v4069 = vsel %vm757, %v4065, 0.0
    %4070 = vadd.xlane.f32.xlu0 %v4069
    %v4071 = vpop.xlane.xlu0 %4070
    %v4072 = vmul.f32 %v4068, %v1767
    %v4073 = vmul.f32 %v4071, %v1767
    %v4074 = vadd.f32 %v4072, 1e-05
    %v4075 = vadd.f32 %v4073, 1e-05
    %v4076 = vrsqrt.pop %v4074
    %v4077 = vmul.f32 %v4076, %v4074
    %v4078 = vmul.f32 %v4077, %v4076
    %v4079 = vmul.f32 0.5, %v4078
    %v4080 = vsub.f32 1.5, %v4079
    %v4081 = vmul.f32 %v4076, %v4080
    %vm4082 = vweird.f32 %v4074
    %vm4083 = vweird.f32 %v4076
    %vm4084 = vmor %vm4082, %vm4083
    %v4085 = vsel %vm4084, %v4076, %v4081
    %v4086 = vrsqrt.pop %v4075
    %v4087 = vmul.f32 %v4086, %v4075
    %v4088 = vmul.f32 %v4087, %v4086
    %v4089 = vmul.f32 0.5, %v4088
    %v4090 = vsub.f32 1.5, %v4089
    %v4091 = vmul.f32 %v4086, %v4090
    %vm4092 = vweird.f32 %v4075
    %vm4093 = vweird.f32 %v4086
    %vm4094 = vmor %vm4092, %vm4093
    %v4095 = vsel %vm4094, %v4086, %v4091
    %v4096 = vmul.f32 %v4062, %v4085
    %v4097 = vmul.f32 %v4063, %v4095
    %v4098 = vperm.slane %v3049, 0
    %v4099 = vmul.f32 %v4096, %v4098
    %v4100 = vmul.f32 %v4097, %v4098
    %v4101 = vperm.slane %v3051, 0
    %v4102 = vadd.f32 %v4099, %v4101
    %v4103 = vadd.f32 %v4100, %v4101
    %s4104 = scalar_lea.vmem %s9, 64
    %v4105 = vld [vmem:[%s4104] sm:$0xff]
    %v4106 = vld [vmem:[%s4104 + $0x8] sm:$0xff]
    %v4107 = vld [vmem:[%s4104 + $0x10] sm:$0xff]
    %v4108 = vld [vmem:[%s4104 + $0x18] sm:$0xff]
    %v4109 = vld [vmem:[%s4104 + $0x20] sm:$0xff]
    %v4110 = vld [vmem:[%s4104 + $0x28] sm:$0xff]
    %v4111 = vld [vmem:[%s4104 + $0x30] sm:$0xff]
    %v4112 = vld [vmem:[%s4104 + $0x38] sm:$0xf]
    %s4113 = scalar_lea.vmem %s10, 1
    %v4114 = vld [vmem:[%s4113] sm:$0x1]
    %v4116 = vperm.slane %v4114, 0
    %v4119 = vsel %vm757, %v4102, 0
    %v4122 = vsel %vm757, %v4103, 0
    %v4125 = vsel %vm757, %v4105, 0
    %v4128 = vsel %vm757, %v4106, 0
    %v4131 = vsel %vm757, %v4107, 0
    %4133 = vmatpush.xpose.msra.mxu0 0.0
    %4134 = vmatpush.xpose.msra.mxu0 0.0
    %4135 = vmatpush.xpose.msra.mxu0 0.0
    %4136 = vmatpush.xpose.msra.mxu0 0.0
    %4137 = vmatpush.xpose.msra.mxu0 0.0
    %4138 = vmatpush.xpose.msra.mxu0 0.0
    %4139 = vmatpush.xpose.msra.mxu0 0.0
    %4140 = vmatpush.xpose.msra.mxu0 0.0
    %4141 = vmatpush.xpose.msra.mxu0 0.0
    %4142 = vmatpush.xpose.msra.mxu0 0.0
    %4143 = vmatpush.xpose.msra.mxu0 0.0
    %4144 = vmatpush.xpose.msra.mxu0 0.0
    %4145 = vmatpush.xpose.msra.mxu0 0.0
    %4146 = vmatpush.xpose.msra.mxu0 %v4131
    %4147 = vmatpush.xpose.msra.mxu0 %v4128
    %4148 = vmatpush.xpose.msra.mxu0 %v4125
    %4149 = vmatmul.f32.gmra.mxu0 %v4119
    %v4150 = vpop.f32.mrf.mxu0
    %v4151 = vadd.f32 %v4116, %v4150
    %4152 = vmatmul.f32.gmra.mxu0 %v4122
    %v4153 = vpop.f32.mrf.mxu0
    %v4154 = vadd.f32 %v4116, %v4153
    %4155 = vdwg.mxu0
    %v4161 = vrot.slane %v4107, 4
    %v4162 = vrot.slane %v4108, 4
    %v4163 = vsel %vm1867, %v4161, %v4162
    %v4164 = vrot.slane %v4109, 4
    %v4165 = vsel %vm1867, %v4162, %v4164
    %v4166 = vrot.slane %v4110, 4
    %v4167 = vsel %vm1867, %v4164, %v4166
    %v4168 = vrot.slane %v4111, 4
    %v4169 = vsel %vm1867, %v4166, %v4168
    %v4170 = vrot.slane %v4112, 4
    %v4171 = vsel %vm1867, %v4168, %v4170
    %4172 = vrot.lane.b32.xlu0 %v4116, 108
    %v4173 = vpop.permute.xlu0 %4172
    %v4175 = vsel %vm757, %v4163, 0
    %v4177 = vsel %vm757, %v4165, 0
    %v4179 = vsel %vm757, %v4167, 0
    %v4181 = vsel %vm757, %v4169, 0
    %v4183 = vsel %vm757, %v4171, 0
    %4185 = vmatpush.xpose.msra.mxu0 0.0
    %4186 = vmatpush.xpose.msra.mxu0 0.0
    %4187 = vmatpush.xpose.msra.mxu0 0.0
    %4188 = vmatpush.xpose.msra.mxu0 0.0
    %4189 = vmatpush.xpose.msra.mxu0 0.0
    %4190 = vmatpush.xpose.msra.mxu0 0.0
    %4191 = vmatpush.xpose.msra.mxu0 0.0
    %4192 = vmatpush.xpose.msra.mxu0 0.0
    %4193 = vmatpush.xpose.msra.mxu0 0.0
    %4194 = vmatpush.xpose.msra.mxu0 0.0
    %4195 = vmatpush.xpose.msra.mxu0 0.0
    %4196 = vmatpush.xpose.msra.mxu0 %v4183
    %4197 = vmatpush.xpose.msra.mxu0 %v4181
    %4198 = vmatpush.xpose.msra.mxu0 %v4179
    %4199 = vmatpush.xpose.msra.mxu0 %v4177
    %4200 = vmatpush.xpose.msra.mxu0 %v4175
    %4201 = vmatmul.f32.gmra.mxu0 %v1883
    %v4202 = vpop.f32.mrf.mxu0
    %v4203 = vadd.f32 %v4173, %v4202
    %4204 = vmatmul.f32.gmra.mxu0 %v1886
    %v4205 = vpop.f32.mrf.mxu0
    %v4206 = vadd.f32 %v4173, %v4205
    %4207 = vdwg.mxu0
    %v4210 = vrot.slane %v4151, 1
    %v4211 = vrot.slane %v4151, 2
    %v4212 = vrot.slane %v4151, 3
    %v4213 = vrot.slane %v4151, 4
    %v4214 = vrot.slane %v4151, 5
    %v4215 = vrot.slane %v4151, 6
    %v4216 = vrot.slane %v4151, 7
    %v4217 = vrot.slane %v4154, 1
    %v4218 = vrot.slane %v4154, 2
    %v4219 = vrot.slane %v4154, 3
    %v4220 = vrot.slane %v4154, 4
    %v4221 = vrot.slane %v4154, 5
    %v4222 = vrot.slane %v4154, 6
    %v4223 = vrot.slane %v4154, 7
    %v4224 = vperm.slane %v4151, 0
    %v4225 = vperm.slane %v4210, 0
    %v4226 = vperm.slane %v4211, 0
    %v4227 = vperm.slane %v4212, 0
    %v4228 = vperm.slane %v4213, 0
    %v4229 = vperm.slane %v4214, 0
    %v4230 = vperm.slane %v4215, 0
    %v4231 = vperm.slane %v4216, 0
    %v4232 = vperm.slane %v4154, 0
    %v4233 = vperm.slane %v4217, 0
    %v4234 = vperm.slane %v4218, 0
    %v4235 = vperm.slane %v4219, 0
    %v4236 = vperm.slane %v4220, 0
    %v4237 = vperm.slane %v4221, 0
    %v4238 = vperm.slane %v4222, 0
    %v4239 = vperm.slane %v4223, 0
    %v4256 = vmul.f32 %v4224, %v4203
    %v4257 = vmul.f32 %v4225, %v4203
    %v4258 = vmul.f32 %v4226, %v4203
    %v4259 = vmul.f32 %v4227, %v4203
    %v4260 = vmul.f32 %v4228, %v4203
    %v4261 = vmul.f32 %v4229, %v4203
    %v4262 = vmul.f32 %v4230, %v4203
    %v4263 = vmul.f32 %v4231, %v4203
    %v4264 = vmul.f32 %v4232, %v4206
    %v4265 = vmul.f32 %v4233, %v4206
    %v4266 = vmul.f32 %v4234, %v4206
    %v4267 = vmul.f32 %v4235, %v4206
    %v4268 = vmul.f32 %v4236, %v4206
    %v4269 = vmul.f32 %v4237, %v4206
    %v4270 = vmul.f32 %v4238, %v4206
    %v4271 = vmul.f32 %v4239, %v4206
    %v4272 = vsel %vm757, %v4256, 0.0
    %4273 = vadd.xlane.f32.xlu0 %v4272
    %v4274 = vpop.xlane.xlu0 %4273
    %v4275 = vsel %vm757, %v4257, 0.0
    %4276 = vadd.xlane.f32.xlu0 %v4275
    %v4277 = vpop.xlane.xlu0 %4276
    %v4278 = vsel %vm757, %v4258, 0.0
    %4279 = vadd.xlane.f32.xlu0 %v4278
    %v4280 = vpop.xlane.xlu0 %4279
    %v4281 = vsel %vm757, %v4259, 0.0
    %4282 = vadd.xlane.f32.xlu0 %v4281
    %v4283 = vpop.xlane.xlu0 %4282
    %v4284 = vsel %vm757, %v4260, 0.0
    %4285 = vadd.xlane.f32.xlu0 %v4284
    %v4286 = vpop.xlane.xlu0 %4285
    %v4287 = vsel %vm757, %v4261, 0.0
    %4288 = vadd.xlane.f32.xlu0 %v4287
    %v4289 = vpop.xlane.xlu0 %4288
    %v4290 = vsel %vm757, %v4262, 0.0
    %4291 = vadd.xlane.f32.xlu0 %v4290
    %v4292 = vpop.xlane.xlu0 %4291
    %v4293 = vsel %vm757, %v4263, 0.0
    %4294 = vadd.xlane.f32.xlu0 %v4293
    %v4295 = vpop.xlane.xlu0 %4294
    %v4296 = vsel %vm757, %v4264, 0.0
    %4297 = vadd.xlane.f32.xlu0 %v4296
    %v4298 = vpop.xlane.xlu0 %4297
    %v4299 = vsel %vm757, %v4265, 0.0
    %4300 = vadd.xlane.f32.xlu0 %v4299
    %v4301 = vpop.xlane.xlu0 %4300
    %v4302 = vsel %vm757, %v4266, 0.0
    %4303 = vadd.xlane.f32.xlu0 %v4302
    %v4304 = vpop.xlane.xlu0 %4303
    %v4305 = vsel %vm757, %v4267, 0.0
    %4306 = vadd.xlane.f32.xlu0 %v4305
    %v4307 = vpop.xlane.xlu0 %4306
    %v4308 = vsel %vm757, %v4268, 0.0
    %4309 = vadd.xlane.f32.xlu0 %v4308
    %v4310 = vpop.xlane.xlu0 %4309
    %v4311 = vsel %vm757, %v4269, 0.0
    %4312 = vadd.xlane.f32.xlu0 %v4311
    %v4313 = vpop.xlane.xlu0 %4312
    %v4314 = vsel %vm757, %v4270, 0.0
    %4315 = vadd.xlane.f32.xlu0 %v4314
    %v4316 = vpop.xlane.xlu0 %4315
    %v4317 = vsel %vm757, %v4271, 0.0
    %4318 = vadd.xlane.f32.xlu0 %v4317
    %v4319 = vpop.xlane.xlu0 %4318
    %v4320 = vmul.f32 %v4274, 0.2236068
    %v4321 = vmul.f32 %v4277, 0.2236068
    %v4322 = vmul.f32 %v4280, 0.2236068
    %v4323 = vmul.f32 %v4283, 0.2236068
    %v4324 = vmul.f32 %v4286, 0.2236068
    %v4325 = vmul.f32 %v4289, 0.2236068
    %v4326 = vmul.f32 %v4292, 0.2236068
    %v4327 = vmul.f32 %v4295, 0.2236068
    %v4328 = vmul.f32 %v4298, 0.2236068
    %v4329 = vmul.f32 %v4301, 0.2236068
    %v4330 = vmul.f32 %v4304, 0.2236068
    %v4331 = vmul.f32 %v4307, 0.2236068
    %v4332 = vmul.f32 %v4310, 0.2236068
    %v4333 = vmul.f32 %v4313, 0.2236068
    %v4334 = vmul.f32 %v4316, 0.2236068
    %v4335 = vmul.f32 %v4319, 0.2236068
    %v4352 = vperm.slane %v4320, %v962
    %v4353 = vperm.slane %v4321, %v962
    %v4354 = vperm.slane %v4322, %v962
    %v4355 = vperm.slane %v4323, %v962
    %v4356 = vperm.slane %v4324, %v962
    %v4357 = vperm.slane %v4325, %v962
    %v4358 = vperm.slane %v4326, %v962
    %v4359 = vperm.slane %v4327, %v962
    %v4360 = vperm.slane %v4328, %v962
    %v4361 = vperm.slane %v4329, %v962
    %v4362 = vperm.slane %v4330, %v962
    %v4363 = vperm.slane %v4331, %v962
    %v4364 = vperm.slane %v4332, %v962
    %v4365 = vperm.slane %v4333, %v962
    %v4366 = vperm.slane %v4334, %v962
    %v4367 = vperm.slane %v4335, %v962
    %v4368 = vsel %vm979, %v4353, %v4352
    %v4369 = vsel %vm981, %v4354, %v4368
    %v4370 = vsel %vm983, %v4355, %v4369
    %v4371 = vsel %vm985, %v4356, %v4370
    %v4372 = vsel %vm987, %v4357, %v4371
    %v4373 = vsel %vm989, %v4358, %v4372
    %v4374 = vsel %vm991, %v4359, %v4373
    %v4375 = vsel %vm979, %v4361, %v4360
    %v4376 = vsel %vm981, %v4362, %v4375
    %v4377 = vsel %vm983, %v4363, %v4376
    %v4378 = vsel %vm985, %v4364, %v4377
    %v4379 = vsel %vm987, %v4365, %v4378
    %v4380 = vsel %vm989, %v4366, %v4379
    %v4381 = vsel %vm991, %v4367, %v4380
    %v4384 = vsel %vm1002, %v4374, -inf
    %4385 = vmax.xlane.f32.xlu0 %v4384
    %v4386 = vpop.xlane.xlu0 %4385
    %v4387 = vsel %vm1002, %v4381, -inf
    %4388 = vmax.xlane.f32.xlu0 %v4387
    %v4389 = vpop.xlane.xlu0 %4388
    %v4392 = vperm.slane %v4386, 0
    %v4393 = vperm.slane %v4386, 1
    %v4394 = vperm.slane %v4386, 2
    %v4395 = vperm.slane %v4386, 3
    %v4396 = vperm.slane %v4386, 4
    %v4397 = vperm.slane %v4386, 5
    %v4398 = vperm.slane %v4386, 6
    %v4399 = vperm.slane %v4386, 7
    %v4400 = vperm.slane %v4389, 0
    %v4401 = vperm.slane %v4389, 1
    %v4402 = vperm.slane %v4389, 2
    %v4403 = vperm.slane %v4389, 3
    %v4404 = vperm.slane %v4389, 4
    %v4405 = vperm.slane %v4389, 5
    %v4406 = vperm.slane %v4389, 6
    %v4407 = vperm.slane %v4389, 7
    %v4424 = vsub.f32 %v4320, %v4392
    %v4425 = vsub.f32 %v4321, %v4393
    %v4426 = vsub.f32 %v4322, %v4394
    %v4427 = vsub.f32 %v4323, %v4395
    %v4428 = vsub.f32 %v4324, %v4396
    %v4429 = vsub.f32 %v4325, %v4397
    %v4430 = vsub.f32 %v4326, %v4398
    %v4431 = vsub.f32 %v4327, %v4399
    %v4432 = vsub.f32 %v4328, %v4400
    %v4433 = vsub.f32 %v4329, %v4401
    %v4434 = vsub.f32 %v4330, %v4402
    %v4435 = vsub.f32 %v4331, %v4403
    %v4436 = vsub.f32 %v4332, %v4404
    %v4437 = vsub.f32 %v4333, %v4405
    %v4438 = vsub.f32 %v4334, %v4406
    %v4439 = vsub.f32 %v4335, %v4407
    %v4440 = vmul.f32 %v4424, 1.442695
    %v4441 = vpow.pop %v4440
    %v4442 = vmul.f32 %v4425, 1.442695
    %v4443 = vpow.pop %v4442
    %v4444 = vmul.f32 %v4426, 1.442695
    %v4445 = vpow.pop %v4444
    %v4446 = vmul.f32 %v4427, 1.442695
    %v4447 = vpow.pop %v4446
    %v4448 = vmul.f32 %v4428, 1.442695
    %v4449 = vpow.pop %v4448
    %v4450 = vmul.f32 %v4429, 1.442695
    %v4451 = vpow.pop %v4450
    %v4452 = vmul.f32 %v4430, 1.442695
    %v4453 = vpow.pop %v4452
    %v4454 = vmul.f32 %v4431, 1.442695
    %v4455 = vpow.pop %v4454
    %v4456 = vmul.f32 %v4432, 1.442695
    %v4457 = vpow.pop %v4456
    %v4458 = vmul.f32 %v4433, 1.442695
    %v4459 = vpow.pop %v4458
    %v4460 = vmul.f32 %v4434, 1.442695
    %v4461 = vpow.pop %v4460
    %v4462 = vmul.f32 %v4435, 1.442695
    %v4463 = vpow.pop %v4462
    %v4464 = vmul.f32 %v4436, 1.442695
    %v4465 = vpow.pop %v4464
    %v4466 = vmul.f32 %v4437, 1.442695
    %v4467 = vpow.pop %v4466
    %v4468 = vmul.f32 %v4438, 1.442695
    %v4469 = vpow.pop %v4468
    %v4470 = vmul.f32 %v4439, 1.442695
    %v4471 = vpow.pop %v4470
    %4488 = vset.pattern.permute.xlu0 0
    %4489 = vperm.xlu0 %4488, %v4441
    %v4490 = vpop.permute.xlu0 %4489
    %4491 = vset.pattern.permute.xlu0 0
    %4492 = vperm.xlu0 %4491, %v4443
    %v4493 = vpop.permute.xlu0 %4492
    %4494 = vset.pattern.permute.xlu0 0
    %4495 = vperm.xlu0 %4494, %v4445
    %v4496 = vpop.permute.xlu0 %4495
    %4497 = vset.pattern.permute.xlu0 0
    %4498 = vperm.xlu0 %4497, %v4447
    %v4499 = vpop.permute.xlu0 %4498
    %4500 = vset.pattern.permute.xlu0 0
    %4501 = vperm.xlu0 %4500, %v4449
    %v4502 = vpop.permute.xlu0 %4501
    %4503 = vset.pattern.permute.xlu0 0
    %4504 = vperm.xlu0 %4503, %v4451
    %v4505 = vpop.permute.xlu0 %4504
    %4506 = vset.pattern.permute.xlu0 0
    %4507 = vperm.xlu0 %4506, %v4453
    %v4508 = vpop.permute.xlu0 %4507
    %4509 = vset.pattern.permute.xlu0 0
    %4510 = vperm.xlu0 %4509, %v4455
    %v4511 = vpop.permute.xlu0 %4510
    %4512 = vset.pattern.permute.xlu0 0
    %4513 = vperm.xlu0 %4512, %v4457
    %v4514 = vpop.permute.xlu0 %4513
    %4515 = vset.pattern.permute.xlu0 0
    %4516 = vperm.xlu0 %4515, %v4459
    %v4517 = vpop.permute.xlu0 %4516
    %4518 = vset.pattern.permute.xlu0 0
    %4519 = vperm.xlu0 %4518, %v4461
    %v4520 = vpop.permute.xlu0 %4519
    %4521 = vset.pattern.permute.xlu0 0
    %4522 = vperm.xlu0 %4521, %v4463
    %v4523 = vpop.permute.xlu0 %4522
    %4524 = vset.pattern.permute.xlu0 0
    %4525 = vperm.xlu0 %4524, %v4465
    %v4526 = vpop.permute.xlu0 %4525
    %4527 = vset.pattern.permute.xlu0 0
    %4528 = vperm.xlu0 %4527, %v4467
    %v4529 = vpop.permute.xlu0 %4528
    %4530 = vset.pattern.permute.xlu0 0
    %4531 = vperm.xlu0 %4530, %v4469
    %v4532 = vpop.permute.xlu0 %4531
    %4533 = vset.pattern.permute.xlu0 0
    %4534 = vperm.xlu0 %4533, %v4471
    %v4535 = vpop.permute.xlu0 %4534
    %v4536 = vperm.slane %v4490, %v962
    %v4537 = vperm.slane %v4493, %v962
    %v4538 = vperm.slane %v4496, %v962
    %v4539 = vperm.slane %v4499, %v962
    %v4540 = vperm.slane %v4502, %v962
    %v4541 = vperm.slane %v4505, %v962
    %v4542 = vperm.slane %v4508, %v962
    %v4543 = vperm.slane %v4511, %v962
    %v4544 = vperm.slane %v4514, %v962
    %v4545 = vperm.slane %v4517, %v962
    %v4546 = vperm.slane %v4520, %v962
    %v4547 = vperm.slane %v4523, %v962
    %v4548 = vperm.slane %v4526, %v962
    %v4549 = vperm.slane %v4529, %v962
    %v4550 = vperm.slane %v4532, %v962
    %v4551 = vperm.slane %v4535, %v962
    %v4552 = vsel %vm979, %v4537, %v4536
    %v4553 = vsel %vm981, %v4538, %v4552
    %v4554 = vsel %vm983, %v4539, %v4553
    %v4555 = vsel %vm985, %v4540, %v4554
    %v4556 = vsel %vm987, %v4541, %v4555
    %v4557 = vsel %vm989, %v4542, %v4556
    %v4558 = vsel %vm991, %v4543, %v4557
    %v4559 = vsel %vm979, %v4545, %v4544
    %v4560 = vsel %vm981, %v4546, %v4559
    %v4561 = vsel %vm983, %v4547, %v4560
    %v4562 = vsel %vm985, %v4548, %v4561
    %v4563 = vsel %vm987, %v4549, %v4562
    %v4564 = vsel %vm989, %v4550, %v4563
    %v4565 = vsel %vm991, %v4551, %v4564
    %v4568 = vsel %vm1002, %v4558, 0.0
    %4569 = vadd.xlane.f32.xlu0 %v4568
    %v4570 = vpop.xlane.xlu0 %4569
    %v4571 = vsel %vm1002, %v4565, 0.0
    %4572 = vadd.xlane.f32.xlu0 %v4571
    %v4573 = vpop.xlane.xlu0 %4572
    %v4576 = vperm.slane %v4570, 0
    %v4577 = vperm.slane %v4570, 1
    %v4578 = vperm.slane %v4570, 2
    %v4579 = vperm.slane %v4570, 3
    %v4580 = vperm.slane %v4570, 4
    %v4581 = vperm.slane %v4570, 5
    %v4582 = vperm.slane %v4570, 6
    %v4583 = vperm.slane %v4570, 7
    %v4584 = vperm.slane %v4573, 0
    %v4585 = vperm.slane %v4573, 1
    %v4586 = vperm.slane %v4573, 2
    %v4587 = vperm.slane %v4573, 3
    %v4588 = vperm.slane %v4573, 4
    %v4589 = vperm.slane %v4573, 5
    %v4590 = vperm.slane %v4573, 6
    %v4591 = vperm.slane %v4573, 7
    %v4608 = vrcp.pop %v4576
    %v4609 = vmul.f32 %v4576, %v4608
    %v4610 = vsub.f32 1.0, %v4609
    %v4611 = vmul.f32 %v4608, %v4610
    %v4612 = vadd.f32 %v4608, %v4611
    %vm4613 = vweird.f32 %v4576
    %vm4614 = vweird.f32 %v4608
    %vm4615 = vmor %vm4613, %vm4614
    %v4616 = vsel %vm4615, %v4608, %v4612
    %v4617 = vand.u32 2147483647, %v4576
    %vm4618 = vcmp.eq.f32.partialorder %v4617, 8.507059e+37
    %v4619 = vand.u32 %v4576, 2147483648
    %v4620 = vor.u32 1.1754944e-38, %v4619
    %v4621 = vsel %vm4618, %v4620, %v4616
    %v4622 = vmul.f32 %v4441, %v4621
    %v4623 = vrcp.pop %v4577
    %v4624 = vmul.f32 %v4577, %v4623
    %v4625 = vsub.f32 1.0, %v4624
    %v4626 = vmul.f32 %v4623, %v4625
    %v4627 = vadd.f32 %v4623, %v4626
    %vm4628 = vweird.f32 %v4577
    %vm4629 = vweird.f32 %v4623
    %vm4630 = vmor %vm4628, %vm4629
    %v4631 = vsel %vm4630, %v4623, %v4627
    %v4632 = vand.u32 2147483647, %v4577
    %vm4633 = vcmp.eq.f32.partialorder %v4632, 8.507059e+37
    %v4634 = vand.u32 %v4577, 2147483648
    %v4635 = vor.u32 1.1754944e-38, %v4634
    %v4636 = vsel %vm4633, %v4635, %v4631
    %v4637 = vmul.f32 %v4443, %v4636
    %v4638 = vrcp.pop %v4578
    %v4639 = vmul.f32 %v4578, %v4638
    %v4640 = vsub.f32 1.0, %v4639
    %v4641 = vmul.f32 %v4638, %v4640
    %v4642 = vadd.f32 %v4638, %v4641
    %vm4643 = vweird.f32 %v4578
    %vm4644 = vweird.f32 %v4638
    %vm4645 = vmor %vm4643, %vm4644
    %v4646 = vsel %vm4645, %v4638, %v4642
    %v4647 = vand.u32 2147483647, %v4578
    %vm4648 = vcmp.eq.f32.partialorder %v4647, 8.507059e+37
    %v4649 = vand.u32 %v4578, 2147483648
    %v4650 = vor.u32 1.1754944e-38, %v4649
    %v4651 = vsel %vm4648, %v4650, %v4646
    %v4652 = vmul.f32 %v4445, %v4651
    %v4653 = vrcp.pop %v4579
    %v4654 = vmul.f32 %v4579, %v4653
    %v4655 = vsub.f32 1.0, %v4654
    %v4656 = vmul.f32 %v4653, %v4655
    %v4657 = vadd.f32 %v4653, %v4656
    %vm4658 = vweird.f32 %v4579
    %vm4659 = vweird.f32 %v4653
    %vm4660 = vmor %vm4658, %vm4659
    %v4661 = vsel %vm4660, %v4653, %v4657
    %v4662 = vand.u32 2147483647, %v4579
    %vm4663 = vcmp.eq.f32.partialorder %v4662, 8.507059e+37
    %v4664 = vand.u32 %v4579, 2147483648
    %v4665 = vor.u32 1.1754944e-38, %v4664
    %v4666 = vsel %vm4663, %v4665, %v4661
    %v4667 = vmul.f32 %v4447, %v4666
    %v4668 = vrcp.pop %v4580
    %v4669 = vmul.f32 %v4580, %v4668
    %v4670 = vsub.f32 1.0, %v4669
    %v4671 = vmul.f32 %v4668, %v4670
    %v4672 = vadd.f32 %v4668, %v4671
    %vm4673 = vweird.f32 %v4580
    %vm4674 = vweird.f32 %v4668
    %vm4675 = vmor %vm4673, %vm4674
    %v4676 = vsel %vm4675, %v4668, %v4672
    %v4677 = vand.u32 2147483647, %v4580
    %vm4678 = vcmp.eq.f32.partialorder %v4677, 8.507059e+37
    %v4679 = vand.u32 %v4580, 2147483648
    %v4680 = vor.u32 1.1754944e-38, %v4679
    %v4681 = vsel %vm4678, %v4680, %v4676
    %v4682 = vmul.f32 %v4449, %v4681
    %v4683 = vrcp.pop %v4581
    %v4684 = vmul.f32 %v4581, %v4683
    %v4685 = vsub.f32 1.0, %v4684
    %v4686 = vmul.f32 %v4683, %v4685
    %v4687 = vadd.f32 %v4683, %v4686
    %vm4688 = vweird.f32 %v4581
    %vm4689 = vweird.f32 %v4683
    %vm4690 = vmor %vm4688, %vm4689
    %v4691 = vsel %vm4690, %v4683, %v4687
    %v4692 = vand.u32 2147483647, %v4581
    %vm4693 = vcmp.eq.f32.partialorder %v4692, 8.507059e+37
    %v4694 = vand.u32 %v4581, 2147483648
    %v4695 = vor.u32 1.1754944e-38, %v4694
    %v4696 = vsel %vm4693, %v4695, %v4691
    %v4697 = vmul.f32 %v4451, %v4696
    %v4698 = vrcp.pop %v4582
    %v4699 = vmul.f32 %v4582, %v4698
    %v4700 = vsub.f32 1.0, %v4699
    %v4701 = vmul.f32 %v4698, %v4700
    %v4702 = vadd.f32 %v4698, %v4701
    %vm4703 = vweird.f32 %v4582
    %vm4704 = vweird.f32 %v4698
    %vm4705 = vmor %vm4703, %vm4704
    %v4706 = vsel %vm4705, %v4698, %v4702
    %v4707 = vand.u32 2147483647, %v4582
    %vm4708 = vcmp.eq.f32.partialorder %v4707, 8.507059e+37
    %v4709 = vand.u32 %v4582, 2147483648
    %v4710 = vor.u32 1.1754944e-38, %v4709
    %v4711 = vsel %vm4708, %v4710, %v4706
    %v4712 = vmul.f32 %v4453, %v4711
    %v4713 = vrcp.pop %v4583
    %v4714 = vmul.f32 %v4583, %v4713
    %v4715 = vsub.f32 1.0, %v4714
    %v4716 = vmul.f32 %v4713, %v4715
    %v4717 = vadd.f32 %v4713, %v4716
    %vm4718 = vweird.f32 %v4583
    %vm4719 = vweird.f32 %v4713
    %vm4720 = vmor %vm4718, %vm4719
    %v4721 = vsel %vm4720, %v4713, %v4717
    %v4722 = vand.u32 2147483647, %v4583
    %vm4723 = vcmp.eq.f32.partialorder %v4722, 8.507059e+37
    %v4724 = vand.u32 %v4583, 2147483648
    %v4725 = vor.u32 1.1754944e-38, %v4724
    %v4726 = vsel %vm4723, %v4725, %v4721
    %v4727 = vmul.f32 %v4455, %v4726
    %v4728 = vrcp.pop %v4584
    %v4729 = vmul.f32 %v4584, %v4728
    %v4730 = vsub.f32 1.0, %v4729
    %v4731 = vmul.f32 %v4728, %v4730
    %v4732 = vadd.f32 %v4728, %v4731
    %vm4733 = vweird.f32 %v4584
    %vm4734 = vweird.f32 %v4728
    %vm4735 = vmor %vm4733, %vm4734
    %v4736 = vsel %vm4735, %v4728, %v4732
    %v4737 = vand.u32 2147483647, %v4584
    %vm4738 = vcmp.eq.f32.partialorder %v4737, 8.507059e+37
    %v4739 = vand.u32 %v4584, 2147483648
    %v4740 = vor.u32 1.1754944e-38, %v4739
    %v4741 = vsel %vm4738, %v4740, %v4736
    %v4742 = vmul.f32 %v4457, %v4741
    %v4743 = vrcp.pop %v4585
    %v4744 = vmul.f32 %v4585, %v4743
    %v4745 = vsub.f32 1.0, %v4744
    %v4746 = vmul.f32 %v4743, %v4745
    %v4747 = vadd.f32 %v4743, %v4746
    %vm4748 = vweird.f32 %v4585
    %vm4749 = vweird.f32 %v4743
    %vm4750 = vmor %vm4748, %vm4749
    %v4751 = vsel %vm4750, %v4743, %v4747
    %v4752 = vand.u32 2147483647, %v4585
    %vm4753 = vcmp.eq.f32.partialorder %v4752, 8.507059e+37
    %v4754 = vand.u32 %v4585, 2147483648
    %v4755 = vor.u32 1.1754944e-38, %v4754
    %v4756 = vsel %vm4753, %v4755, %v4751
    %v4757 = vmul.f32 %v4459, %v4756
    %v4758 = vrcp.pop %v4586
    %v4759 = vmul.f32 %v4586, %v4758
    %v4760 = vsub.f32 1.0, %v4759
    %v4761 = vmul.f32 %v4758, %v4760
    %v4762 = vadd.f32 %v4758, %v4761
    %vm4763 = vweird.f32 %v4586
    %vm4764 = vweird.f32 %v4758
    %vm4765 = vmor %vm4763, %vm4764
    %v4766 = vsel %vm4765, %v4758, %v4762
    %v4767 = vand.u32 2147483647, %v4586
    %vm4768 = vcmp.eq.f32.partialorder %v4767, 8.507059e+37
    %v4769 = vand.u32 %v4586, 2147483648
    %v4770 = vor.u32 1.1754944e-38, %v4769
    %v4771 = vsel %vm4768, %v4770, %v4766
    %v4772 = vmul.f32 %v4461, %v4771
    %v4773 = vrcp.pop %v4587
    %v4774 = vmul.f32 %v4587, %v4773
    %v4775 = vsub.f32 1.0, %v4774
    %v4776 = vmul.f32 %v4773, %v4775
    %v4777 = vadd.f32 %v4773, %v4776
    %vm4778 = vweird.f32 %v4587
    %vm4779 = vweird.f32 %v4773
    %vm4780 = vmor %vm4778, %vm4779
    %v4781 = vsel %vm4780, %v4773, %v4777
    %v4782 = vand.u32 2147483647, %v4587
    %vm4783 = vcmp.eq.f32.partialorder %v4782, 8.507059e+37
    %v4784 = vand.u32 %v4587, 2147483648
    %v4785 = vor.u32 1.1754944e-38, %v4784
    %v4786 = vsel %vm4783, %v4785, %v4781
    %v4787 = vmul.f32 %v4463, %v4786
    %v4788 = vrcp.pop %v4588
    %v4789 = vmul.f32 %v4588, %v4788
    %v4790 = vsub.f32 1.0, %v4789
    %v4791 = vmul.f32 %v4788, %v4790
    %v4792 = vadd.f32 %v4788, %v4791
    %vm4793 = vweird.f32 %v4588
    %vm4794 = vweird.f32 %v4788
    %vm4795 = vmor %vm4793, %vm4794
    %v4796 = vsel %vm4795, %v4788, %v4792
    %v4797 = vand.u32 2147483647, %v4588
    %vm4798 = vcmp.eq.f32.partialorder %v4797, 8.507059e+37
    %v4799 = vand.u32 %v4588, 2147483648
    %v4800 = vor.u32 1.1754944e-38, %v4799
    %v4801 = vsel %vm4798, %v4800, %v4796
    %v4802 = vmul.f32 %v4465, %v4801
    %v4803 = vrcp.pop %v4589
    %v4804 = vmul.f32 %v4589, %v4803
    %v4805 = vsub.f32 1.0, %v4804
    %v4806 = vmul.f32 %v4803, %v4805
    %v4807 = vadd.f32 %v4803, %v4806
    %vm4808 = vweird.f32 %v4589
    %vm4809 = vweird.f32 %v4803
    %vm4810 = vmor %vm4808, %vm4809
    %v4811 = vsel %vm4810, %v4803, %v4807
    %v4812 = vand.u32 2147483647, %v4589
    %vm4813 = vcmp.eq.f32.partialorder %v4812, 8.507059e+37
    %v4814 = vand.u32 %v4589, 2147483648
    %v4815 = vor.u32 1.1754944e-38, %v4814
    %v4816 = vsel %vm4813, %v4815, %v4811
    %v4817 = vmul.f32 %v4467, %v4816
    %v4818 = vrcp.pop %v4590
    %v4819 = vmul.f32 %v4590, %v4818
    %v4820 = vsub.f32 1.0, %v4819
    %v4821 = vmul.f32 %v4818, %v4820
    %v4822 = vadd.f32 %v4818, %v4821
    %vm4823 = vweird.f32 %v4590
    %vm4824 = vweird.f32 %v4818
    %vm4825 = vmor %vm4823, %vm4824
    %v4826 = vsel %vm4825, %v4818, %v4822
    %v4827 = vand.u32 2147483647, %v4590
    %vm4828 = vcmp.eq.f32.partialorder %v4827, 8.507059e+37
    %v4829 = vand.u32 %v4590, 2147483648
    %v4830 = vor.u32 1.1754944e-38, %v4829
    %v4831 = vsel %vm4828, %v4830, %v4826
    %v4832 = vmul.f32 %v4469, %v4831
    %v4833 = vrcp.pop %v4591
    %v4834 = vmul.f32 %v4591, %v4833
    %v4835 = vsub.f32 1.0, %v4834
    %v4836 = vmul.f32 %v4833, %v4835
    %v4837 = vadd.f32 %v4833, %v4836
    %vm4838 = vweird.f32 %v4591
    %vm4839 = vweird.f32 %v4833
    %vm4840 = vmor %vm4838, %vm4839
    %v4841 = vsel %vm4840, %v4833, %v4837
    %v4842 = vand.u32 2147483647, %v4591
    %vm4843 = vcmp.eq.f32.partialorder %v4842, 8.507059e+37
    %v4844 = vand.u32 %v4591, 2147483648
    %v4845 = vor.u32 1.1754944e-38, %v4844
    %v4846 = vsel %vm4843, %v4845, %v4841
    %v4847 = vmul.f32 %v4471, %v4846
    %4849 = vset.pattern.permute.xlu0 0
    %4850 = vperm.xlu0 %4849, %v4622
    %v4851 = vpop.permute.xlu0 %4850
    %4854 = vset.pattern.permute.xlu0 0
    %4855 = vperm.xlu0 %4854, %v4637
    %v4856 = vpop.permute.xlu0 %4855
    %4859 = vset.pattern.permute.xlu0 0
    %4860 = vperm.xlu0 %4859, %v4652
    %v4861 = vpop.permute.xlu0 %4860
    %4864 = vset.pattern.permute.xlu0 0
    %4865 = vperm.xlu0 %4864, %v4667
    %v4866 = vpop.permute.xlu0 %4865
    %4869 = vset.pattern.permute.xlu0 0
    %4870 = vperm.xlu0 %4869, %v4682
    %v4871 = vpop.permute.xlu0 %4870
    %4874 = vset.pattern.permute.xlu0 0
    %4875 = vperm.xlu0 %4874, %v4697
    %v4876 = vpop.permute.xlu0 %4875
    %4879 = vset.pattern.permute.xlu0 0
    %4880 = vperm.xlu0 %4879, %v4712
    %v4881 = vpop.permute.xlu0 %4880
    %4884 = vset.pattern.permute.xlu0 0
    %4885 = vperm.xlu0 %4884, %v4727
    %v4886 = vpop.permute.xlu0 %4885
    %4889 = vset.pattern.permute.xlu0 0
    %4890 = vperm.xlu0 %4889, %v4742
    %v4891 = vpop.permute.xlu0 %4890
    %4894 = vset.pattern.permute.xlu0 0
    %4895 = vperm.xlu0 %4894, %v4757
    %v4896 = vpop.permute.xlu0 %4895
    %4899 = vset.pattern.permute.xlu0 0
    %4900 = vperm.xlu0 %4899, %v4772
    %v4901 = vpop.permute.xlu0 %4900
    %4904 = vset.pattern.permute.xlu0 0
    %4905 = vperm.xlu0 %4904, %v4787
    %v4906 = vpop.permute.xlu0 %4905
    %4909 = vset.pattern.permute.xlu0 0
    %4910 = vperm.xlu0 %4909, %v4802
    %v4911 = vpop.permute.xlu0 %4910
    %4914 = vset.pattern.permute.xlu0 0
    %4915 = vperm.xlu0 %4914, %v4817
    %v4916 = vpop.permute.xlu0 %4915
    %4919 = vset.pattern.permute.xlu0 0
    %4920 = vperm.xlu0 %4919, %v4832
    %v4921 = vpop.permute.xlu0 %4920
    %4924 = vset.pattern.permute.xlu0 0
    %4925 = vperm.xlu0 %4924, %v4847
    %v4926 = vpop.permute.xlu0 %4925
    %v4928 = vmul.f32 %v4851, %v4203
    %v4929 = vmul.f32 %v4856, %v4203
    %v4930 = vmul.f32 %v4861, %v4203
    %v4931 = vmul.f32 %v4866, %v4203
    %v4932 = vmul.f32 %v4871, %v4203
    %v4933 = vmul.f32 %v4876, %v4203
    %v4934 = vmul.f32 %v4881, %v4203
    %v4935 = vmul.f32 %v4886, %v4203
    %v4936 = vmul.f32 %v4891, %v4206
    %v4937 = vmul.f32 %v4896, %v4206
    %v4938 = vmul.f32 %v4901, %v4206
    %v4939 = vmul.f32 %v4906, %v4206
    %v4940 = vmul.f32 %v4911, %v4206
    %v4941 = vmul.f32 %v4916, %v4206
    %v4942 = vmul.f32 %v4921, %v4206
    %v4943 = vmul.f32 %v4926, %v4206
    %v4944 = vsel %vm2657, %v4928, 0.0
    %v4945 = vrot.slane %v4944, 4
    %v4946 = vadd.f32 %v4944, %v4945
    %v4947 = vrot.slane %v4946, 2
    %v4948 = vadd.f32 %v4946, %v4947
    %v4949 = vrot.slane %v4948, 1
    %v4950 = vadd.f32 %v4948, %v4949
    %v4951 = vsel %vm2657, %v4929, 0.0
    %v4952 = vrot.slane %v4951, 4
    %v4953 = vadd.f32 %v4951, %v4952
    %v4954 = vrot.slane %v4953, 2
    %v4955 = vadd.f32 %v4953, %v4954
    %v4956 = vrot.slane %v4955, 1
    %v4957 = vadd.f32 %v4955, %v4956
    %v4958 = vsel %vm2657, %v4930, 0.0
    %v4959 = vrot.slane %v4958, 4
    %v4960 = vadd.f32 %v4958, %v4959
    %v4961 = vrot.slane %v4960, 2
    %v4962 = vadd.f32 %v4960, %v4961
    %v4963 = vrot.slane %v4962, 1
    %v4964 = vadd.f32 %v4962, %v4963
    %v4965 = vsel %vm2657, %v4931, 0.0
    %v4966 = vrot.slane %v4965, 4
    %v4967 = vadd.f32 %v4965, %v4966
    %v4968 = vrot.slane %v4967, 2
    %v4969 = vadd.f32 %v4967, %v4968
    %v4970 = vrot.slane %v4969, 1
    %v4971 = vadd.f32 %v4969, %v4970
    %v4972 = vsel %vm2657, %v4932, 0.0
    %v4973 = vrot.slane %v4972, 4
    %v4974 = vadd.f32 %v4972, %v4973
    %v4975 = vrot.slane %v4974, 2
    %v4976 = vadd.f32 %v4974, %v4975
    %v4977 = vrot.slane %v4976, 1
    %v4978 = vadd.f32 %v4976, %v4977
    %v4979 = vsel %vm2657, %v4933, 0.0
    %v4980 = vrot.slane %v4979, 4
    %v4981 = vadd.f32 %v4979, %v4980
    %v4982 = vrot.slane %v4981, 2
    %v4983 = vadd.f32 %v4981, %v4982
    %v4984 = vrot.slane %v4983, 1
    %v4985 = vadd.f32 %v4983, %v4984
    %v4986 = vsel %vm2657, %v4934, 0.0
    %v4987 = vrot.slane %v4986, 4
    %v4988 = vadd.f32 %v4986, %v4987
    %v4989 = vrot.slane %v4988, 2
    %v4990 = vadd.f32 %v4988, %v4989
    %v4991 = vrot.slane %v4990, 1
    %v4992 = vadd.f32 %v4990, %v4991
    %v4993 = vsel %vm2657, %v4935, 0.0
    %v4994 = vrot.slane %v4993, 4
    %v4995 = vadd.f32 %v4993, %v4994
    %v4996 = vrot.slane %v4995, 2
    %v4997 = vadd.f32 %v4995, %v4996
    %v4998 = vrot.slane %v4997, 1
    %v4999 = vadd.f32 %v4997, %v4998
    %v5000 = vsel %vm2657, %v4936, 0.0
    %v5001 = vrot.slane %v5000, 4
    %v5002 = vadd.f32 %v5000, %v5001
    %v5003 = vrot.slane %v5002, 2
    %v5004 = vadd.f32 %v5002, %v5003
    %v5005 = vrot.slane %v5004, 1
    %v5006 = vadd.f32 %v5004, %v5005
    %v5007 = vsel %vm2657, %v4937, 0.0
    %v5008 = vrot.slane %v5007, 4
    %v5009 = vadd.f32 %v5007, %v5008
    %v5010 = vrot.slane %v5009, 2
    %v5011 = vadd.f32 %v5009, %v5010
    %v5012 = vrot.slane %v5011, 1
    %v5013 = vadd.f32 %v5011, %v5012
    %v5014 = vsel %vm2657, %v4938, 0.0
    %v5015 = vrot.slane %v5014, 4
    %v5016 = vadd.f32 %v5014, %v5015
    %v5017 = vrot.slane %v5016, 2
    %v5018 = vadd.f32 %v5016, %v5017
    %v5019 = vrot.slane %v5018, 1
    %v5020 = vadd.f32 %v5018, %v5019
    %v5021 = vsel %vm2657, %v4939, 0.0
    %v5022 = vrot.slane %v5021, 4
    %v5023 = vadd.f32 %v5021, %v5022
    %v5024 = vrot.slane %v5023, 2
    %v5025 = vadd.f32 %v5023, %v5024
    %v5026 = vrot.slane %v5025, 1
    %v5027 = vadd.f32 %v5025, %v5026
    %v5028 = vsel %vm2657, %v4940, 0.0
    %v5029 = vrot.slane %v5028, 4
    %v5030 = vadd.f32 %v5028, %v5029
    %v5031 = vrot.slane %v5030, 2
    %v5032 = vadd.f32 %v5030, %v5031
    %v5033 = vrot.slane %v5032, 1
    %v5034 = vadd.f32 %v5032, %v5033
    %v5035 = vsel %vm2657, %v4941, 0.0
    %v5036 = vrot.slane %v5035, 4
    %v5037 = vadd.f32 %v5035, %v5036
    %v5038 = vrot.slane %v5037, 2
    %v5039 = vadd.f32 %v5037, %v5038
    %v5040 = vrot.slane %v5039, 1
    %v5041 = vadd.f32 %v5039, %v5040
    %v5042 = vsel %vm2657, %v4942, 0.0
    %v5043 = vrot.slane %v5042, 4
    %v5044 = vadd.f32 %v5042, %v5043
    %v5045 = vrot.slane %v5044, 2
    %v5046 = vadd.f32 %v5044, %v5045
    %v5047 = vrot.slane %v5046, 1
    %v5048 = vadd.f32 %v5046, %v5047
    %v5049 = vsel %vm2657, %v4943, 0.0
    %v5050 = vrot.slane %v5049, 4
    %v5051 = vadd.f32 %v5049, %v5050
    %v5052 = vrot.slane %v5051, 2
    %v5053 = vadd.f32 %v5051, %v5052
    %v5054 = vrot.slane %v5053, 1
    %v5055 = vadd.f32 %v5053, %v5054
    %s5056 = scalar_lea.vmem %s11, 24
    %v5057 = vld [vmem:[%s5056] sm:$0xff]
    %v5058 = vld [vmem:[%s5056 + $0x8] sm:$0xff]
    %v5059 = vld [vmem:[%s5056 + $0x10] sm:$0xf]
    %s5060 = scalar_lea.vmem %s12, 1
    %v5061 = vld [vmem:[%s5060] sm:$0x1]
    %v5063 = vperm.slane %v5061, 0
    %v5081 = vsel %vm979, %v4957, %v4950
    %v5082 = vsel %vm981, %v4964, %v5081
    %v5083 = vsel %vm983, %v4971, %v5082
    %v5084 = vsel %vm985, %v4978, %v5083
    %v5085 = vsel %vm987, %v4985, %v5084
    %v5086 = vsel %vm989, %v4992, %v5085
    %v5087 = vsel %vm991, %v4999, %v5086
    %v5088 = vsel %vm979, %v5013, %v5006
    %v5089 = vsel %vm981, %v5020, %v5088
    %v5090 = vsel %vm983, %v5027, %v5089
    %v5091 = vsel %vm985, %v5034, %v5090
    %v5092 = vsel %vm987, %v5041, %v5091
    %v5093 = vsel %vm989, %v5048, %v5092
    %v5094 = vsel %vm991, %v5055, %v5093
    %5095 = vrot.lane.b32.xlu0 %v5087, 108
    %v5096 = vpop.permute.xlu0 %5095
    %5097 = vrot.lane.b32.xlu0 %v5094, 108
    %v5098 = vpop.permute.xlu0 %5097
    %v5099 = vsel %vm757, %v5096, 0
    %v5101 = vsel %vm757, %v5098, 0
    %v5104 = vsel %vm757, %v5057, 0
    %v5107 = vsel %vm757, %v5058, 0
    %v5110 = vsel %vm757, %v5059, 0
    %5112 = vmatpush.xpose.msra.mxu0 0.0
    %5113 = vmatpush.xpose.msra.mxu0 0.0
    %5114 = vmatpush.xpose.msra.mxu0 0.0
    %5115 = vmatpush.xpose.msra.mxu0 0.0
    %5116 = vmatpush.xpose.msra.mxu0 0.0
    %5117 = vmatpush.xpose.msra.mxu0 0.0
    %5118 = vmatpush.xpose.msra.mxu0 0.0
    %5119 = vmatpush.xpose.msra.mxu0 0.0
    %5120 = vmatpush.xpose.msra.mxu0 0.0
    %5121 = vmatpush.xpose.msra.mxu0 0.0
    %5122 = vmatpush.xpose.msra.mxu0 0.0
    %5123 = vmatpush.xpose.msra.mxu0 0.0
    %5124 = vmatpush.xpose.msra.mxu0 0.0
    %5125 = vmatpush.xpose.msra.mxu0 %v5110
    %5126 = vmatpush.xpose.msra.mxu0 %v5107
    %5127 = vmatpush.xpose.msra.mxu0 %v5104
    %5128 = vmatmul.f32.gmra.mxu0 %v5099
    %v5129 = vpop.f32.mrf.mxu0
    %v5130 = vadd.f32 %v5063, %v5129
    %5131 = vmatmul.f32.gmra.mxu0 %v5101
    %v5132 = vpop.f32.mrf.mxu0
    %v5133 = vadd.f32 %v5063, %v5132
    %5134 = vdwg.mxu0
    %v5135 = vadd.f32 %v4102, %v5130
    %v5136 = vadd.f32 %v4103, %v5133
    %v5137 = vsel %vm757, %v5135, 0.0
    %5138 = vadd.xlane.f32.xlu0 %v5137
    %v5139 = vpop.xlane.xlu0 %5138
    %v5140 = vsel %vm757, %v5136, 0.0
    %5141 = vadd.xlane.f32.xlu0 %v5140
    %v5142 = vpop.xlane.xlu0 %5141
    %v5143 = vmul.f32 %v5139, %v1767
    %v5144 = vmul.f32 %v5142, %v1767
    %v5145 = vsub.f32 %v5135, %v5143
    %v5146 = vsub.f32 %v5136, %v5144
    %v5147 = vmul.f32 %v5145, %v5145
    %v5148 = vmul.f32 %v5146, %v5146
    %v5149 = vsel %vm757, %v5147, 0.0
    %5150 = vadd.xlane.f32.xlu0 %v5149
    %v5151 = vpop.xlane.xlu0 %5150
    %v5152 = vsel %vm757, %v5148, 0.0
    %5153 = vadd.xlane.f32.xlu0 %v5152
    %v5154 = vpop.xlane.xlu0 %5153
    %v5155 = vmul.f32 %v5151, %v1767
    %v5156 = vmul.f32 %v5154, %v1767
    %v5157 = vadd.f32 %v5155, 1e-05
    %v5158 = vadd.f32 %v5156, 1e-05
    %v5159 = vrsqrt.pop %v5157
    %v5160 = vmul.f32 %v5159, %v5157
    %v5161 = vmul.f32 %v5160, %v5159
    %v5162 = vmul.f32 0.5, %v5161
    %v5163 = vsub.f32 1.5, %v5162
    %v5164 = vmul.f32 %v5159, %v5163
    %vm5165 = vweird.f32 %v5157
    %vm5166 = vweird.f32 %v5159
    %vm5167 = vmor %vm5165, %vm5166
    %v5168 = vsel %vm5167, %v5159, %v5164
    %v5169 = vrsqrt.pop %v5158
    %v5170 = vmul.f32 %v5169, %v5158
    %v5171 = vmul.f32 %v5170, %v5169
    %v5172 = vmul.f32 0.5, %v5171
    %v5173 = vsub.f32 1.5, %v5172
    %v5174 = vmul.f32 %v5169, %v5173
    %vm5175 = vweird.f32 %v5158
    %vm5176 = vweird.f32 %v5169
    %vm5177 = vmor %vm5175, %vm5176
    %v5178 = vsel %vm5177, %v5169, %v5174
    %v5179 = vmul.f32 %v5145, %v5168
    %v5180 = vmul.f32 %v5146, %v5178
    %v5181 = vperm.slane %v3049, 1
    %v5182 = vmul.f32 %v5179, %v5181
    %v5183 = vmul.f32 %v5180, %v5181
    %v5184 = vperm.slane %v3051, 1
    %v5185 = vadd.f32 %v5182, %v5184
    %v5186 = vadd.f32 %v5183, %v5184
    %s5187 = scalar_lea.vmem %s13, 32
    %v5188 = vld [vmem:[%s5187] sm:$0xff]
    %v5189 = vld [vmem:[%s5187 + $0x8] sm:$0xff]
    %v5190 = vld [vmem:[%s5187 + $0x10] sm:$0xff]
    %v5191 = vld [vmem:[%s5187 + $0x18] sm:$0xff]
    %s5192 = scalar_lea.vmem %s14, 1
    %v5193 = vld [vmem:[%s5192] sm:$0x1]
    %v5195 = vperm.slane %v5193, 0
    %v5198 = vsel %vm757, %v5185, 0
    %v5201 = vsel %vm757, %v5186, 0
    %v5204 = vsel %vm757, %v5188, 0
    %v5207 = vsel %vm757, %v5189, 0
    %v5210 = vsel %vm757, %v5190, 0
    %v5213 = vsel %vm757, %v5191, 0
    %5215 = vmatpush.xpose.msra.mxu0 0.0
    %5216 = vmatpush.xpose.msra.mxu0 0.0
    %5217 = vmatpush.xpose.msra.mxu0 0.0
    %5218 = vmatpush.xpose.msra.mxu0 0.0
    %5219 = vmatpush.xpose.msra.mxu0 0.0
    %5220 = vmatpush.xpose.msra.mxu0 0.0
    %5221 = vmatpush.xpose.msra.mxu0 0.0
    %5222 = vmatpush.xpose.msra.mxu0 0.0
    %5223 = vmatpush.xpose.msra.mxu0 0.0
    %5224 = vmatpush.xpose.msra.mxu0 0.0
    %5225 = vmatpush.xpose.msra.mxu0 0.0
    %5226 = vmatpush.xpose.msra.mxu0 0.0
    %5227 = vmatpush.xpose.msra.mxu0 %v5213
    %5228 = vmatpush.xpose.msra.mxu0 %v5210
    %5229 = vmatpush.xpose.msra.mxu0 %v5207
    %5230 = vmatpush.xpose.msra.mxu0 %v5204
    %5231 = vmatmul.f32.gmra.mxu0 %v5198
    %v5232 = vpop.f32.mrf.mxu0
    %v5233 = vadd.f32 %v5195, %v5232
    %5234 = vmatmul.f32.gmra.mxu0 %v5201
    %v5235 = vpop.f32.mrf.mxu0
    %v5236 = vadd.f32 %v5195, %v5235
    %5237 = vdwg.mxu0
    %v5238 = vmax.f32 %v5233, 0.0
    %v5239 = vmax.f32 %v5236, 0.0
    %s5240 = scalar_lea.vmem %s15, 24
    %v5241 = vld [vmem:[%s5240] sm:$0xff]
    %v5242 = vld [vmem:[%s5240 + $0x8] sm:$0xff]
    %v5243 = vld [vmem:[%s5240 + $0x10] sm:$0xf]
    %s5244 = scalar_lea.vmem %s16, 1
    %v5245 = vld [vmem:[%s5244] sm:$0x1]
    %v5247 = vperm.slane %v5245, 0
    %v5250 = vsel %vm2957, %v5238, 0
    %v5253 = vsel %vm2957, %v5239, 0
    %v5256 = vsel %vm2957, %v5241, 0
    %v5259 = vsel %vm2957, %v5242, 0
    %v5262 = vsel %vm2957, %v5243, 0
    %5264 = vmatpush.xpose.msra.mxu0 0.0
    %5265 = vmatpush.xpose.msra.mxu0 0.0
    %5266 = vmatpush.xpose.msra.mxu0 0.0
    %5267 = vmatpush.xpose.msra.mxu0 0.0
    %5268 = vmatpush.xpose.msra.mxu0 0.0
    %5269 = vmatpush.xpose.msra.mxu0 0.0
    %5270 = vmatpush.xpose.msra.mxu0 0.0
    %5271 = vmatpush.xpose.msra.mxu0 0.0
    %5272 = vmatpush.xpose.msra.mxu0 0.0
    %5273 = vmatpush.xpose.msra.mxu0 0.0
    %5274 = vmatpush.xpose.msra.mxu0 0.0
    %5275 = vmatpush.xpose.msra.mxu0 0.0
    %5276 = vmatpush.xpose.msra.mxu0 0.0
    %5277 = vmatpush.xpose.msra.mxu0 %v5262
    %5278 = vmatpush.xpose.msra.mxu0 %v5259
    %5279 = vmatpush.xpose.msra.mxu0 %v5256
    %5280 = vmatmul.f32.gmra.mxu0 %v5250
    %v5281 = vpop.f32.mrf.mxu0
    %v5282 = vadd.f32 %v5247, %v5281
    %5283 = vmatmul.f32.gmra.mxu0 %v5253
    %v5284 = vpop.f32.mrf.mxu0
    %v5285 = vadd.f32 %v5247, %v5284
    %5286 = vdwg.mxu0
    %v5287 = vadd.f32 %v5185, %v5282
    %v5288 = vadd.f32 %v5186, %v5285
    %v5289 = vsel %vm757, %v5287, 0.0
    %5290 = vadd.xlane.f32.xlu0 %v5289
    %v5291 = vpop.xlane.xlu0 %5290
    %v5292 = vsel %vm757, %v5288, 0.0
    %5293 = vadd.xlane.f32.xlu0 %v5292
    %v5294 = vpop.xlane.xlu0 %5293
    %v5295 = vmul.f32 %v5291, %v1767
    %v5296 = vmul.f32 %v5294, %v1767
    %v5297 = vsub.f32 %v5287, %v5295
    %v5298 = vsub.f32 %v5288, %v5296
    %v5299 = vmul.f32 %v5297, %v5297
    %v5300 = vmul.f32 %v5298, %v5298
    %v5301 = vsel %vm757, %v5299, 0.0
    %5302 = vadd.xlane.f32.xlu0 %v5301
    %v5303 = vpop.xlane.xlu0 %5302
    %v5304 = vsel %vm757, %v5300, 0.0
    %5305 = vadd.xlane.f32.xlu0 %v5304
    %v5306 = vpop.xlane.xlu0 %5305
    %v5307 = vmul.f32 %v5303, %v1767
    %v5308 = vmul.f32 %v5306, %v1767
    %v5309 = vadd.f32 %v5307, 1e-05
    %v5310 = vadd.f32 %v5308, 1e-05
    %v5311 = vrsqrt.pop %v5309
    %v5312 = vmul.f32 %v5311, %v5309
    %v5313 = vmul.f32 %v5312, %v5311
    %v5314 = vmul.f32 0.5, %v5313
    %v5315 = vsub.f32 1.5, %v5314
    %v5316 = vmul.f32 %v5311, %v5315
    %vm5317 = vweird.f32 %v5309
    %vm5318 = vweird.f32 %v5311
    %vm5319 = vmor %vm5317, %vm5318
    %v5320 = vsel %vm5319, %v5311, %v5316
    %v5321 = vrsqrt.pop %v5310
    %v5322 = vmul.f32 %v5321, %v5310
    %v5323 = vmul.f32 %v5322, %v5321
    %v5324 = vmul.f32 0.5, %v5323
    %v5325 = vsub.f32 1.5, %v5324
    %v5326 = vmul.f32 %v5321, %v5325
    %vm5327 = vweird.f32 %v5310
    %vm5328 = vweird.f32 %v5321
    %vm5329 = vmor %vm5327, %vm5328
    %v5330 = vsel %vm5329, %v5321, %v5326
    %v5331 = vmul.f32 %v5297, %v5320
    %v5332 = vmul.f32 %v5298, %v5330
    %v5333 = vperm.slane %v3049, 2
    %v5334 = vmul.f32 %v5331, %v5333
    %v5335 = vmul.f32 %v5332, %v5333
    %v5336 = vperm.slane %v3051, 2
    %v5337 = vadd.f32 %v5334, %v5336
    %v5338 = vadd.f32 %v5335, %v5336
    %v5339 = vld [vmem:[%s23] sm:$0x1]
    %v5340 = vld [vmem:[%s19] sm:$0xff]
    %v5341 = vld [vmem:[%s19 + $0x8] sm:$0xff]
    %v5342 = vld [vmem:[%s19 + $0x10] sm:$0xff]
    %v5343 = vld [vmem:[%s19 + $0x18] sm:$0xff]
    %v5344 = vld [vmem:[%s19 + $0x20] sm:$0xf]
    %v5345 = vld [vmem:[%s20] sm:$0x1]
    %v5347 = vperm.slane %v5345, 0
    %v5350 = vsel %vm757, %v5337, 0
    %v5353 = vsel %vm757, %v5338, 0
    %v5356 = vsel %vm757, %v5340, 0
    %v5359 = vsel %vm757, %v5341, 0
    %v5362 = vsel %vm757, %v5342, 0
    %v5365 = vsel %vm757, %v5343, 0
    %v5368 = vsel %vm757, %v5344, 0
    %5370 = vmatpush.xpose.msra.mxu0 0.0
    %5371 = vmatpush.xpose.msra.mxu0 0.0
    %5372 = vmatpush.xpose.msra.mxu0 0.0
    %5373 = vmatpush.xpose.msra.mxu0 0.0
    %5374 = vmatpush.xpose.msra.mxu0 0.0
    %5375 = vmatpush.xpose.msra.mxu0 0.0
    %5376 = vmatpush.xpose.msra.mxu0 0.0
    %5377 = vmatpush.xpose.msra.mxu0 0.0
    %5378 = vmatpush.xpose.msra.mxu0 0.0
    %5379 = vmatpush.xpose.msra.mxu0 0.0
    %5380 = vmatpush.xpose.msra.mxu0 0.0
    %5381 = vmatpush.xpose.msra.mxu0 %v5368
    %5382 = vmatpush.xpose.msra.mxu0 %v5365
    %5383 = vmatpush.xpose.msra.mxu0 %v5362
    %5384 = vmatpush.xpose.msra.mxu0 %v5359
    %5385 = vmatpush.xpose.msra.mxu0 %v5356
    %5386 = vmatmul.f32.gmra.mxu0 %v5350
    %v5387 = vpop.f32.mrf.mxu0
    %v5388 = vadd.f32 %v5347, %v5387
    %5389 = vmatmul.f32.gmra.mxu0 %v5353
    %v5390 = vpop.f32.mrf.mxu0
    %v5391 = vadd.f32 %v5347, %v5390
    %5392 = vdwg.mxu0
    %vm5393 = vcmp.ge.f32.partialorder %v5388, 0.0
    %vm5394 = vcmp.ge.f32.partialorder %v5391, 0.0
    %v5396 = vperm.slane %v5339, 0
    %5397 = vset.pattern.permute.xlu0 0
    %5398 = vperm.xlu0 %5397, %v5396
    %v5399 = vpop.permute.xlu0 %5398
    %v5401 = vmul.f32 %v5399, %v5388
    %v5402 = vmul.f32 %v5399, %v5391
    %v5403 = vsel %vm5393, %v5388, %v5401
    %v5404 = vsel %vm5394, %v5391, %v5402
    %v5405 = vld [vmem:[%s21] sm:$0xff]
    %v5406 = vld [vmem:[%s21 + $0x8] sm:$0xff]
    %v5407 = vld [vmem:[%s21 + $0x10] sm:$0xff]
    %v5408 = vld [vmem:[%s21 + $0x18] sm:$0xff]
    %v5409 = vld [vmem:[%s22] sm:$0x1]
    %v5411 = vperm.slane %v5409, 0
    %v5414 = vsel %vm2957, %v5403, 0
    %v5417 = vsel %vm2957, %v5404, 0
    %v5420 = vsel %vm2957, %v5405, 0
    %v5423 = vsel %vm2957, %v5406, 0
    %v5426 = vsel %vm2957, %v5407, 0
    %v5429 = vsel %vm2957, %v5408, 0
    %5431 = vmatpush.xpose.msra.mxu0 0.0
    %5432 = vmatpush.xpose.msra.mxu0 0.0
    %5433 = vmatpush.xpose.msra.mxu0 0.0
    %5434 = vmatpush.xpose.msra.mxu0 0.0
    %5435 = vmatpush.xpose.msra.mxu0 0.0
    %5436 = vmatpush.xpose.msra.mxu0 0.0
    %5437 = vmatpush.xpose.msra.mxu0 0.0
    %5438 = vmatpush.xpose.msra.mxu0 0.0
    %5439 = vmatpush.xpose.msra.mxu0 0.0
    %5440 = vmatpush.xpose.msra.mxu0 0.0
    %5441 = vmatpush.xpose.msra.mxu0 0.0
    %5442 = vmatpush.xpose.msra.mxu0 0.0
    %5443 = vmatpush.xpose.msra.mxu0 %v5429
    %5444 = vmatpush.xpose.msra.mxu0 %v5426
    %5445 = vmatpush.xpose.msra.mxu0 %v5423
    %5446 = vmatpush.xpose.msra.mxu0 %v5420
    %5447 = vmatmul.f32.gmra.mxu0 %v5414
    %v5448 = vpop.f32.mrf.mxu0
    %v5449 = vadd.f32 %v5411, %v5448
    %5450 = vmatmul.f32.gmra.mxu0 %v5417
    %v5451 = vpop.f32.mrf.mxu0
    %v5452 = vadd.f32 %v5411, %v5451
    %5453 = vdwg.mxu0
    %vm5454 = vcmp.ge.f32.partialorder %v5449, 0.0
    %vm5455 = vcmp.ge.f32.partialorder %v5452, 0.0
    %5456 = vset.pattern.permute.xlu0 1
    %5457 = vperm.xlu0 %5456, %v5396
    %v5458 = vpop.permute.xlu0 %5457
    %v5460 = vmul.f32 %v5458, %v5449
    %v5461 = vmul.f32 %v5458, %v5452
    %v5462 = vsel %vm5454, %v5449, %v5460
    %v5463 = vsel %vm5455, %v5452, %v5461
    %v5464 = vsel %vm2957, %v5462, -inf
    %v5465 = vrot.slane %v5464, 4
    %v5466 = vmax.f32 %v5464, %v5465
    %v5467 = vrot.slane %v5466, 2
    %v5468 = vmax.f32 %v5466, %v5467
    %v5469 = vrot.slane %v5468, 1
    %v5470 = vmax.f32 %v5468, %v5469
    %v5471 = vsel %vm2957, %v5463, -inf
    %v5472 = vrot.slane %v5471, 4
    %v5473 = vmax.f32 %v5471, %v5472
    %v5474 = vrot.slane %v5473, 2
    %v5475 = vmax.f32 %v5473, %v5474
    %v5476 = vrot.slane %v5475, 1
    %v5477 = vmax.f32 %v5475, %v5476
    %vm5478 = vcmask 253952
    %5479 = vst.msk [vmem:[#allocation2] sm:$0x1] %vm5478, %v5470
    %5480 = vst.msk [vmem:[#allocation2 + $0x1] sm:$0x1] %vm5478, %v5477
    %v5481 = vxor.u32 %v5388, 2147483648
    %v5482 = vxor.u32 %v5391, 2147483648
    %v5483 = vmul.f32 %v5481, 1.442695
    %v5484 = vpow.pop %v5483
    %v5485 = vmul.f32 %v5482, 1.442695
    %v5486 = vpow.pop %v5485
    %v5487 = vadd.f32 %v5484, 1.0
    %v5488 = vadd.f32 %v5486, 1.0
    %v5489 = vrcp.pop %v5487
    %v5490 = vmul.f32 %v5487, %v5489
    %v5491 = vsub.f32 1.0, %v5490
    %v5492 = vmul.f32 %v5489, %v5491
    %v5493 = vadd.f32 %v5489, %v5492
    %vm5494 = vweird.f32 %v5487
    %vm5495 = vweird.f32 %v5489
    %vm5496 = vmor %vm5494, %vm5495
    %v5497 = vsel %vm5496, %v5489, %v5493
    %v5498 = vand.u32 2147483647, %v5487
    %vm5499 = vcmp.eq.f32.partialorder %v5498, 8.507059e+37
    %v5500 = vand.u32 %v5487, 2147483648
    %v5501 = vor.u32 1.1754944e-38, %v5500
    %v5502 = vsel %vm5499, %v5501, %v5497
    %v5503 = vmul.f32 1.0, %v5502
    %v5504 = vrcp.pop %v5488
    %v5505 = vmul.f32 %v5488, %v5504
    %v5506 = vsub.f32 1.0, %v5505
    %v5507 = vmul.f32 %v5504, %v5506
    %v5508 = vadd.f32 %v5504, %v5507
    %vm5509 = vweird.f32 %v5488
    %vm5510 = vweird.f32 %v5504
    %vm5511 = vmor %vm5509, %vm5510
    %v5512 = vsel %vm5511, %v5504, %v5508
    %v5513 = vand.u32 2147483647, %v5488
    %vm5514 = vcmp.eq.f32.partialorder %v5513, 8.507059e+37
    %v5515 = vand.u32 %v5488, 2147483648
    %v5516 = vor.u32 1.1754944e-38, %v5515
    %v5517 = vsel %vm5514, %v5516, %v5512
    %v5518 = vmul.f32 1.0, %v5517
    %5521 = vrot.lane.b32.xlu0 %v5503, 96
    %v5522 = vpop.permute.xlu0 %5521
    %5523 = vrot.lane.b32.xlu0 %v5518, 96
    %v5524 = vpop.permute.xlu0 %5523
    %5527 = vst.msk [vmem:[%s24] sm:$0xff] %vm735, %v5522
    %5528 = vst.msk [vmem:[%s24 + $0x8] sm:$0xff] %vm735, %v5524
    %v5529 = vld [vmem:[%s3] sm:$0xff]
    %v5530 = vld [vmem:[%s3 + $0x8] sm:$0xff]
    %5533 = vrot.lane.b32.xlu0 %v5529, 32
    %v5534 = vpop.permute.xlu0 %5533
    %5535 = vrot.lane.b32.xlu0 %v5530, 32
    %v5536 = vpop.permute.xlu0 %5535
    %vm5539 = vcmp.gt.f32.partialorder %v5503, %v5534
    %vm5540 = vcmp.gt.f32.partialorder %v5518, %v5536
    %v5541 = vsel %vm5539, 1, 0
    %v5542 = vsel %vm5540, 1, 0
    %v5543 = vcvt.s32.f32 %v5541
    %v5544 = vcvt.s32.f32 %v5542
    %5547 = vrot.lane.b32.xlu0 %v5543, 96
    %v5548 = vpop.permute.xlu0 %5547
    %5549 = vrot.lane.b32.xlu0 %v5544, 96
    %v5550 = vpop.permute.xlu0 %5549
    %5553 = vst.msk [vmem:[%s25] sm:$0xff] %vm735, %v5548
    %5554 = vst.msk [vmem:[%s25 + $0x8] sm:$0xff] %vm735, %v5550
    // Predicated region
    $region98: #{tpu_custom_call.1} parent=1 // pred_check
      _
    $region99: #{tpu_custom_call.1} parent=1 // pred_check_branch
      %5556 = sbr.rel (0) target = $region101
    $region100: #{tpu_custom_call.1} parent=1 // pred_region
      _
    $region101: #{tpu_custom_call.1} parent=1 // pred_fallthru
      _
    // Predicated region
    $region102: #{tpu_custom_call.1} parent=1 // pred_check
      _
    $region103: #{tpu_custom_call.1} parent=1 // pred_check_branch
      %5558 = sbr.rel (0) target = $region105
    $region104: #{tpu_custom_call.1} parent=1 // pred_region
      _
    $region105: #{tpu_custom_call.1} parent=1 // pred_fallthru
      _
    // Predicated region
    $region106: #{tpu_custom_call.1} parent=1 // pred_check
      _
    $region107: #{tpu_custom_call.1} parent=1 // pred_check_branch
      %5560 = sbr.rel (0) target = $region109
    $region108: #{tpu_custom_call.1} parent=1 // pred_region
      %5562 = vsyncadd [#allocation3], 0
      %s5563 = sshll.u32 [#allocation2], 4
      %s5564 = int_to_ptr.vmem [resolvable:$true] %s5563
      %s5565 = sshll.u32 %s26, 4
      %s5566 = int_to_ptr.hbm [resolvable:$true] %s5565
      %5571 = dma.vmem_to_hbm [thread:$0]  %s5564, 32, %s5566, [#allocation3], 16, 16, 1
    $region109: #{tpu_custom_call.1} parent=1 // pred_fallthru
      _
    // Predicated region
    $region110: #{tpu_custom_call.1} parent=1 // pred_check
      _
    $region111: #{tpu_custom_call.1} parent=1 // pred_check_branch
      %5573 = sbr.rel (0) target = $region113
    $region112: #{tpu_custom_call.1} parent=1 // pred_region
      _
    $region113: #{tpu_custom_call.1} parent=1 // pred_fallthru
      _
    // Predicated region
    $region114: #{tpu_custom_call.1} parent=1 // pred_check
      _
    $region115: #{tpu_custom_call.1} parent=1 // pred_check_branch
      %5575 = sbr.rel (0) target = $region117
    $region116: #{tpu_custom_call.1} parent=1 // pred_region
      _
    $region117: #{tpu_custom_call.1} parent=1 // pred_fallthru
      _
    // Predicated region
    $region118: #{tpu_custom_call.1} parent=1 // pred_check
      _
    $region119: #{tpu_custom_call.1} parent=1 // pred_check_branch
      %5577 = sbr.rel (0) target = $region121
    $region120: #{tpu_custom_call.1} parent=1 // pred_region
      %5579 = dma.done [#allocation3], 32
    $region121: #{tpu_custom_call.1} parent=1 // pred_fallthru
      _
    %5580 = vsyncpa [#allocation3], 1

</llo_original>
